<compile_context>
chip_gen: v7x
topology: tpu7x:2x2x1
jax: 0.10.0
libtpu: 0.0.40
codegen_flags: <defaults>
</compile_context>

<pallas_src>
import functools

import jax
import jax.numpy as jnp
from jax import lax
from jax.experimental import pallas as pl
from jax.experimental.pallas import tpu as pltpu

LEAKY_SLOPE = 0.1
BN_EPS = 1e-5


def _leaky(y):
    return jnp.where(y > 0, y, LEAKY_SLOPE * y)


# ----------------------------- Pallas kernel --------------------------------


def _fused_repeat_kernel(x_ref, w1_ref, s1_ref, b1_ref, w2_ref, s2_ref,
                         b2_ref, o_ref, xp_ref, col_ref, *, use_residual):
    """One ResidualBlock repeat, fully fused (per batch image).

    x_ref:   (H, W, C)         input image (batch dim squeezed away)
    w1_ref:  (C, Cmid)         1x1 conv weight
    s1_ref:  (1, Cmid)         folded BN scale (1x1 branch)
    b1_ref:  (1, Cmid)         folded BN bias  (1x1 branch)
    w2_ref:  (9*Cmid, C)       3x3 conv weight, rows ordered (dy, dx, cin)
    s2_ref:  (1, C)            folded BN scale (3x3 branch)
    b2_ref:  (1, C)            folded BN bias  (3x3 branch)
    o_ref:   (H, W, C)         output image
    xp_ref:  (H+2, W+2, Cmid)  VMEM scratch: zero-padded 1x1 output
    col_ref: (H*W, 9*Cmid)     VMEM scratch: im2col of xp
    """
    H, W, C = x_ref.shape
    Cmid = w1_ref.shape[1]

    # ---- CNNBlock 1: 1x1 conv (matmul) + BN + LeakyReLU, into padded scratch.
    # Zero every step (cheap): with a "parallel" grid axis each core owns its
    # own scratch, so a program_id==0 guard would be unsafe.
    xp_ref[...] = jnp.zeros_like(xp_ref)
    x2d = x_ref[...].reshape(H * W, C)
    y1 = jnp.dot(x2d, w1_ref[...], preferred_element_type=jnp.float32)
    y1 = _leaky(y1 * s1_ref[...] + b1_ref[...])
    xp_ref[1:H + 1, 1:W + 1, :] = y1.reshape(H, W, Cmid)

    # ---- CNNBlock 2: 3x3 conv as ONE fat MXU matmul over an im2col scratch.
    for dy in range(3):
        for dx in range(3):
            t = dy * 3 + dx
            patch = xp_ref[dy:dy + H, dx:dx + W, :]            # (H, W, Cmid)
            col_ref[:, t * Cmid:(t + 1) * Cmid] = patch.reshape(H * W, Cmid)
    y2 = jnp.dot(col_ref[...], w2_ref[...], preferred_element_type=jnp.float32)
    y2 = _leaky(y2 * s2_ref[...] + b2_ref[...])

    # ---- residual add from the still-resident input tile.
    if use_residual:
        y2 = y2 + x2d

    o_ref[...] = y2.reshape(H, W, C).astype(o_ref.dtype)


# ------------------------------ wrappers -------------------------------------


def _fused_repeat(x, w1, s1, b1, w2p, s2, b2, use_residual):
    """x: (N, H, W, C) NHWC.  Returns (N, H, W, C)."""
    N, H, W, C = x.shape
    Cmid = w1.shape[1]
    kernel = functools.partial(_fused_repeat_kernel, use_residual=use_residual)
    return pl.pallas_call(
        kernel,
        out_shape=jax.ShapeDtypeStruct((N, H, W, C), x.dtype),
        grid=(N,),
        in_specs=[
            pl.BlockSpec((None, H, W, C), lambda n: (n, 0, 0, 0)),
            pl.BlockSpec((C, Cmid), lambda n: (0, 0)),
            pl.BlockSpec((1, Cmid), lambda n: (0, 0)),
            pl.BlockSpec((1, Cmid), lambda n: (0, 0)),
            pl.BlockSpec((9 * Cmid, C), lambda n: (0, 0)),
            pl.BlockSpec((1, C), lambda n: (0, 0)),
            pl.BlockSpec((1, C), lambda n: (0, 0)),
        ],
        out_specs=pl.BlockSpec((None, H, W, C), lambda n: (n, 0, 0, 0)),
        scratch_shapes=[
            pltpu.VMEM((H + 2, W + 2, Cmid), jnp.float32),   # padded 1x1 output
            pltpu.VMEM((H * W, 9 * Cmid), jnp.float32),      # im2col
        ],
        compiler_params=pltpu.CompilerParams(
            dimension_semantics=("parallel",),
            vmem_limit_bytes=32 * 1024 * 1024,
        ),
    )(x, w1, s1.reshape(1, Cmid), b1.reshape(1, Cmid),
      w2p, s2.reshape(1, C), b2.reshape(1, C))


@functools.partial(jax.jit, static_argnames=("use_residual",))
def residual_block_forward(x_nchw, params, use_residual=True):
    """Forward pass matching ResidualBlock(channels, use_residual, num_repeats).

    x_nchw: (N, C, H, W) float32 (PyTorch layout).
    params: list of ((w1, s1, b1), (w2_packed, s2, b2)) per repeat.
    """
    x = jnp.transpose(x_nchw, (0, 2, 3, 1))  # -> NHWC
    for (w1, s1, b1), (w2p, s2, b2) in params:
        x = _fused_repeat(x, w1, s1, b1, w2p, s2, b2, use_residual)
    return jnp.transpose(x, (0, 3, 1, 2))  # -> NCHW


# --------------------------- parameter init ----------------------------------


def _fold_bn(key, c):
    kg, kb, km, kv = jax.random.split(key, 4)
    gamma = 1.0 + 0.1 * jax.random.normal(kg, (c,), jnp.float32)
    beta = 0.1 * jax.random.normal(kb, (c,), jnp.float32)
    mean = 0.1 * jax.random.normal(km, (c,), jnp.float32)
    var = jnp.abs(jax.random.normal(kv, (c,), jnp.float32)) + 0.5
    scale = gamma / jnp.sqrt(var + BN_EPS)
    bias = beta - mean * scale
    return scale, bias


def init_residual_block_params(key, channels, num_repeats):
    cmid = channels // 2
    params = []
    for _ in range(num_repeats):
        key, k1, k2, kb1, kb2 = jax.random.split(key, 5)
        # PyTorch conv1 weight (cmid, channels, 1, 1) -> kernel layout (channels, cmid)
        w1 = jax.random.normal(k1, (channels, cmid), jnp.float32) / jnp.sqrt(channels)
        s1, b1 = _fold_bn(kb1, cmid)
        # PyTorch conv2 weight (channels, cmid, 3, 3) -> HWIO (3,3,cmid,channels)
        # packed for the kernel as (9*cmid, channels), rows ordered (dy, dx, cin).
        w2_hwio = jax.random.normal(
            k2, (3, 3, cmid, channels), jnp.float32) / jnp.sqrt(9 * cmid)
        w2_packed = w2_hwio.reshape(9 * cmid, channels)
        s2, b2 = _fold_bn(kb2, channels)
        params.append(((w1, s1, b1), (w2_packed, s2, b2)))
    return params


# --------------------------- pure-JAX reference -------------------------------


def _reference_forward(x_nchw, params, use_residual=True):
    x = jnp.transpose(x_nchw, (0, 2, 3, 1))
    dn = ("NHWC", "HWIO", "NHWC")
    for (w1, s1, b1), (w2p, s2, b2) in params:
        c = x.shape[-1]
        cmid = w1.shape[1]
        y = lax.conv_general_dilated(x, w1.reshape(1, 1, c, cmid), (1, 1),
                                     "VALID", dimension_numbers=dn)
        y = _leaky(y * s1 + b1)
        w2_hwio = w2p.reshape(3, 3, cmid, c)
        y = lax.conv_general_dilated(y, w2_hwio, (1, 1), "SAME",
                                     dimension_numbers=dn)
        y = _leaky(y * s2 + b2)
        x = y + x if use_residual else y
    return jnp.transpose(x, (0, 3, 1, 2))


# --------------------------------- main ---------------------------------------

if __name__ == "__main__":
    N, C, H, W = 2, 16, 16, 16
    NUM_REPEATS = 2
    USE_RESIDUAL = True

    key = jax.random.PRNGKey(0)
    kx, kp = jax.random.split(key)
    x = jax.random.normal(kx, (N, C, H, W), jnp.float32)  # PyTorch NCHW
    params = init_residual_block_params(kp, C, NUM_REPEATS)

    out = residual_block_forward(x, params, use_residual=USE_RESIDUAL)
    out = jax.block_until_ready(out)

    ref = _reference_forward(x, params, use_residual=USE_RESIDUAL)
    assert out.shape == (N, C, H, W), out.shape
    assert jnp.allclose(out, ref, atol=1e-4, rtol=1e-4), (
        float(jnp.max(jnp.abs(out - ref))))

    print("KERNEL_OK")
</pallas_src>

<mosaic_0001>
module attributes {stable_mosaic.version = 11 : i64} {
  func.func @_fused_repeat_kernel(%arg0: i32, %arg1: memref<1x16x16x16xf32, #tpu.memory_space<vmem>>, %arg2: memref<16x8xf32, #tpu.memory_space<vmem>>, %arg3: memref<1x8xf32, #tpu.memory_space<vmem>>, %arg4: memref<1x8xf32, #tpu.memory_space<vmem>>, %arg5: memref<72x16xf32, #tpu.memory_space<vmem>>, %arg6: memref<1x16xf32, #tpu.memory_space<vmem>>, %arg7: memref<1x16xf32, #tpu.memory_space<vmem>>, %arg8: memref<1x16x16x16xf32, #tpu.memory_space<vmem>>, %arg9: memref<18x18x8xf32, #tpu.memory_space<vmem>>, %arg10: memref<256x72xf32, #tpu.memory_space<vmem>>) attributes {dimension_semantics = [#tpu.dimension_semantics<parallel>], iteration_bounds = array<i64: 2>, scalar_prefetch = 0 : i64, scratch_operands = 2 : i64, tpu.core_type = #tpu.core_type<tc>, window_params = [{transform_indices = @transform_0, window_bounds = array<i64: 1, 16, 16, 16>}, {pipeline_mode = #tpu.pipeline_mode<synchronous>, transform_indices = @transform_1, window_bounds = array<i64: 16, 8>}, {pipeline_mode = #tpu.pipeline_mode<synchronous>, transform_indices = @transform_2, window_bounds = array<i64: 1, 8>}, {pipeline_mode = #tpu.pipeline_mode<synchronous>, transform_indices = @transform_3, window_bounds = array<i64: 1, 8>}, {pipeline_mode = #tpu.pipeline_mode<synchronous>, transform_indices = @transform_4, window_bounds = array<i64: 72, 16>}, {pipeline_mode = #tpu.pipeline_mode<synchronous>, transform_indices = @transform_5, window_bounds = array<i64: 1, 16>}, {pipeline_mode = #tpu.pipeline_mode<synchronous>, transform_indices = @transform_6, window_bounds = array<i64: 1, 16>}, {transform_indices = @transform_7, window_bounds = array<i64: 1, 16, 16, 16>}]} {
    %cst = arith.constant 0.000000e+00 : f32
    %0 = vector.broadcast %cst : f32 to vector<18x18x8xf32>
    %c0 = arith.constant 0 : index
    %c0_0 = arith.constant 0 : index
    %c0_1 = arith.constant 0 : index
    %1 = vector.load %arg9[%c0, %c0_0, %c0_1] : memref<18x18x8xf32, #tpu.memory_space<vmem>>, vector<18x18x8xf32>
    tpu.vector_store %arg9[%c0, %c0_0, %c0_1], %0 {strides = array<i32>} : memref<18x18x8xf32, #tpu.memory_space<vmem>>, vector<18x18x8xf32>,
    %c0_2 = arith.constant 0 : index
    %c0_3 = arith.constant 0 : index
    %c0_4 = arith.constant 0 : index
    %c0_5 = arith.constant 0 : index
    %2 = vector.load %arg1[%c0_2, %c0_3, %c0_4, %c0_5] : memref<1x16x16x16xf32, #tpu.memory_space<vmem>>, vector<1x16x16x16xf32>
    %3 = vector.shape_cast %2 : vector<1x16x16x16xf32> to vector<16x16x16xf32>
    %4 = vector.shape_cast %3 : vector<16x16x16xf32> to vector<256x16xf32>
    %c0_6 = arith.constant 0 : index
    %c0_7 = arith.constant 0 : index
    %5 = vector.load %arg2[%c0_6, %c0_7] : memref<16x8xf32, #tpu.memory_space<vmem>>, vector<16x8xf32>
    %cst_8 = arith.constant dense<0.000000e+00> : vector<256x8xf32>
    %6 = tpu.matmul %4, %5, %cst_8 {dimension_numbers = #tpu.dot_dimension_numbers<[1], [0], [0], [1], [0, 0, 1, 1], [], []>} : vector<256x16xf32>, vector<16x8xf32>, vector<256x8xf32> -> vector<256x8xf32>
    %c0_9 = arith.constant 0 : index
    %c0_10 = arith.constant 0 : index
    %7 = vector.load %arg3[%c0_9, %c0_10] : memref<1x8xf32, #tpu.memory_space<vmem>>, vector<1x8xf32>
    %8 = vector.broadcast %7 : vector<1x8xf32> to vector<256x8xf32>
    %9 = arith.mulf %6, %8 : vector<256x8xf32>
    %c0_11 = arith.constant 0 : index
    %c0_12 = arith.constant 0 : index
    %10 = vector.load %arg4[%c0_11, %c0_12] : memref<1x8xf32, #tpu.memory_space<vmem>>, vector<1x8xf32>
    %11 = vector.broadcast %10 : vector<1x8xf32> to vector<256x8xf32>
    %12 = arith.addf %9, %11 : vector<256x8xf32>
    %cst_13 = arith.constant 0.000000e+00 : f32
    %13 = vector.broadcast %cst_13 : f32 to vector<256x8xf32>
    %14 = arith.cmpf ogt, %12, %13 : vector<256x8xf32>
    %cst_14 = arith.constant 1.000000e-01 : f32
    %15 = vector.broadcast %cst_14 : f32 to vector<256x8xf32>
    %16 = arith.mulf %15, %12 : vector<256x8xf32>
    %17 = arith.select %14, %12, %16 : vector<256x8xi1>, vector<256x8xf32>
    %18 = vector.shape_cast %17 : vector<256x8xf32> to vector<16x16x8xf32>
    %c1 = arith.constant 1 : index
    %c1_15 = arith.constant 1 : index
    %c0_16 = arith.constant 0 : index
    %19 = vector.load %arg9[%c1, %c1_15, %c0_16] : memref<18x18x8xf32, #tpu.memory_space<vmem>>, vector<16x16x8xf32>
    tpu.vector_store %arg9[%c1, %c1_15, %c0_16], %18 {strides = array<i32>} : memref<18x18x8xf32, #tpu.memory_space<vmem>>, vector<16x16x8xf32>,
    %c0_17 = arith.constant 0 : index
    %c0_18 = arith.constant 0 : index
    %c0_19 = arith.constant 0 : index
    %20 = vector.load %arg9[%c0_17, %c0_18, %c0_19] : memref<18x18x8xf32, #tpu.memory_space<vmem>>, vector<16x16x8xf32>
    %21 = vector.shape_cast %20 : vector<16x16x8xf32> to vector<256x8xf32>
    %c0_20 = arith.constant 0 : index
    %c0_21 = arith.constant 0 : index
    %22 = vector.load %arg10[%c0_20, %c0_21] : memref<256x72xf32, #tpu.memory_space<vmem>>, vector<256x8xf32>
    tpu.vector_store %arg10[%c0_20, %c0_21], %21 {strides = array<i32>} : memref<256x72xf32, #tpu.memory_space<vmem>>, vector<256x8xf32>,
    %c0_22 = arith.constant 0 : index
    %c1_23 = arith.constant 1 : index
    %c0_24 = arith.constant 0 : index
    %23 = vector.load %arg9[%c0_22, %c1_23, %c0_24] : memref<18x18x8xf32, #tpu.memory_space<vmem>>, vector<16x16x8xf32>
    %24 = vector.shape_cast %23 : vector<16x16x8xf32> to vector<256x8xf32>
    %c0_25 = arith.constant 0 : index
    %c8 = arith.constant 8 : index
    %25 = vector.load %arg10[%c0_25, %c8] : memref<256x72xf32, #tpu.memory_space<vmem>>, vector<256x8xf32>
    tpu.vector_store %arg10[%c0_25, %c8], %24 {strides = array<i32>} : memref<256x72xf32, #tpu.memory_space<vmem>>, vector<256x8xf32>,
    %c0_26 = arith.constant 0 : index
    %c2 = arith.constant 2 : index
    %c0_27 = arith.constant 0 : index
    %26 = vector.load %arg9[%c0_26, %c2, %c0_27] : memref<18x18x8xf32, #tpu.memory_space<vmem>>, vector<16x16x8xf32>
    %27 = vector.shape_cast %26 : vector<16x16x8xf32> to vector<256x8xf32>
    %c0_28 = arith.constant 0 : index
    %c16 = arith.constant 16 : index
    %28 = vector.load %arg10[%c0_28, %c16] : memref<256x72xf32, #tpu.memory_space<vmem>>, vector<256x8xf32>
    tpu.vector_store %arg10[%c0_28, %c16], %27 {strides = array<i32>} : memref<256x72xf32, #tpu.memory_space<vmem>>, vector<256x8xf32>,
    %c1_29 = arith.constant 1 : index
    %c0_30 = arith.constant 0 : index
    %c0_31 = arith.constant 0 : index
    %29 = vector.load %arg9[%c1_29, %c0_30, %c0_31] : memref<18x18x8xf32, #tpu.memory_space<vmem>>, vector<16x16x8xf32>
    %30 = vector.shape_cast %29 : vector<16x16x8xf32> to vector<256x8xf32>
    %c0_32 = arith.constant 0 : index
    %c24 = arith.constant 24 : index
    %31 = vector.load %arg10[%c0_32, %c24] : memref<256x72xf32, #tpu.memory_space<vmem>>, vector<256x8xf32>
    tpu.vector_store %arg10[%c0_32, %c24], %30 {strides = array<i32>} : memref<256x72xf32, #tpu.memory_space<vmem>>, vector<256x8xf32>,
    %c1_33 = arith.constant 1 : index
    %c1_34 = arith.constant 1 : index
    %c0_35 = arith.constant 0 : index
    %32 = vector.load %arg9[%c1_33, %c1_34, %c0_35] : memref<18x18x8xf32, #tpu.memory_space<vmem>>, vector<16x16x8xf32>
    %33 = vector.shape_cast %32 : vector<16x16x8xf32> to vector<256x8xf32>
    %c0_36 = arith.constant 0 : index
    %c32 = arith.constant 32 : index
    %34 = vector.load %arg10[%c0_36, %c32] : memref<256x72xf32, #tpu.memory_space<vmem>>, vector<256x8xf32>
    tpu.vector_store %arg10[%c0_36, %c32], %33 {strides = array<i32>} : memref<256x72xf32, #tpu.memory_space<vmem>>, vector<256x8xf32>,
    %c1_37 = arith.constant 1 : index
    %c2_38 = arith.constant 2 : index
    %c0_39 = arith.constant 0 : index
    %35 = vector.load %arg9[%c1_37, %c2_38, %c0_39] : memref<18x18x8xf32, #tpu.memory_space<vmem>>, vector<16x16x8xf32>
    %36 = vector.shape_cast %35 : vector<16x16x8xf32> to vector<256x8xf32>
    %c0_40 = arith.constant 0 : index
    %c40 = arith.constant 40 : index
    %37 = vector.load %arg10[%c0_40, %c40] : memref<256x72xf32, #tpu.memory_space<vmem>>, vector<256x8xf32>
    tpu.vector_store %arg10[%c0_40, %c40], %36 {strides = array<i32>} : memref<256x72xf32, #tpu.memory_space<vmem>>, vector<256x8xf32>,
    %c2_41 = arith.constant 2 : index
    %c0_42 = arith.constant 0 : index
    %c0_43 = arith.constant 0 : index
    %38 = vector.load %arg9[%c2_41, %c0_42, %c0_43] : memref<18x18x8xf32, #tpu.memory_space<vmem>>, vector<16x16x8xf32>
    %39 = vector.shape_cast %38 : vector<16x16x8xf32> to vector<256x8xf32>
    %c0_44 = arith.constant 0 : index
    %c48 = arith.constant 48 : index
    %40 = vector.load %arg10[%c0_44, %c48] : memref<256x72xf32, #tpu.memory_space<vmem>>, vector<256x8xf32>
    tpu.vector_store %arg10[%c0_44, %c48], %39 {strides = array<i32>} : memref<256x72xf32, #tpu.memory_space<vmem>>, vector<256x8xf32>,
    %c2_45 = arith.constant 2 : index
    %c1_46 = arith.constant 1 : index
    %c0_47 = arith.constant 0 : index
    %41 = vector.load %arg9[%c2_45, %c1_46, %c0_47] : memref<18x18x8xf32, #tpu.memory_space<vmem>>, vector<16x16x8xf32>
    %42 = vector.shape_cast %41 : vector<16x16x8xf32> to vector<256x8xf32>
    %c0_48 = arith.constant 0 : index
    %c56 = arith.constant 56 : index
    %43 = vector.load %arg10[%c0_48, %c56] : memref<256x72xf32, #tpu.memory_space<vmem>>, vector<256x8xf32>
    tpu.vector_store %arg10[%c0_48, %c56], %42 {strides = array<i32>} : memref<256x72xf32, #tpu.memory_space<vmem>>, vector<256x8xf32>,
    %c2_49 = arith.constant 2 : index
    %c2_50 = arith.constant 2 : index
    %c0_51 = arith.constant 0 : index
    %44 = vector.load %arg9[%c2_49, %c2_50, %c0_51] : memref<18x18x8xf32, #tpu.memory_space<vmem>>, vector<16x16x8xf32>
    %45 = vector.shape_cast %44 : vector<16x16x8xf32> to vector<256x8xf32>
    %c0_52 = arith.constant 0 : index
    %c64 = arith.constant 64 : index
    %46 = vector.load %arg10[%c0_52, %c64] : memref<256x72xf32, #tpu.memory_space<vmem>>, vector<256x8xf32>
    tpu.vector_store %arg10[%c0_52, %c64], %45 {strides = array<i32>} : memref<256x72xf32, #tpu.memory_space<vmem>>, vector<256x8xf32>,
    %c0_53 = arith.constant 0 : index
    %c0_54 = arith.constant 0 : index
    %47 = vector.load %arg10[%c0_53, %c0_54] : memref<256x72xf32, #tpu.memory_space<vmem>>, vector<256x72xf32>
    %c0_55 = arith.constant 0 : index
    %c0_56 = arith.constant 0 : index
    %48 = vector.load %arg5[%c0_55, %c0_56] : memref<72x16xf32, #tpu.memory_space<vmem>>, vector<72x16xf32>
    %cst_57 = arith.constant dense<0.000000e+00> : vector<256x16xf32>
    %49 = tpu.matmul %47, %48, %cst_57 {dimension_numbers = #tpu.dot_dimension_numbers<[1], [0], [0], [1], [0, 0, 1, 1], [], []>} : vector<256x72xf32>, vector<72x16xf32>, vector<256x16xf32> -> vector<256x16xf32>
    %c0_58 = arith.constant 0 : index
    %c0_59 = arith.constant 0 : index
    %50 = vector.load %arg6[%c0_58, %c0_59] : memref<1x16xf32, #tpu.memory_space<vmem>>, vector<1x16xf32>
    %51 = vector.broadcast %50 : vector<1x16xf32> to vector<256x16xf32>
    %52 = arith.mulf %49, %51 : vector<256x16xf32>
    %c0_60 = arith.constant 0 : index
    %c0_61 = arith.constant 0 : index
    %53 = vector.load %arg7[%c0_60, %c0_61] : memref<1x16xf32, #tpu.memory_space<vmem>>, vector<1x16xf32>
    %54 = vector.broadcast %53 : vector<1x16xf32> to vector<256x16xf32>
    %55 = arith.addf %52, %54 : vector<256x16xf32>
    %cst_62 = arith.constant 0.000000e+00 : f32
    %56 = vector.broadcast %cst_62 : f32 to vector<256x16xf32>
    %57 = arith.cmpf ogt, %55, %56 : vector<256x16xf32>
    %cst_63 = arith.constant 1.000000e-01 : f32
    %58 = vector.broadcast %cst_63 : f32 to vector<256x16xf32>
    %59 = arith.mulf %58, %55 : vector<256x16xf32>
    %60 = arith.select %57, %55, %59 : vector<256x16xi1>, vector<256x16xf32>
    %61 = arith.addf %60, %4 : vector<256x16xf32>
    %62 = vector.shape_cast %61 : vector<256x16xf32> to vector<16x16x16xf32>
    %c0_64 = arith.constant 0 : index
    %c0_65 = arith.constant 0 : index
    %c0_66 = arith.constant 0 : index
    %c0_67 = arith.constant 0 : index
    %63 = vector.load %arg8[%c0_64, %c0_65, %c0_66, %c0_67] : memref<1x16x16x16xf32, #tpu.memory_space<vmem>>, vector<1x16x16x16xf32>
    %64 = vector.shape_cast %63 : vector<1x16x16x16xf32> to vector<16x16x16xf32>
    %65 = vector.shape_cast %62 : vector<16x16x16xf32> to vector<1x16x16x16xf32>
    tpu.vector_store %arg8[%c0_64, %c0_65, %c0_66, %c0_67], %65 {strides = array<i32>} : memref<1x16x16x16xf32, #tpu.memory_space<vmem>>, vector<1x16x16x16xf32>,
    return
  }
  func.func @transform_0(%arg0: i32) -> (i32, i32, i32, i32) {
    %c0_i32 = arith.constant 0 : i32
    %c0_i32_0 = arith.constant 0 : i32
    %c0_i32_1 = arith.constant 0 : i32
    %c0_i32_2 = arith.constant 0 : i32
    return %arg0, %c0_i32, %c0_i32_0, %c0_i32_1 : i32, i32, i32, i32
  }
  func.func @transform_1(%arg0: i32) -> (i32, i32) {
    %c0_i32 = arith.constant 0 : i32
    %c0_i32_0 = arith.constant 0 : i32
    %c0_i32_1 = arith.constant 0 : i32
    return %c0_i32, %c0_i32_0 : i32, i32
  }
  func.func @transform_2(%arg0: i32) -> (i32, i32) {
    %c0_i32 = arith.constant 0 : i32
    %c0_i32_0 = arith.constant 0 : i32
    %c0_i32_1 = arith.constant 0 : i32
    return %c0_i32, %c0_i32_0 : i32, i32
  }
  func.func @transform_3(%arg0: i32) -> (i32, i32) {
    %c0_i32 = arith.constant 0 : i32
    %c0_i32_0 = arith.constant 0 : i32
    %c0_i32_1 = arith.constant 0 : i32
    return %c0_i32, %c0_i32_0 : i32, i32
  }
  func.func @transform_4(%arg0: i32) -> (i32, i32) {
    %c0_i32 = arith.constant 0 : i32
    %c0_i32_0 = arith.constant 0 : i32
    %c0_i32_1 = arith.constant 0 : i32
    return %c0_i32, %c0_i32_0 : i32, i32
  }
  func.func @transform_5(%arg0: i32) -> (i32, i32) {
    %c0_i32 = arith.constant 0 : i32
    %c0_i32_0 = arith.constant 0 : i32
    %c0_i32_1 = arith.constant 0 : i32
    return %c0_i32, %c0_i32_0 : i32, i32
  }
  func.func @transform_6(%arg0: i32) -> (i32, i32) {
    %c0_i32 = arith.constant 0 : i32
    %c0_i32_0 = arith.constant 0 : i32
    %c0_i32_1 = arith.constant 0 : i32
    return %c0_i32, %c0_i32_0 : i32, i32
  }
  func.func @transform_7(%arg0: i32) -> (i32, i32, i32, i32) {
    %c0_i32 = arith.constant 0 : i32
    %c0_i32_0 = arith.constant 0 : i32
    %c0_i32_1 = arith.constant 0 : i32
    %c0_i32_2 = arith.constant 0 : i32
    return %arg0, %c0_i32, %c0_i32_0, %c0_i32_1 : i32, i32, i32, i32
  }
}

</mosaic_0001>

<llo_original>
// kernel: residual_block_forward.2
$region0: #{residual_block_forward.2}
  #allocation0 [shape = 'u32[]', space=smem, size = 0x4, offset = 0x4, fixed_abs, tag = 'smem constant byte address 0x4 - core index']
  #allocation1 [shape = 'u32[144,128]{1,0:T(1,128)}', space=vmem, size = 0x12000, scoped, tag = 'internal scratch']
  #allocation2 [shape = 'f32[18,18,8]{2,1,0:T(8,128)}', space=vmem, size = 0x36000, scoped, tag = 'scratch operand']
  #allocation3 [shape = 'f32[256,72]{1,0:T(8,128)}', space=vmem, size = 0x20000, scoped, tag = 'scratch operand']
  %s0 = inlined_call_operand.vmem [shape: f32[2,16,16,16], index: 0, kind: input, shape index: {}]
  %s1 = inlined_call_operand.vmem [shape: f32[16,8], index: 1, kind: input, shape index: {}]
  %s2 = inlined_call_operand.vmem [shape: f32[1,8], index: 2, kind: input, shape index: {}]
  %s3 = inlined_call_operand.vmem [shape: f32[1,8], index: 3, kind: input, shape index: {}]
  %s4 = inlined_call_operand.vmem [shape: f32[72,16], index: 4, kind: input, shape index: {}]
  %s5 = inlined_call_operand.vmem [shape: f32[1,16], index: 5, kind: input, shape index: {}]
  %s6 = inlined_call_operand.vmem [shape: f32[1,16], index: 6, kind: input, shape index: {}]
  %s7 = inlined_call_operand.vmem [shape: f32[2,16,16,16], index: 7, kind: output, shape index: {}]
  %s8 = sld [smem:[#allocation0]]
  $region61: #{residual_block_forward.2} parent=0
    _
  %s10 = ssub.s32 1, %s8
  %s11 = scalar_select 0, %s10, %s8
  loop: start=0, step=1, limit=4
  $region2: #{residual_block_forward.2} parent=0 // loop_pre_header
    _
  $region3: #{residual_block_forward.2} parent=0 // loop_header
    %s13 = sphi 0, %s17
    %p14 = scmp.ge.s32.totalorder %s13, 4
    %s23 = sphi 0, %s25
    %s26 = sphi 0, %s23
    %s27 = sphi 0, %s26
    %s43 = sphi 0, %s27
    %s47 = sphi 0, %s47
    %s49 = sphi 0, %s47
    %s50 = sphi 0, %s49
    %s64 = sphi 0, %s50
    %s68 = sphi 0, %s68
    %s70 = sphi 0, %s68
    %s71 = sphi 0, %s70
    %s85 = sphi 0, %s71
    %s89 = sphi 0, %s89
    %s91 = sphi 0, %s89
    %s92 = sphi 0, %s91
    %s106 = sphi 0, %s92
    %s110 = sphi 0, %s110
    %s112 = sphi 0, %s110
    %s113 = sphi 0, %s112
    %s127 = sphi 0, %s113
    %s131 = sphi 0, %s131
    %s133 = sphi 0, %s131
    %s134 = sphi 0, %s133
    %s148 = sphi 0, %s134
    %s152 = sphi 0, %s152
    %s154 = sphi 0, %s152
    %s155 = sphi 0, %s154
    %s169 = sphi 0, %s155
    %s175 = sphi 0, %s177
    %s178 = sphi 0, %s175
    %s179 = sphi 0, %s178
    %s195 = sphi 0, %s179
  $region4: #{residual_block_forward.2} parent=0 // loop_header_branch
    %16 = sbr.rel (%p14) target = $region8
  $region5: #{residual_block_forward.2} parent=0 // loop_body
    %s18 = ssub.s32 %s13, 1
    %s19 = ssub.s32 %s13, 2
    %s20 = sadd.s32 %s13, 1
    %s21 = ssub.s32 %s13, %s20
    %p22 = scmp.eq.s32.totalorder %s21, 0
    %s24 = sadd.s32 %s23, 1
    %s25 = scalar_select %p22, %s23, %s24
    %p28 = pneg %p22
    %p29 = scmp.eq.s32.totalorder %s13, 1
    %p30 = por %p28, %p29
    %p31 = scmp.ne.s32.totalorder %s23, %s26
    %p32 = scmp.eq.s32.totalorder %s13, 0
    %p33 = por %p31, %p32
    %p34 = scmp.ne.s32.totalorder %s23, %s26
    %p35 = scmp.eq.s32.totalorder %s18, 1
    %p36 = por %p34, %p35
    %p37 = scmp.ne.s32.totalorder %s26, %s27
    %p38 = scmp.eq.s32.totalorder %s18, 0
    %p39 = por %p37, %p38
    %p40 = scmp.ne.s32.totalorder %s26, %s27
    %p41 = scmp.eq.s32.totalorder %s19, 1
    %p42 = por %p40, %p41
    %p44 = scmp.ne.s32.totalorder %s27, %s43
    %p45 = scmp.eq.s32.totalorder %s19, 0
    %p46 = por %p44, %p45
    %s48 = sadd.s32 %s47, 1
    %p51 = scmp.eq.s32.totalorder %s13, 1
    %p52 = scmp.ne.s32.totalorder %s47, %s49
    %p53 = scmp.eq.s32.totalorder %s13, 0
    %p54 = por %p52, %p53
    %p55 = scmp.ne.s32.totalorder %s47, %s49
    %p56 = scmp.eq.s32.totalorder %s18, 1
    %p57 = por %p55, %p56
    %p58 = scmp.ne.s32.totalorder %s49, %s50
    %p59 = scmp.eq.s32.totalorder %s18, 0
    %p60 = por %p58, %p59
    %p61 = scmp.ne.s32.totalorder %s49, %s50
    %p62 = scmp.eq.s32.totalorder %s19, 1
    %p63 = por %p61, %p62
    %p65 = scmp.ne.s32.totalorder %s50, %s64
    %p66 = scmp.eq.s32.totalorder %s19, 0
    %p67 = por %p65, %p66
    %s69 = sadd.s32 %s68, 1
    %p72 = scmp.eq.s32.totalorder %s13, 1
    %p73 = scmp.ne.s32.totalorder %s68, %s70
    %p74 = scmp.eq.s32.totalorder %s13, 0
    %p75 = por %p73, %p74
    %p76 = scmp.ne.s32.totalorder %s68, %s70
    %p77 = scmp.eq.s32.totalorder %s18, 1
    %p78 = por %p76, %p77
    %p79 = scmp.ne.s32.totalorder %s70, %s71
    %p80 = scmp.eq.s32.totalorder %s18, 0
    %p81 = por %p79, %p80
    %p82 = scmp.ne.s32.totalorder %s70, %s71
    %p83 = scmp.eq.s32.totalorder %s19, 1
    %p84 = por %p82, %p83
    %p86 = scmp.ne.s32.totalorder %s71, %s85
    %p87 = scmp.eq.s32.totalorder %s19, 0
    %p88 = por %p86, %p87
    %s90 = sadd.s32 %s89, 1
    %p93 = scmp.eq.s32.totalorder %s13, 1
    %p94 = scmp.ne.s32.totalorder %s89, %s91
    %p95 = scmp.eq.s32.totalorder %s13, 0
    %p96 = por %p94, %p95
    %p97 = scmp.ne.s32.totalorder %s89, %s91
    %p98 = scmp.eq.s32.totalorder %s18, 1
    %p99 = por %p97, %p98
    %p100 = scmp.ne.s32.totalorder %s91, %s92
    %p101 = scmp.eq.s32.totalorder %s18, 0
    %p102 = por %p100, %p101
    %p103 = scmp.ne.s32.totalorder %s91, %s92
    %p104 = scmp.eq.s32.totalorder %s19, 1
    %p105 = por %p103, %p104
    %p107 = scmp.ne.s32.totalorder %s92, %s106
    %p108 = scmp.eq.s32.totalorder %s19, 0
    %p109 = por %p107, %p108
    %s111 = sadd.s32 %s110, 1
    %p114 = scmp.eq.s32.totalorder %s13, 1
    %p115 = scmp.ne.s32.totalorder %s110, %s112
    %p116 = scmp.eq.s32.totalorder %s13, 0
    %p117 = por %p115, %p116
    %p118 = scmp.ne.s32.totalorder %s110, %s112
    %p119 = scmp.eq.s32.totalorder %s18, 1
    %p120 = por %p118, %p119
    %p121 = scmp.ne.s32.totalorder %s112, %s113
    %p122 = scmp.eq.s32.totalorder %s18, 0
    %p123 = por %p121, %p122
    %p124 = scmp.ne.s32.totalorder %s112, %s113
    %p125 = scmp.eq.s32.totalorder %s19, 1
    %p126 = por %p124, %p125
    %p128 = scmp.ne.s32.totalorder %s113, %s127
    %p129 = scmp.eq.s32.totalorder %s19, 0
    %p130 = por %p128, %p129
    %s132 = sadd.s32 %s131, 1
    %p135 = scmp.eq.s32.totalorder %s13, 1
    %p136 = scmp.ne.s32.totalorder %s131, %s133
    %p137 = scmp.eq.s32.totalorder %s13, 0
    %p138 = por %p136, %p137
    %p139 = scmp.ne.s32.totalorder %s131, %s133
    %p140 = scmp.eq.s32.totalorder %s18, 1
    %p141 = por %p139, %p140
    %p142 = scmp.ne.s32.totalorder %s133, %s134
    %p143 = scmp.eq.s32.totalorder %s18, 0
    %p144 = por %p142, %p143
    %p145 = scmp.ne.s32.totalorder %s133, %s134
    %p146 = scmp.eq.s32.totalorder %s19, 1
    %p147 = por %p145, %p146
    %p149 = scmp.ne.s32.totalorder %s134, %s148
    %p150 = scmp.eq.s32.totalorder %s19, 0
    %p151 = por %p149, %p150
    %s153 = sadd.s32 %s152, 1
    %p156 = scmp.eq.s32.totalorder %s13, 1
    %p157 = scmp.ne.s32.totalorder %s152, %s154
    %p158 = scmp.eq.s32.totalorder %s13, 0
    %p159 = por %p157, %p158
    %p160 = scmp.ne.s32.totalorder %s152, %s154
    %p161 = scmp.eq.s32.totalorder %s18, 1
    %p162 = por %p160, %p161
    %p163 = scmp.ne.s32.totalorder %s154, %s155
    %p164 = scmp.eq.s32.totalorder %s18, 0
    %p165 = por %p163, %p164
    %p166 = scmp.ne.s32.totalorder %s154, %s155
    %p167 = scmp.eq.s32.totalorder %s19, 1
    %p168 = por %p166, %p167
    %p170 = scmp.ne.s32.totalorder %s155, %s169
    %p171 = scmp.eq.s32.totalorder %s19, 0
    %p172 = por %p170, %p171
    %s173 = ssub.s32 %s13, %s20
    %p174 = scmp.eq.s32.totalorder %s173, 0
    %s176 = sadd.s32 %s175, 1
    %s177 = scalar_select %p174, %s175, %s176
    %p180 = pneg %p174
    %p181 = scmp.eq.s32.totalorder %s13, 1
    %p182 = por %p180, %p181
    %p183 = scmp.ne.s32.totalorder %s175, %s178
    %p184 = scmp.eq.s32.totalorder %s13, 0
    %p185 = por %p183, %p184
    %p186 = scmp.ne.s32.totalorder %s175, %s178
    %p187 = scmp.eq.s32.totalorder %s18, 1
    %p188 = por %p186, %p187
    %p189 = scmp.ne.s32.totalorder %s178, %s179
    %p190 = scmp.eq.s32.totalorder %s18, 0
    %p191 = por %p189, %p190
    %p192 = scmp.ne.s32.totalorder %s178, %s179
    %p193 = scmp.eq.s32.totalorder %s19, 1
    %p194 = por %p192, %p193
    %p196 = scmp.ne.s32.totalorder %s179, %s195
    %p197 = scmp.eq.s32.totalorder %s19, 0
    %p198 = por %p196, %p197
    %p199 = scmp.le.s32.totalorder 1, %s13
    %p200 = scmp.lt.s32.totalorder %s13, 3
    %p201 = pnand %p199, %p200
    %p202 = pneg %p201
    // Predicated region
    $region9: #{residual_block_forward.2} parent=5 // pred_check
      _
    $region10: #{residual_block_forward.2} parent=5 // pred_check_branch
      %204 = sbr.rel (%p201) target = $region12
    $region11: #{residual_block_forward.2} parent=5 // pred_region
      %s205 = ssub.s32 %s13, 1
      // Predicated region
      $region13: #{residual_block_forward.2} parent=11 // pred_check
        %p206 = pneg %p60
      $region14: #{residual_block_forward.2} parent=11 // pred_check_branch
        %208 = sbr.rel (%p206) target = $region16
      $region15: #{residual_block_forward.2} parent=11 // pred_region
        _
      $region16: #{residual_block_forward.2} parent=11 // pred_fallthru
        _
      // Predicated region
      $region17: #{residual_block_forward.2} parent=11 // pred_check
        %p209 = pneg %p81
      $region18: #{residual_block_forward.2} parent=11 // pred_check_branch
        %211 = sbr.rel (%p209) target = $region20
      $region19: #{residual_block_forward.2} parent=11 // pred_region
        _
      $region20: #{residual_block_forward.2} parent=11 // pred_fallthru
        _
      // Predicated region
      $region21: #{residual_block_forward.2} parent=11 // pred_check
        %p212 = pneg %p102
      $region22: #{residual_block_forward.2} parent=11 // pred_check_branch
        %214 = sbr.rel (%p212) target = $region24
      $region23: #{residual_block_forward.2} parent=11 // pred_region
        _
      $region24: #{residual_block_forward.2} parent=11 // pred_fallthru
        _
      // Predicated region
      $region25: #{residual_block_forward.2} parent=11 // pred_check
        %p215 = pneg %p123
      $region26: #{residual_block_forward.2} parent=11 // pred_check_branch
        %217 = sbr.rel (%p215) target = $region28
      $region27: #{residual_block_forward.2} parent=11 // pred_region
        _
      $region28: #{residual_block_forward.2} parent=11 // pred_fallthru
        _
      // Predicated region
      $region29: #{residual_block_forward.2} parent=11 // pred_check
        %p218 = pneg %p144
      $region30: #{residual_block_forward.2} parent=11 // pred_check_branch
        %220 = sbr.rel (%p218) target = $region32
      $region31: #{residual_block_forward.2} parent=11 // pred_region
        _
      $region32: #{residual_block_forward.2} parent=11 // pred_fallthru
        _
      // Predicated region
      $region33: #{residual_block_forward.2} parent=11 // pred_check
        %p221 = pneg %p165
      $region34: #{residual_block_forward.2} parent=11 // pred_check_branch
        %223 = sbr.rel (%p221) target = $region36
      $region35: #{residual_block_forward.2} parent=11 // pred_region
        _
      $region36: #{residual_block_forward.2} parent=11 // pred_fallthru
        _
    $region12: #{residual_block_forward.2} parent=5 // pred_fallthru
      _
    %p224 = scmp.lt.s32.totalorder %s13, 2
    // Predicated region
    $region37: #{residual_block_forward.2} parent=5 // pred_check
      %p225 = pneg %p224
    $region38: #{residual_block_forward.2} parent=5 // pred_check_branch
      %227 = sbr.rel (%p225) target = $region40
    $region39: #{residual_block_forward.2} parent=5 // pred_region
      // Predicated region
      $region41: #{residual_block_forward.2} parent=39 // pred_check
        %p228 = pneg %p33
      $region42: #{residual_block_forward.2} parent=39 // pred_check_branch
        %230 = sbr.rel (%p228) target = $region44
      $region43: #{residual_block_forward.2} parent=39 // pred_region
        %p231 = scmp.lt.s32.totalorder %s13, 1
        %s232 = scalar_select %p231, %s13, 1
        %s233 = smul.addr %s232, 32
        %s234 = smul.addr %s233, 8
        %s235 = scalar_lea.vmem %s0, %s234
      $region44: #{residual_block_forward.2} parent=39 // pred_fallthru
        _
    $region40: #{residual_block_forward.2} parent=5 // pred_fallthru
      _
    %p236 = scmp.le.s32.totalorder 1, %s13
    %p237 = scmp.lt.s32.totalorder %s13, 3
    %p238 = pnand %p236, %p237
    %p239 = pneg %p238
    // Predicated region
    $region45: #{residual_block_forward.2} parent=5 // pred_check
      _
    $region46: #{residual_block_forward.2} parent=5 // pred_check_branch
      %241 = sbr.rel (%p238) target = $region48
    $region47: #{residual_block_forward.2} parent=5 // pred_region
      %s242 = ssub.s32 %s13, 1
      %p243 = scmp.lt.s32.totalorder %s18, 1
      %s244 = scalar_select %p243, %s18, 1
      %s245 = smul.addr %s244, 32
      %s246 = smul.addr %s245, 8
      %s247 = scalar_lea.vmem %s0, %s246
      %p248 = pneg %p39
      %p249 = pneg %p36
      %p250 = pneg %p60
      %p251 = pneg %p57
      %p252 = pneg %p81
      %p253 = pneg %p78
      %p254 = pneg %p102
      %p255 = pneg %p99
      %p256 = pneg %p123
      %p257 = pneg %p120
      %p258 = pneg %p144
      %p259 = pneg %p141
      %p260 = pneg %p165
      %p261 = pneg %p162
      %p262 = pneg %p191
      %p263 = pneg %p188
      %p264 = scmp.lt.s32.totalorder %s18, 1
      %s265 = scalar_select %p264, %s18, 1
      %s266 = smul.addr %s265, 32
      %s267 = smul.addr %s266, 8
      %s268 = scalar_lea.vmem %s7, %s267
      %p269 = scmp.lt.s32.totalorder %s18, 1
      %s270 = scalar_select %p269, %s18, 1
      %s271 = smul.addr %s270, 32
      %s272 = smul.addr %s271, 8
      %s273 = scalar_lea.vmem %s0, %s272
      %p274 = scmp.lt.s32.totalorder %s18, 1
      %s275 = scalar_select %p274, %s18, 1
      %s276 = smul.addr %s275, 32
      %s277 = smul.addr %s276, 8
      %s278 = scalar_lea.vmem %s7, %s277
      %vm279 = vcmask 64512
      %280 = vst.msk [vmem:[#allocation2] sm:$0xff] %vm279, 0.0
      %281 = vst.msk [vmem:[#allocation2 + $0x8] sm:$0xff] %vm279, 0.0
      %vm282 = vcmask 58368
      %283 = vst.msk [vmem:[#allocation2 + $0x10] sm:$0x3] %vm282, 0.0
      %284 = vst.msk [vmem:[#allocation2 + $0x18] sm:$0xff] %vm279, 0.0
      %285 = vst.msk [vmem:[#allocation2 + $0x20] sm:$0xff] %vm279, 0.0
      %286 = vst.msk [vmem:[#allocation2 + $0x28] sm:$0x3] %vm282, 0.0
      %287 = vst.msk [vmem:[#allocation2 + $0x30] sm:$0xff] %vm279, 0.0
      %288 = vst.msk [vmem:[#allocation2 + $0x38] sm:$0xff] %vm279, 0.0
      %289 = vst.msk [vmem:[#allocation2 + $0x40] sm:$0x3] %vm282, 0.0
      %290 = vst.msk [vmem:[#allocation2 + $0x48] sm:$0xff] %vm279, 0.0
      %291 = vst.msk [vmem:[#allocation2 + $0x50] sm:$0xff] %vm279, 0.0
      %292 = vst.msk [vmem:[#allocation2 + $0x58] sm:$0x3] %vm282, 0.0
      %293 = vst.msk [vmem:[#allocation2 + $0x60] sm:$0xff] %vm279, 0.0
      %294 = vst.msk [vmem:[#allocation2 + $0x68] sm:$0xff] %vm279, 0.0
      %295 = vst.msk [vmem:[#allocation2 + $0x70] sm:$0x3] %vm282, 0.0
      %296 = vst.msk [vmem:[#allocation2 + $0x78] sm:$0xff] %vm279, 0.0
      %297 = vst.msk [vmem:[#allocation2 + $0x80] sm:$0xff] %vm279, 0.0
      %298 = vst.msk [vmem:[#allocation2 + $0x88] sm:$0x3] %vm282, 0.0
      %299 = vst.msk [vmem:[#allocation2 + $0x90] sm:$0xff] %vm279, 0.0
      %300 = vst.msk [vmem:[#allocation2 + $0x98] sm:$0xff] %vm279, 0.0
      %301 = vst.msk [vmem:[#allocation2 + $0xa0] sm:$0x3] %vm282, 0.0
      %302 = vst.msk [vmem:[#allocation2 + $0xa8] sm:$0xff] %vm279, 0.0
      %303 = vst.msk [vmem:[#allocation2 + $0xb0] sm:$0xff] %vm279, 0.0
      %304 = vst.msk [vmem:[#allocation2 + $0xb8] sm:$0x3] %vm282, 0.0
      %305 = vst.msk [vmem:[#allocation2 + $0xc0] sm:$0xff] %vm279, 0.0
      %306 = vst.msk [vmem:[#allocation2 + $0xc8] sm:$0xff] %vm279, 0.0
      %307 = vst.msk [vmem:[#allocation2 + $0xd0] sm:$0x3] %vm282, 0.0
      %308 = vst.msk [vmem:[#allocation2 + $0xd8] sm:$0xff] %vm279, 0.0
      %309 = vst.msk [vmem:[#allocation2 + $0xe0] sm:$0xff] %vm279, 0.0
      %310 = vst.msk [vmem:[#allocation2 + $0xe8] sm:$0x3] %vm282, 0.0
      %311 = vst.msk [vmem:[#allocation2 + $0xf0] sm:$0xff] %vm279, 0.0
      %312 = vst.msk [vmem:[#allocation2 + $0xf8] sm:$0xff] %vm279, 0.0
      %313 = vst.msk [vmem:[#allocation2 + $0x100] sm:$0x3] %vm282, 0.0
      %314 = vst.msk [vmem:[#allocation2 + $0x108] sm:$0xff] %vm279, 0.0
      %315 = vst.msk [vmem:[#allocation2 + $0x110] sm:$0xff] %vm279, 0.0
      %316 = vst.msk [vmem:[#allocation2 + $0x118] sm:$0x3] %vm282, 0.0
      %317 = vst.msk [vmem:[#allocation2 + $0x120] sm:$0xff] %vm279, 0.0
      %318 = vst.msk [vmem:[#allocation2 + $0x128] sm:$0xff] %vm279, 0.0
      %319 = vst.msk [vmem:[#allocation2 + $0x130] sm:$0x3] %vm282, 0.0
      %320 = vst.msk [vmem:[#allocation2 + $0x138] sm:$0xff] %vm279, 0.0
      %321 = vst.msk [vmem:[#allocation2 + $0x140] sm:$0xff] %vm279, 0.0
      %322 = vst.msk [vmem:[#allocation2 + $0x148] sm:$0x3] %vm282, 0.0
      %323 = vst.msk [vmem:[#allocation2 + $0x150] sm:$0xff] %vm279, 0.0
      %324 = vst.msk [vmem:[#allocation2 + $0x158] sm:$0xff] %vm279, 0.0
      %325 = vst.msk [vmem:[#allocation2 + $0x160] sm:$0x3] %vm282, 0.0
      %326 = vst.msk [vmem:[#allocation2 + $0x168] sm:$0xff] %vm279, 0.0
      %327 = vst.msk [vmem:[#allocation2 + $0x170] sm:$0xff] %vm279, 0.0
      %328 = vst.msk [vmem:[#allocation2 + $0x178] sm:$0x3] %vm282, 0.0
      %329 = vst.msk [vmem:[#allocation2 + $0x180] sm:$0xff] %vm279, 0.0
      %330 = vst.msk [vmem:[#allocation2 + $0x188] sm:$0xff] %vm279, 0.0
      %331 = vst.msk [vmem:[#allocation2 + $0x190] sm:$0x3] %vm282, 0.0
      %332 = vst.msk [vmem:[#allocation2 + $0x198] sm:$0xff] %vm279, 0.0
      %333 = vst.msk [vmem:[#allocation2 + $0x1a0] sm:$0xff] %vm279, 0.0
      %334 = vst.msk [vmem:[#allocation2 + $0x1a8] sm:$0x3] %vm282, 0.0
      %v335 = vld [vmem:[%s273] sm:$0xff]
      %v336 = vld [vmem:[%s273 + $0x8] sm:$0xff]
      %v337 = vld [vmem:[%s273 + $0x10] sm:$0xff]
      %v338 = vld [vmem:[%s273 + $0x18] sm:$0xff]
      %v339 = vld [vmem:[%s273 + $0x20] sm:$0xff]
      %v340 = vld [vmem:[%s273 + $0x28] sm:$0xff]
      %v341 = vld [vmem:[%s273 + $0x30] sm:$0xff]
      %v342 = vld [vmem:[%s273 + $0x38] sm:$0xff]
      %v343 = vld [vmem:[%s273 + $0x40] sm:$0xff]
      %v344 = vld [vmem:[%s273 + $0x48] sm:$0xff]
      %v345 = vld [vmem:[%s273 + $0x50] sm:$0xff]
      %v346 = vld [vmem:[%s273 + $0x58] sm:$0xff]
      %v347 = vld [vmem:[%s273 + $0x60] sm:$0xff]
      %v348 = vld [vmem:[%s273 + $0x68] sm:$0xff]
      %v349 = vld [vmem:[%s273 + $0x70] sm:$0xff]
      %v350 = vld [vmem:[%s273 + $0x78] sm:$0xff]
      %v351 = vld [vmem:[%s273 + $0x80] sm:$0xff]
      %v352 = vld [vmem:[%s273 + $0x88] sm:$0xff]
      %v353 = vld [vmem:[%s273 + $0x90] sm:$0xff]
      %v354 = vld [vmem:[%s273 + $0x98] sm:$0xff]
      %v355 = vld [vmem:[%s273 + $0xa0] sm:$0xff]
      %v356 = vld [vmem:[%s273 + $0xa8] sm:$0xff]
      %v357 = vld [vmem:[%s273 + $0xb0] sm:$0xff]
      %v358 = vld [vmem:[%s273 + $0xb8] sm:$0xff]
      %v359 = vld [vmem:[%s273 + $0xc0] sm:$0xff]
      %v360 = vld [vmem:[%s273 + $0xc8] sm:$0xff]
      %v361 = vld [vmem:[%s273 + $0xd0] sm:$0xff]
      %v362 = vld [vmem:[%s273 + $0xd8] sm:$0xff]
      %v363 = vld [vmem:[%s273 + $0xe0] sm:$0xff]
      %v364 = vld [vmem:[%s273 + $0xe8] sm:$0xff]
      %v365 = vld [vmem:[%s273 + $0xf0] sm:$0xff]
      %v366 = vld [vmem:[%s273 + $0xf8] sm:$0xff]
      %v367 = vld [vmem:[%s1] sm:$0xff]
      %v368 = vld [vmem:[%s1 + $0x8] sm:$0xff]
      %vm369 = vcmask 130048
      %v371 = vsel %vm369, %v335, 0
      %v374 = vsel %vm369, %v336, 0
      %v377 = vsel %vm369, %v337, 0
      %v380 = vsel %vm369, %v338, 0
      %v383 = vsel %vm369, %v339, 0
      %v386 = vsel %vm369, %v340, 0
      %v389 = vsel %vm369, %v341, 0
      %v392 = vsel %vm369, %v342, 0
      %v395 = vsel %vm369, %v343, 0
      %v398 = vsel %vm369, %v344, 0
      %v401 = vsel %vm369, %v345, 0
      %v404 = vsel %vm369, %v346, 0
      %v407 = vsel %vm369, %v347, 0
      %v410 = vsel %vm369, %v348, 0
      %v413 = vsel %vm369, %v349, 0
      %v416 = vsel %vm369, %v350, 0
      %v419 = vsel %vm369, %v351, 0
      %v422 = vsel %vm369, %v352, 0
      %v425 = vsel %vm369, %v353, 0
      %v428 = vsel %vm369, %v354, 0
      %v431 = vsel %vm369, %v355, 0
      %v434 = vsel %vm369, %v356, 0
      %v437 = vsel %vm369, %v357, 0
      %v440 = vsel %vm369, %v358, 0
      %v443 = vsel %vm369, %v359, 0
      %v446 = vsel %vm369, %v360, 0
      %v449 = vsel %vm369, %v361, 0
      %v452 = vsel %vm369, %v362, 0
      %v455 = vsel %vm369, %v363, 0
      %v458 = vsel %vm369, %v364, 0
      %v461 = vsel %vm369, %v365, 0
      %v464 = vsel %vm369, %v366, 0
      %466 = vmatprep.subr.mxu0 0.0
      %467 = vmatpush1.msra.mxu0 %v367
      %468 = vmatprep.subr.mxu0 0.0
      %469 = vmatpush1.msra.mxu0 %v368
      %470 = vmatprep.subr.mxu0 0.0
      %471 = vmatpush1.msra.mxu0 0.0
      %472 = vmatprep.subr.mxu0 0.0
      %473 = vmatpush1.msra.mxu0 0.0
      %474 = vmatprep.subr.mxu0 0.0
      %475 = vmatpush1.msra.mxu0 0.0
      %476 = vmatprep.subr.mxu0 0.0
      %477 = vmatpush1.msra.mxu0 0.0
      %478 = vmatprep.subr.mxu0 0.0
      %479 = vmatpush1.msra.mxu0 0.0
      %480 = vmatprep.subr.mxu0 0.0
      %481 = vmatpush1.msra.mxu0 0.0
      %482 = vmatprep.subr.mxu0 0.0
      %483 = vmatpush1.msra.mxu0 0.0
      %484 = vmatprep.subr.mxu0 0.0
      %485 = vmatpush1.msra.mxu0 0.0
      %486 = vmatprep.subr.mxu0 0.0
      %487 = vmatpush1.msra.mxu0 0.0
      %488 = vmatprep.subr.mxu0 0.0
      %489 = vmatpush1.msra.mxu0 0.0
      %490 = vmatprep.subr.mxu0 0.0
      %491 = vmatpush1.msra.mxu0 0.0
      %492 = vmatprep.subr.mxu0 0.0
      %493 = vmatpush1.msra.mxu0 0.0
      %494 = vmatprep.subr.mxu0 0.0
      %495 = vmatpush1.msra.mxu0 0.0
      %496 = vmatprep.subr.mxu0 0.0
      %497 = vmatpush1.msra.mxu0 0.0
      %498 = vmatprep.subr.mxu0 0.0
      %499 = vmatpush1.msra.mxu0 0.0
      %500 = vmatprep.subr.mxu0 0.0
      %501 = vmatpush1.msra.mxu0 0.0
      %502 = vmatprep.subr.mxu0 0.0
      %503 = vmatpush1.msra.mxu0 0.0
      %504 = vmatprep.subr.mxu0 0.0
      %505 = vmatpush1.msra.mxu0 0.0
      %506 = vmatprep.subr.mxu0 0.0
      %507 = vmatpush1.msra.mxu0 0.0
      %508 = vmatprep.subr.mxu0 0.0
      %509 = vmatpush1.msra.mxu0 0.0
      %510 = vmatprep.subr.mxu0 0.0
      %511 = vmatpush1.msra.mxu0 0.0
      %512 = vmatprep.subr.mxu0 0.0
      %513 = vmatpush1.msra.mxu0 0.0
      %514 = vmatprep.subr.mxu0 0.0
      %515 = vmatpush1.msra.mxu0 0.0
      %516 = vmatprep.subr.mxu0 0.0
      %517 = vmatpush1.msra.mxu0 0.0
      %518 = vmatprep.subr.mxu0 0.0
      %519 = vmatpush1.msra.mxu0 0.0
      %520 = vmatprep.subr.mxu0 0.0
      %521 = vmatpush1.msra.mxu0 0.0
      %522 = vmatprep.subr.mxu0 0.0
      %523 = vmatpush1.msra.mxu0 0.0
      %524 = vmatprep.subr.mxu0 0.0
      %525 = vmatpush1.msra.mxu0 0.0
      %526 = vmatprep.subr.mxu0 0.0
      %527 = vmatpush1.msra.mxu0 0.0
      %528 = vmatprep.subr.mxu0 0.0
      %529 = vmatpush1.msra.mxu0 0.0
      %530 = vmatprep.mubr.f32.mxu0 0.0
      %531 = vmatmul.mubr.f32.gmra.mrb[0].mxu0 %v371
      %v532 = vpop.f32.mrb[0].mxu0
      %v533 = vadd.f32 0.0, %v532
      %v534 = vpop.f32.mrb[0].mxu0
      %535 = vmatprep.mubr.f32.mxu0 0.0
      %536 = vmatmul.mubr.f32.gmra.mrb[0].mxu0 %v374
      %v537 = vpop.f32.mrb[0].mxu0
      %v538 = vadd.f32 0.0, %v537
      %v539 = vpop.f32.mrb[0].mxu0
      %540 = vmatprep.mubr.f32.mxu0 0.0
      %541 = vmatmul.mubr.f32.gmra.mrb[0].mxu0 %v377
      %v542 = vpop.f32.mrb[0].mxu0
      %v543 = vadd.f32 0.0, %v542
      %v544 = vpop.f32.mrb[0].mxu0
      %545 = vmatprep.mubr.f32.mxu0 0.0
      %546 = vmatmul.mubr.f32.gmra.mrb[0].mxu0 %v380
      %v547 = vpop.f32.mrb[0].mxu0
      %v548 = vadd.f32 0.0, %v547
      %v549 = vpop.f32.mrb[0].mxu0
      %550 = vmatprep.mubr.f32.mxu0 0.0
      %551 = vmatmul.mubr.f32.gmra.mrb[0].mxu0 %v383
      %v552 = vpop.f32.mrb[0].mxu0
      %v553 = vadd.f32 0.0, %v552
      %v554 = vpop.f32.mrb[0].mxu0
      %555 = vmatprep.mubr.f32.mxu0 0.0
      %556 = vmatmul.mubr.f32.gmra.mrb[0].mxu0 %v386
      %v557 = vpop.f32.mrb[0].mxu0
      %v558 = vadd.f32 0.0, %v557
      %v559 = vpop.f32.mrb[0].mxu0
      %560 = vmatprep.mubr.f32.mxu0 0.0
      %561 = vmatmul.mubr.f32.gmra.mrb[0].mxu0 %v389
      %v562 = vpop.f32.mrb[0].mxu0
      %v563 = vadd.f32 0.0, %v562
      %v564 = vpop.f32.mrb[0].mxu0
      %565 = vmatprep.mubr.f32.mxu0 0.0
      %566 = vmatmul.mubr.f32.gmra.mrb[0].mxu0 %v392
      %v567 = vpop.f32.mrb[0].mxu0
      %v568 = vadd.f32 0.0, %v567
      %v569 = vpop.f32.mrb[0].mxu0
      %570 = vmatprep.mubr.f32.mxu0 0.0
      %571 = vmatmul.mubr.f32.gmra.mrb[0].mxu0 %v395
      %v572 = vpop.f32.mrb[0].mxu0
      %v573 = vadd.f32 0.0, %v572
      %v574 = vpop.f32.mrb[0].mxu0
      %575 = vmatprep.mubr.f32.mxu0 0.0
      %576 = vmatmul.mubr.f32.gmra.mrb[0].mxu0 %v398
      %v577 = vpop.f32.mrb[0].mxu0
      %v578 = vadd.f32 0.0, %v577
      %v579 = vpop.f32.mrb[0].mxu0
      %580 = vmatprep.mubr.f32.mxu0 0.0
      %581 = vmatmul.mubr.f32.gmra.mrb[0].mxu0 %v401
      %v582 = vpop.f32.mrb[0].mxu0
      %v583 = vadd.f32 0.0, %v582
      %v584 = vpop.f32.mrb[0].mxu0
      %585 = vmatprep.mubr.f32.mxu0 0.0
      %586 = vmatmul.mubr.f32.gmra.mrb[0].mxu0 %v404
      %v587 = vpop.f32.mrb[0].mxu0
      %v588 = vadd.f32 0.0, %v587
      %v589 = vpop.f32.mrb[0].mxu0
      %590 = vmatprep.mubr.f32.mxu0 0.0
      %591 = vmatmul.mubr.f32.gmra.mrb[0].mxu0 %v407
      %v592 = vpop.f32.mrb[0].mxu0
      %v593 = vadd.f32 0.0, %v592
      %v594 = vpop.f32.mrb[0].mxu0
      %595 = vmatprep.mubr.f32.mxu0 0.0
      %596 = vmatmul.mubr.f32.gmra.mrb[0].mxu0 %v410
      %v597 = vpop.f32.mrb[0].mxu0
      %v598 = vadd.f32 0.0, %v597
      %v599 = vpop.f32.mrb[0].mxu0
      %600 = vmatprep.mubr.f32.mxu0 0.0
      %601 = vmatmul.mubr.f32.gmra.mrb[0].mxu0 %v413
      %v602 = vpop.f32.mrb[0].mxu0
      %v603 = vadd.f32 0.0, %v602
      %v604 = vpop.f32.mrb[0].mxu0
      %605 = vmatprep.mubr.f32.mxu0 0.0
      %606 = vmatmul.mubr.f32.gmra.mrb[0].mxu0 %v416
      %v607 = vpop.f32.mrb[0].mxu0
      %v608 = vadd.f32 0.0, %v607
      %v609 = vpop.f32.mrb[0].mxu0
      %610 = vmatprep.mubr.f32.mxu0 0.0
      %611 = vmatmul.mubr.f32.gmra.mrb[0].mxu0 %v419
      %v612 = vpop.f32.mrb[0].mxu0
      %v613 = vadd.f32 0.0, %v612
      %v614 = vpop.f32.mrb[0].mxu0
      %615 = vmatprep.mubr.f32.mxu0 0.0
      %616 = vmatmul.mubr.f32.gmra.mrb[0].mxu0 %v422
      %v617 = vpop.f32.mrb[0].mxu0
      %v618 = vadd.f32 0.0, %v617
      %v619 = vpop.f32.mrb[0].mxu0
      %620 = vmatprep.mubr.f32.mxu0 0.0
      %621 = vmatmul.mubr.f32.gmra.mrb[0].mxu0 %v425
      %v622 = vpop.f32.mrb[0].mxu0
      %v623 = vadd.f32 0.0, %v622
      %v624 = vpop.f32.mrb[0].mxu0
      %625 = vmatprep.mubr.f32.mxu0 0.0
      %626 = vmatmul.mubr.f32.gmra.mrb[0].mxu0 %v428
      %v627 = vpop.f32.mrb[0].mxu0
      %v628 = vadd.f32 0.0, %v627
      %v629 = vpop.f32.mrb[0].mxu0
      %630 = vmatprep.mubr.f32.mxu0 0.0
      %631 = vmatmul.mubr.f32.gmra.mrb[0].mxu0 %v431
      %v632 = vpop.f32.mrb[0].mxu0
      %v633 = vadd.f32 0.0, %v632
      %v634 = vpop.f32.mrb[0].mxu0
      %635 = vmatprep.mubr.f32.mxu0 0.0
      %636 = vmatmul.mubr.f32.gmra.mrb[0].mxu0 %v434
      %v637 = vpop.f32.mrb[0].mxu0
      %v638 = vadd.f32 0.0, %v637
      %v639 = vpop.f32.mrb[0].mxu0
      %640 = vmatprep.mubr.f32.mxu0 0.0
      %641 = vmatmul.mubr.f32.gmra.mrb[0].mxu0 %v437
      %v642 = vpop.f32.mrb[0].mxu0
      %v643 = vadd.f32 0.0, %v642
      %v644 = vpop.f32.mrb[0].mxu0
      %645 = vmatprep.mubr.f32.mxu0 0.0
      %646 = vmatmul.mubr.f32.gmra.mrb[0].mxu0 %v440
      %v647 = vpop.f32.mrb[0].mxu0
      %v648 = vadd.f32 0.0, %v647
      %v649 = vpop.f32.mrb[0].mxu0
      %650 = vmatprep.mubr.f32.mxu0 0.0
      %651 = vmatmul.mubr.f32.gmra.mrb[0].mxu0 %v443
      %v652 = vpop.f32.mrb[0].mxu0
      %v653 = vadd.f32 0.0, %v652
      %v654 = vpop.f32.mrb[0].mxu0
      %655 = vmatprep.mubr.f32.mxu0 0.0
      %656 = vmatmul.mubr.f32.gmra.mrb[0].mxu0 %v446
      %v657 = vpop.f32.mrb[0].mxu0
      %v658 = vadd.f32 0.0, %v657
      %v659 = vpop.f32.mrb[0].mxu0
      %660 = vmatprep.mubr.f32.mxu0 0.0
      %661 = vmatmul.mubr.f32.gmra.mrb[0].mxu0 %v449
      %v662 = vpop.f32.mrb[0].mxu0
      %v663 = vadd.f32 0.0, %v662
      %v664 = vpop.f32.mrb[0].mxu0
      %665 = vmatprep.mubr.f32.mxu0 0.0
      %666 = vmatmul.mubr.f32.gmra.mrb[0].mxu0 %v452
      %v667 = vpop.f32.mrb[0].mxu0
      %v668 = vadd.f32 0.0, %v667
      %v669 = vpop.f32.mrb[0].mxu0
      %670 = vmatprep.mubr.f32.mxu0 0.0
      %671 = vmatmul.mubr.f32.gmra.mrb[0].mxu0 %v455
      %v672 = vpop.f32.mrb[0].mxu0
      %v673 = vadd.f32 0.0, %v672
      %v674 = vpop.f32.mrb[0].mxu0
      %675 = vmatprep.mubr.f32.mxu0 0.0
      %676 = vmatmul.mubr.f32.gmra.mrb[0].mxu0 %v458
      %v677 = vpop.f32.mrb[0].mxu0
      %v678 = vadd.f32 0.0, %v677
      %v679 = vpop.f32.mrb[0].mxu0
      %680 = vmatprep.mubr.f32.mxu0 0.0
      %681 = vmatmul.mubr.f32.gmra.mrb[0].mxu0 %v461
      %v682 = vpop.f32.mrb[0].mxu0
      %v683 = vadd.f32 0.0, %v682
      %v684 = vpop.f32.mrb[0].mxu0
      %685 = vmatprep.mubr.f32.mxu0 0.0
      %686 = vmatmul.mubr.f32.gmra.mrb[0].mxu0 %v464
      %v687 = vpop.f32.mrb[0].mxu0
      %v688 = vadd.f32 0.0, %v687
      %v689 = vpop.f32.mrb[0].mxu0
      %690 = vdwg.mxu0
      %v691 = vld [vmem:[%s2] sm:$0x1]
      %v693 = vlaneseq
      %v694 = vshrl.u32 %v693, 7
      %v695 = vsub.s32 0, %v694
      %v696 = vrot.slane %v691, %v695
      %v698 = vmul.f32 %v533, %v696
      %v699 = vmul.f32 %v538, %v696
      %v700 = vmul.f32 %v543, %v696
      %v701 = vmul.f32 %v548, %v696
      %v702 = vmul.f32 %v553, %v696
      %v703 = vmul.f32 %v558, %v696
      %v704 = vmul.f32 %v563, %v696
      %v705 = vmul.f32 %v568, %v696
      %v706 = vmul.f32 %v573, %v696
      %v707 = vmul.f32 %v578, %v696
      %v708 = vmul.f32 %v583, %v696
      %v709 = vmul.f32 %v588, %v696
      %v710 = vmul.f32 %v593, %v696
      %v711 = vmul.f32 %v598, %v696
      %v712 = vmul.f32 %v603, %v696
      %v713 = vmul.f32 %v608, %v696
      %v714 = vmul.f32 %v613, %v696
      %v715 = vmul.f32 %v618, %v696
      %v716 = vmul.f32 %v623, %v696
      %v717 = vmul.f32 %v628, %v696
      %v718 = vmul.f32 %v633, %v696
      %v719 = vmul.f32 %v638, %v696
      %v720 = vmul.f32 %v643, %v696
      %v721 = vmul.f32 %v648, %v696
      %v722 = vmul.f32 %v653, %v696
      %v723 = vmul.f32 %v658, %v696
      %v724 = vmul.f32 %v663, %v696
      %v725 = vmul.f32 %v668, %v696
      %v726 = vmul.f32 %v673, %v696
      %v727 = vmul.f32 %v678, %v696
      %v728 = vmul.f32 %v683, %v696
      %v729 = vmul.f32 %v688, %v696
      %v730 = vld [vmem:[%s3] sm:$0x1]
      %v732 = vlaneseq
      %v733 = vshrl.u32 %v732, 7
      %v734 = vsub.s32 0, %v733
      %v735 = vrot.slane %v730, %v734
      %v737 = vadd.f32 %v698, %v735
      %v738 = vadd.f32 %v699, %v735
      %v739 = vadd.f32 %v700, %v735
      %v740 = vadd.f32 %v701, %v735
      %v741 = vadd.f32 %v702, %v735
      %v742 = vadd.f32 %v703, %v735
      %v743 = vadd.f32 %v704, %v735
      %v744 = vadd.f32 %v705, %v735
      %v745 = vadd.f32 %v706, %v735
      %v746 = vadd.f32 %v707, %v735
      %v747 = vadd.f32 %v708, %v735
      %v748 = vadd.f32 %v709, %v735
      %v749 = vadd.f32 %v710, %v735
      %v750 = vadd.f32 %v711, %v735
      %v751 = vadd.f32 %v712, %v735
      %v752 = vadd.f32 %v713, %v735
      %v753 = vadd.f32 %v714, %v735
      %v754 = vadd.f32 %v715, %v735
      %v755 = vadd.f32 %v716, %v735
      %v756 = vadd.f32 %v717, %v735
      %v757 = vadd.f32 %v718, %v735
      %v758 = vadd.f32 %v719, %v735
      %v759 = vadd.f32 %v720, %v735
      %v760 = vadd.f32 %v721, %v735
      %v761 = vadd.f32 %v722, %v735
      %v762 = vadd.f32 %v723, %v735
      %v763 = vadd.f32 %v724, %v735
      %v764 = vadd.f32 %v725, %v735
      %v765 = vadd.f32 %v726, %v735
      %v766 = vadd.f32 %v727, %v735
      %v767 = vadd.f32 %v728, %v735
      %v768 = vadd.f32 %v729, %v735
      %vm769 = vcmp.gt.f32.partialorder %v737, 0.0
      %vm770 = vcmp.gt.f32.partialorder %v738, 0.0
      %vm771 = vcmp.gt.f32.partialorder %v739, 0.0
      %vm772 = vcmp.gt.f32.partialorder %v740, 0.0
      %vm773 = vcmp.gt.f32.partialorder %v741, 0.0
      %vm774 = vcmp.gt.f32.partialorder %v742, 0.0
      %vm775 = vcmp.gt.f32.partialorder %v743, 0.0
      %vm776 = vcmp.gt.f32.partialorder %v744, 0.0
      %vm777 = vcmp.gt.f32.partialorder %v745, 0.0
      %vm778 = vcmp.gt.f32.partialorder %v746, 0.0
      %vm779 = vcmp.gt.f32.partialorder %v747, 0.0
      %vm780 = vcmp.gt.f32.partialorder %v748, 0.0
      %vm781 = vcmp.gt.f32.partialorder %v749, 0.0
      %vm782 = vcmp.gt.f32.partialorder %v750, 0.0
      %vm783 = vcmp.gt.f32.partialorder %v751, 0.0
      %vm784 = vcmp.gt.f32.partialorder %v752, 0.0
      %vm785 = vcmp.gt.f32.partialorder %v753, 0.0
      %vm786 = vcmp.gt.f32.partialorder %v754, 0.0
      %vm787 = vcmp.gt.f32.partialorder %v755, 0.0
      %vm788 = vcmp.gt.f32.partialorder %v756, 0.0
      %vm789 = vcmp.gt.f32.partialorder %v757, 0.0
      %vm790 = vcmp.gt.f32.partialorder %v758, 0.0
      %vm791 = vcmp.gt.f32.partialorder %v759, 0.0
      %vm792 = vcmp.gt.f32.partialorder %v760, 0.0
      %vm793 = vcmp.gt.f32.partialorder %v761, 0.0
      %vm794 = vcmp.gt.f32.partialorder %v762, 0.0
      %vm795 = vcmp.gt.f32.partialorder %v763, 0.0
      %vm796 = vcmp.gt.f32.partialorder %v764, 0.0
      %vm797 = vcmp.gt.f32.partialorder %v765, 0.0
      %vm798 = vcmp.gt.f32.partialorder %v766, 0.0
      %vm799 = vcmp.gt.f32.partialorder %v767, 0.0
      %vm800 = vcmp.gt.f32.partialorder %v768, 0.0
      %v801 = vmul.f32 %v737, 0.1
      %v802 = vmul.f32 %v738, 0.1
      %v803 = vmul.f32 %v739, 0.1
      %v804 = vmul.f32 %v740, 0.1
      %v805 = vmul.f32 %v741, 0.1
      %v806 = vmul.f32 %v742, 0.1
      %v807 = vmul.f32 %v743, 0.1
      %v808 = vmul.f32 %v744, 0.1
      %v809 = vmul.f32 %v745, 0.1
      %v810 = vmul.f32 %v746, 0.1
      %v811 = vmul.f32 %v747, 0.1
      %v812 = vmul.f32 %v748, 0.1
      %v813 = vmul.f32 %v749, 0.1
      %v814 = vmul.f32 %v750, 0.1
      %v815 = vmul.f32 %v751, 0.1
      %v816 = vmul.f32 %v752, 0.1
      %v817 = vmul.f32 %v753, 0.1
      %v818 = vmul.f32 %v754, 0.1
      %v819 = vmul.f32 %v755, 0.1
      %v820 = vmul.f32 %v756, 0.1
      %v821 = vmul.f32 %v757, 0.1
      %v822 = vmul.f32 %v758, 0.1
      %v823 = vmul.f32 %v759, 0.1
      %v824 = vmul.f32 %v760, 0.1
      %v825 = vmul.f32 %v761, 0.1
      %v826 = vmul.f32 %v762, 0.1
      %v827 = vmul.f32 %v763, 0.1
      %v828 = vmul.f32 %v764, 0.1
      %v829 = vmul.f32 %v765, 0.1
      %v830 = vmul.f32 %v766, 0.1
      %v831 = vmul.f32 %v767, 0.1
      %v832 = vmul.f32 %v768, 0.1
      %v833 = vsel %vm769, %v737, %v801
      %v834 = vsel %vm770, %v738, %v802
      %v835 = vsel %vm771, %v739, %v803
      %v836 = vsel %vm772, %v740, %v804
      %v837 = vsel %vm773, %v741, %v805
      %v838 = vsel %vm774, %v742, %v806
      %v839 = vsel %vm775, %v743, %v807
      %v840 = vsel %vm776, %v744, %v808
      %v841 = vsel %vm777, %v745, %v809
      %v842 = vsel %vm778, %v746, %v810
      %v843 = vsel %vm779, %v747, %v811
      %v844 = vsel %vm780, %v748, %v812
      %v845 = vsel %vm781, %v749, %v813
      %v846 = vsel %vm782, %v750, %v814
      %v847 = vsel %vm783, %v751, %v815
      %v848 = vsel %vm784, %v752, %v816
      %v849 = vsel %vm785, %v753, %v817
      %v850 = vsel %vm786, %v754, %v818
      %v851 = vsel %vm787, %v755, %v819
      %v852 = vsel %vm788, %v756, %v820
      %v853 = vsel %vm789, %v757, %v821
      %v854 = vsel %vm790, %v758, %v822
      %v855 = vsel %vm791, %v759, %v823
      %v856 = vsel %vm792, %v760, %v824
      %v857 = vsel %vm793, %v761, %v825
      %v858 = vsel %vm794, %v762, %v826
      %v859 = vsel %vm795, %v763, %v827
      %v860 = vsel %vm796, %v764, %v828
      %v861 = vsel %vm797, %v765, %v829
      %v862 = vsel %vm798, %v766, %v830
      %v863 = vsel %vm799, %v767, %v831
      %v864 = vsel %vm800, %v768, %v832
      %s865 = scalar_lea.vmem [#allocation2], 24
      %866 = vst.msk [vmem:[%s865 + $0x1] sm:$0xff] %vm279, %v833
      %867 = vst.msk [vmem:[%s865 + $0x9] sm:$0xff] %vm279, %v834
      %868 = vst.msk [vmem:[%s865 + $0x19] sm:$0xff] %vm279, %v835
      %869 = vst.msk [vmem:[%s865 + $0x21] sm:$0xff] %vm279, %v836
      %870 = vst.msk [vmem:[%s865 + $0x31] sm:$0xff] %vm279, %v837
      %871 = vst.msk [vmem:[%s865 + $0x39] sm:$0xff] %vm279, %v838
      %872 = vst.msk [vmem:[%s865 + $0x49] sm:$0xff] %vm279, %v839
      %873 = vst.msk [vmem:[%s865 + $0x51] sm:$0xff] %vm279, %v840
      %874 = vst.msk [vmem:[%s865 + $0x61] sm:$0xff] %vm279, %v841
      %875 = vst.msk [vmem:[%s865 + $0x69] sm:$0xff] %vm279, %v842
      %876 = vst.msk [vmem:[%s865 + $0x79] sm:$0xff] %vm279, %v843
      %877 = vst.msk [vmem:[%s865 + $0x81] sm:$0xff] %vm279, %v844
      %878 = vst.msk [vmem:[%s865 + $0x91] sm:$0xff] %vm279, %v845
      %879 = vst.msk [vmem:[%s865 + $0x99] sm:$0xff] %vm279, %v846
      %880 = vst.msk [vmem:[%s865 + $0xa9] sm:$0xff] %vm279, %v847
      %881 = vst.msk [vmem:[%s865 + $0xb1] sm:$0xff] %vm279, %v848
      %882 = vst.msk [vmem:[%s865 + $0xc1] sm:$0xff] %vm279, %v849
      %883 = vst.msk [vmem:[%s865 + $0xc9] sm:$0xff] %vm279, %v850
      %884 = vst.msk [vmem:[%s865 + $0xd9] sm:$0xff] %vm279, %v851
      %885 = vst.msk [vmem:[%s865 + $0xe1] sm:$0xff] %vm279, %v852
      %886 = vst.msk [vmem:[%s865 + $0xf1] sm:$0xff] %vm279, %v853
      %887 = vst.msk [vmem:[%s865 + $0xf9] sm:$0xff] %vm279, %v854
      %888 = vst.msk [vmem:[%s865 + $0x109] sm:$0xff] %vm279, %v855
      %889 = vst.msk [vmem:[%s865 + $0x111] sm:$0xff] %vm279, %v856
      %890 = vst.msk [vmem:[%s865 + $0x121] sm:$0xff] %vm279, %v857
      %891 = vst.msk [vmem:[%s865 + $0x129] sm:$0xff] %vm279, %v858
      %892 = vst.msk [vmem:[%s865 + $0x139] sm:$0xff] %vm279, %v859
      %893 = vst.msk [vmem:[%s865 + $0x141] sm:$0xff] %vm279, %v860
      %894 = vst.msk [vmem:[%s865 + $0x151] sm:$0xff] %vm279, %v861
      %895 = vst.msk [vmem:[%s865 + $0x159] sm:$0xff] %vm279, %v862
      %896 = vst.msk [vmem:[%s865 + $0x169] sm:$0xff] %vm279, %v863
      %897 = vst.msk [vmem:[%s865 + $0x171] sm:$0xff] %vm279, %v864
      %v898 = vld [vmem:[#allocation2] sm:$0xff]
      %v899 = vld [vmem:[#allocation2 + $0x8] sm:$0xff]
      %v900 = vld [vmem:[#allocation2 + $0x18] sm:$0xff]
      %v901 = vld [vmem:[#allocation2 + $0x20] sm:$0xff]
      %v902 = vld [vmem:[#allocation2 + $0x30] sm:$0xff]
      %v903 = vld [vmem:[#allocation2 + $0x38] sm:$0xff]
      %v904 = vld [vmem:[#allocation2 + $0x48] sm:$0xff]
      %v905 = vld [vmem:[#allocation2 + $0x50] sm:$0xff]
      %v906 = vld [vmem:[#allocation2 + $0x60] sm:$0xff]
      %v907 = vld [vmem:[#allocation2 + $0x68] sm:$0xff]
      %v908 = vld [vmem:[#allocation2 + $0x78] sm:$0xff]
      %v909 = vld [vmem:[#allocation2 + $0x80] sm:$0xff]
      %v910 = vld [vmem:[#allocation2 + $0x90] sm:$0xff]
      %v911 = vld [vmem:[#allocation2 + $0x98] sm:$0xff]
      %v912 = vld [vmem:[#allocation2 + $0xa8] sm:$0xff]
      %v913 = vld [vmem:[#allocation2 + $0xb0] sm:$0xff]
      %v914 = vld [vmem:[#allocation2 + $0xc0] sm:$0xff]
      %v915 = vld [vmem:[#allocation2 + $0xc8] sm:$0xff]
      %v916 = vld [vmem:[#allocation2 + $0xd8] sm:$0xff]
      %v917 = vld [vmem:[#allocation2 + $0xe0] sm:$0xff]
      %v918 = vld [vmem:[#allocation2 + $0xf0] sm:$0xff]
      %v919 = vld [vmem:[#allocation2 + $0xf8] sm:$0xff]
      %v920 = vld [vmem:[#allocation2 + $0x108] sm:$0xff]
      %v921 = vld [vmem:[#allocation2 + $0x110] sm:$0xff]
      %v922 = vld [vmem:[#allocation2 + $0x120] sm:$0xff]
      %v923 = vld [vmem:[#allocation2 + $0x128] sm:$0xff]
      %v924 = vld [vmem:[#allocation2 + $0x138] sm:$0xff]
      %v925 = vld [vmem:[#allocation2 + $0x140] sm:$0xff]
      %v926 = vld [vmem:[#allocation2 + $0x150] sm:$0xff]
      %v927 = vld [vmem:[#allocation2 + $0x158] sm:$0xff]
      %v928 = vld [vmem:[#allocation2 + $0x168] sm:$0xff]
      %v929 = vld [vmem:[#allocation2 + $0x170] sm:$0xff]
      %930 = vst.msk [vmem:[#allocation3] sm:$0xff] %vm279, %v898
      %931 = vst.msk [vmem:[#allocation3 + $0x8] sm:$0xff] %vm279, %v899
      %932 = vst.msk [vmem:[#allocation3 + $0x10] sm:$0xff] %vm279, %v900
      %933 = vst.msk [vmem:[#allocation3 + $0x18] sm:$0xff] %vm279, %v901
      %934 = vst.msk [vmem:[#allocation3 + $0x20] sm:$0xff] %vm279, %v902
      %935 = vst.msk [vmem:[#allocation3 + $0x28] sm:$0xff] %vm279, %v903
      %936 = vst.msk [vmem:[#allocation3 + $0x30] sm:$0xff] %vm279, %v904
      %937 = vst.msk [vmem:[#allocation3 + $0x38] sm:$0xff] %vm279, %v905
      %938 = vst.msk [vmem:[#allocation3 + $0x40] sm:$0xff] %vm279, %v906
      %939 = vst.msk [vmem:[#allocation3 + $0x48] sm:$0xff] %vm279, %v907
      %940 = vst.msk [vmem:[#allocation3 + $0x50] sm:$0xff] %vm279, %v908
      %941 = vst.msk [vmem:[#allocation3 + $0x58] sm:$0xff] %vm279, %v909
      %942 = vst.msk [vmem:[#allocation3 + $0x60] sm:$0xff] %vm279, %v910
      %943 = vst.msk [vmem:[#allocation3 + $0x68] sm:$0xff] %vm279, %v911
      %944 = vst.msk [vmem:[#allocation3 + $0x70] sm:$0xff] %vm279, %v912
      %945 = vst.msk [vmem:[#allocation3 + $0x78] sm:$0xff] %vm279, %v913
      %946 = vst.msk [vmem:[#allocation3 + $0x80] sm:$0xff] %vm279, %v914
      %947 = vst.msk [vmem:[#allocation3 + $0x88] sm:$0xff] %vm279, %v915
      %948 = vst.msk [vmem:[#allocation3 + $0x90] sm:$0xff] %vm279, %v916
      %949 = vst.msk [vmem:[#allocation3 + $0x98] sm:$0xff] %vm279, %v917
      %950 = vst.msk [vmem:[#allocation3 + $0xa0] sm:$0xff] %vm279, %v918
      %951 = vst.msk [vmem:[#allocation3 + $0xa8] sm:$0xff] %vm279, %v919
      %952 = vst.msk [vmem:[#allocation3 + $0xb0] sm:$0xff] %vm279, %v920
      %953 = vst.msk [vmem:[#allocation3 + $0xb8] sm:$0xff] %vm279, %v921
      %954 = vst.msk [vmem:[#allocation3 + $0xc0] sm:$0xff] %vm279, %v922
      %955 = vst.msk [vmem:[#allocation3 + $0xc8] sm:$0xff] %vm279, %v923
      %956 = vst.msk [vmem:[#allocation3 + $0xd0] sm:$0xff] %vm279, %v924
      %957 = vst.msk [vmem:[#allocation3 + $0xd8] sm:$0xff] %vm279, %v925
      %958 = vst.msk [vmem:[#allocation3 + $0xe0] sm:$0xff] %vm279, %v926
      %959 = vst.msk [vmem:[#allocation3 + $0xe8] sm:$0xff] %vm279, %v927
      %960 = vst.msk [vmem:[#allocation3 + $0xf0] sm:$0xff] %vm279, %v928
      %961 = vst.msk [vmem:[#allocation3 + $0xf8] sm:$0xff] %vm279, %v929
      %v962 = vld [vmem:[#allocation2 + $0x1] sm:$0xff]
      %v963 = vld [vmem:[#allocation2 + $0x9] sm:$0xff]
      %v964 = vld [vmem:[#allocation2 + $0x19] sm:$0xff]
      %v965 = vld [vmem:[#allocation2 + $0x21] sm:$0xff]
      %v966 = vld [vmem:[#allocation2 + $0x31] sm:$0xff]
      %v967 = vld [vmem:[#allocation2 + $0x39] sm:$0xff]
      %v968 = vld [vmem:[#allocation2 + $0x49] sm:$0xff]
      %v969 = vld [vmem:[#allocation2 + $0x51] sm:$0xff]
      %v970 = vld [vmem:[#allocation2 + $0x61] sm:$0xff]
      %v971 = vld [vmem:[#allocation2 + $0x69] sm:$0xff]
      %v972 = vld [vmem:[#allocation2 + $0x79] sm:$0xff]
      %v973 = vld [vmem:[#allocation2 + $0x81] sm:$0xff]
      %v974 = vld [vmem:[#allocation2 + $0x91] sm:$0xff]
      %v975 = vld [vmem:[#allocation2 + $0x99] sm:$0xff]
      %v976 = vld [vmem:[#allocation2 + $0xa9] sm:$0xff]
      %v977 = vld [vmem:[#allocation2 + $0xb1] sm:$0xff]
      %v978 = vld [vmem:[#allocation2 + $0xc1] sm:$0xff]
      %v979 = vld [vmem:[#allocation2 + $0xc9] sm:$0xff]
      %v980 = vld [vmem:[#allocation2 + $0xd9] sm:$0xff]
      %v981 = vld [vmem:[#allocation2 + $0xe1] sm:$0xff]
      %v982 = vld [vmem:[#allocation2 + $0xf1] sm:$0xff]
      %v983 = vld [vmem:[#allocation2 + $0xf9] sm:$0xff]
      %v984 = vld [vmem:[#allocation2 + $0x109] sm:$0xff]
      %v985 = vld [vmem:[#allocation2 + $0x111] sm:$0xff]
      %v986 = vld [vmem:[#allocation2 + $0x121] sm:$0xff]
      %v987 = vld [vmem:[#allocation2 + $0x129] sm:$0xff]
      %v988 = vld [vmem:[#allocation2 + $0x139] sm:$0xff]
      %v989 = vld [vmem:[#allocation2 + $0x141] sm:$0xff]
      %v990 = vld [vmem:[#allocation2 + $0x151] sm:$0xff]
      %v991 = vld [vmem:[#allocation2 + $0x159] sm:$0xff]
      %v992 = vld [vmem:[#allocation2 + $0x169] sm:$0xff]
      %v993 = vld [vmem:[#allocation2 + $0x171] sm:$0xff]
      %1026 = vrot.lane.b32.xlu0 %v962, 8
      %v1027 = vpop.permute.xlu0 %1026
      %1028 = vrot.lane.b32.xlu0 %v963, 8
      %v1029 = vpop.permute.xlu0 %1028
      %1030 = vrot.lane.b32.xlu0 %v964, 8
      %v1031 = vpop.permute.xlu0 %1030
      %1032 = vrot.lane.b32.xlu0 %v965, 8
      %v1033 = vpop.permute.xlu0 %1032
      %1034 = vrot.lane.b32.xlu0 %v966, 8
      %v1035 = vpop.permute.xlu0 %1034
      %1036 = vrot.lane.b32.xlu0 %v967, 8
      %v1037 = vpop.permute.xlu0 %1036
      %1038 = vrot.lane.b32.xlu0 %v968, 8
      %v1039 = vpop.permute.xlu0 %1038
      %1040 = vrot.lane.b32.xlu0 %v969, 8
      %v1041 = vpop.permute.xlu0 %1040
      %1042 = vrot.lane.b32.xlu0 %v970, 8
      %v1043 = vpop.permute.xlu0 %1042
      %1044 = vrot.lane.b32.xlu0 %v971, 8
      %v1045 = vpop.permute.xlu0 %1044
      %1046 = vrot.lane.b32.xlu0 %v972, 8
      %v1047 = vpop.permute.xlu0 %1046
      %1048 = vrot.lane.b32.xlu0 %v973, 8
      %v1049 = vpop.permute.xlu0 %1048
      %1050 = vrot.lane.b32.xlu0 %v974, 8
      %v1051 = vpop.permute.xlu0 %1050
      %1052 = vrot.lane.b32.xlu0 %v975, 8
      %v1053 = vpop.permute.xlu0 %1052
      %1054 = vrot.lane.b32.xlu0 %v976, 8
      %v1055 = vpop.permute.xlu0 %1054
      %1056 = vrot.lane.b32.xlu0 %v977, 8
      %v1057 = vpop.permute.xlu0 %1056
      %1058 = vrot.lane.b32.xlu0 %v978, 8
      %v1059 = vpop.permute.xlu0 %1058
      %1060 = vrot.lane.b32.xlu0 %v979, 8
      %v1061 = vpop.permute.xlu0 %1060
      %1062 = vrot.lane.b32.xlu0 %v980, 8
      %v1063 = vpop.permute.xlu0 %1062
      %1064 = vrot.lane.b32.xlu0 %v981, 8
      %v1065 = vpop.permute.xlu0 %1064
      %1066 = vrot.lane.b32.xlu0 %v982, 8
      %v1067 = vpop.permute.xlu0 %1066
      %1068 = vrot.lane.b32.xlu0 %v983, 8
      %v1069 = vpop.permute.xlu0 %1068
      %1070 = vrot.lane.b32.xlu0 %v984, 8
      %v1071 = vpop.permute.xlu0 %1070
      %1072 = vrot.lane.b32.xlu0 %v985, 8
      %v1073 = vpop.permute.xlu0 %1072
      %1074 = vrot.lane.b32.xlu0 %v986, 8
      %v1075 = vpop.permute.xlu0 %1074
      %1076 = vrot.lane.b32.xlu0 %v987, 8
      %v1077 = vpop.permute.xlu0 %1076
      %1078 = vrot.lane.b32.xlu0 %v988, 8
      %v1079 = vpop.permute.xlu0 %1078
      %1080 = vrot.lane.b32.xlu0 %v989, 8
      %v1081 = vpop.permute.xlu0 %1080
      %1082 = vrot.lane.b32.xlu0 %v990, 8
      %v1083 = vpop.permute.xlu0 %1082
      %1084 = vrot.lane.b32.xlu0 %v991, 8
      %v1085 = vpop.permute.xlu0 %1084
      %1086 = vrot.lane.b32.xlu0 %v992, 8
      %v1087 = vpop.permute.xlu0 %1086
      %1088 = vrot.lane.b32.xlu0 %v993, 8
      %v1089 = vpop.permute.xlu0 %1088
      %vm1122 = vcmask 130112
      %1123 = vst.msk [vmem:[#allocation3] sm:$0xff] %vm1122, %v1027
      %1124 = vst.msk [vmem:[#allocation3 + $0x8] sm:$0xff] %vm1122, %v1029
      %1125 = vst.msk [vmem:[#allocation3 + $0x10] sm:$0xff] %vm1122, %v1031
      %1126 = vst.msk [vmem:[#allocation3 + $0x18] sm:$0xff] %vm1122, %v1033
      %1127 = vst.msk [vmem:[#allocation3 + $0x20] sm:$0xff] %vm1122, %v1035
      %1128 = vst.msk [vmem:[#allocation3 + $0x28] sm:$0xff] %vm1122, %v1037
      %1129 = vst.msk [vmem:[#allocation3 + $0x30] sm:$0xff] %vm1122, %v1039
      %1130 = vst.msk [vmem:[#allocation3 + $0x38] sm:$0xff] %vm1122, %v1041
      %1131 = vst.msk [vmem:[#allocation3 + $0x40] sm:$0xff] %vm1122, %v1043
      %1132 = vst.msk [vmem:[#allocation3 + $0x48] sm:$0xff] %vm1122, %v1045
      %1133 = vst.msk [vmem:[#allocation3 + $0x50] sm:$0xff] %vm1122, %v1047
      %1134 = vst.msk [vmem:[#allocation3 + $0x58] sm:$0xff] %vm1122, %v1049
      %1135 = vst.msk [vmem:[#allocation3 + $0x60] sm:$0xff] %vm1122, %v1051
      %1136 = vst.msk [vmem:[#allocation3 + $0x68] sm:$0xff] %vm1122, %v1053
      %1137 = vst.msk [vmem:[#allocation3 + $0x70] sm:$0xff] %vm1122, %v1055
      %1138 = vst.msk [vmem:[#allocation3 + $0x78] sm:$0xff] %vm1122, %v1057
      %1139 = vst.msk [vmem:[#allocation3 + $0x80] sm:$0xff] %vm1122, %v1059
      %1140 = vst.msk [vmem:[#allocation3 + $0x88] sm:$0xff] %vm1122, %v1061
      %1141 = vst.msk [vmem:[#allocation3 + $0x90] sm:$0xff] %vm1122, %v1063
      %1142 = vst.msk [vmem:[#allocation3 + $0x98] sm:$0xff] %vm1122, %v1065
      %1143 = vst.msk [vmem:[#allocation3 + $0xa0] sm:$0xff] %vm1122, %v1067
      %1144 = vst.msk [vmem:[#allocation3 + $0xa8] sm:$0xff] %vm1122, %v1069
      %1145 = vst.msk [vmem:[#allocation3 + $0xb0] sm:$0xff] %vm1122, %v1071
      %1146 = vst.msk [vmem:[#allocation3 + $0xb8] sm:$0xff] %vm1122, %v1073
      %1147 = vst.msk [vmem:[#allocation3 + $0xc0] sm:$0xff] %vm1122, %v1075
      %1148 = vst.msk [vmem:[#allocation3 + $0xc8] sm:$0xff] %vm1122, %v1077
      %1149 = vst.msk [vmem:[#allocation3 + $0xd0] sm:$0xff] %vm1122, %v1079
      %1150 = vst.msk [vmem:[#allocation3 + $0xd8] sm:$0xff] %vm1122, %v1081
      %1151 = vst.msk [vmem:[#allocation3 + $0xe0] sm:$0xff] %vm1122, %v1083
      %1152 = vst.msk [vmem:[#allocation3 + $0xe8] sm:$0xff] %vm1122, %v1085
      %1153 = vst.msk [vmem:[#allocation3 + $0xf0] sm:$0xff] %vm1122, %v1087
      %1154 = vst.msk [vmem:[#allocation3 + $0xf8] sm:$0xff] %vm1122, %v1089
      %v1155 = vld [vmem:[#allocation2 + $0x2] sm:$0xff]
      %v1156 = vld [vmem:[#allocation2 + $0xa] sm:$0xff]
      %v1157 = vld [vmem:[#allocation2 + $0x1a] sm:$0xff]
      %v1158 = vld [vmem:[#allocation2 + $0x22] sm:$0xff]
      %v1159 = vld [vmem:[#allocation2 + $0x32] sm:$0xff]
      %v1160 = vld [vmem:[#allocation2 + $0x3a] sm:$0xff]
      %v1161 = vld [vmem:[#allocation2 + $0x4a] sm:$0xff]
      %v1162 = vld [vmem:[#allocation2 + $0x52] sm:$0xff]
      %v1163 = vld [vmem:[#allocation2 + $0x62] sm:$0xff]
      %v1164 = vld [vmem:[#allocation2 + $0x6a] sm:$0xff]
      %v1165 = vld [vmem:[#allocation2 + $0x7a] sm:$0xff]
      %v1166 = vld [vmem:[#allocation2 + $0x82] sm:$0xff]
      %v1167 = vld [vmem:[#allocation2 + $0x92] sm:$0xff]
      %v1168 = vld [vmem:[#allocation2 + $0x9a] sm:$0xff]
      %v1169 = vld [vmem:[#allocation2 + $0xaa] sm:$0xff]
      %v1170 = vld [vmem:[#allocation2 + $0xb2] sm:$0xff]
      %v1171 = vld [vmem:[#allocation2 + $0xc2] sm:$0xff]
      %v1172 = vld [vmem:[#allocation2 + $0xca] sm:$0xff]
      %v1173 = vld [vmem:[#allocation2 + $0xda] sm:$0xff]
      %v1174 = vld [vmem:[#allocation2 + $0xe2] sm:$0xff]
      %v1175 = vld [vmem:[#allocation2 + $0xf2] sm:$0xff]
      %v1176 = vld [vmem:[#allocation2 + $0xfa] sm:$0xff]
      %v1177 = vld [vmem:[#allocation2 + $0x10a] sm:$0xff]
      %v1178 = vld [vmem:[#allocation2 + $0x112] sm:$0xff]
      %v1179 = vld [vmem:[#allocation2 + $0x122] sm:$0xff]
      %v1180 = vld [vmem:[#allocation2 + $0x12a] sm:$0xff]
      %v1181 = vld [vmem:[#allocation2 + $0x13a] sm:$0xff]
      %v1182 = vld [vmem:[#allocation2 + $0x142] sm:$0xff]
      %v1183 = vld [vmem:[#allocation2 + $0x152] sm:$0xff]
      %v1184 = vld [vmem:[#allocation2 + $0x15a] sm:$0xff]
      %v1185 = vld [vmem:[#allocation2 + $0x16a] sm:$0xff]
      %v1186 = vld [vmem:[#allocation2 + $0x172] sm:$0xff]
      %1219 = vrot.lane.b32.xlu0 %v1155, 16
      %v1220 = vpop.permute.xlu0 %1219
      %1221 = vrot.lane.b32.xlu0 %v1156, 16
      %v1222 = vpop.permute.xlu0 %1221
      %1223 = vrot.lane.b32.xlu0 %v1157, 16
      %v1224 = vpop.permute.xlu0 %1223
      %1225 = vrot.lane.b32.xlu0 %v1158, 16
      %v1226 = vpop.permute.xlu0 %1225
      %1227 = vrot.lane.b32.xlu0 %v1159, 16
      %v1228 = vpop.permute.xlu0 %1227
      %1229 = vrot.lane.b32.xlu0 %v1160, 16
      %v1230 = vpop.permute.xlu0 %1229
      %1231 = vrot.lane.b32.xlu0 %v1161, 16
      %v1232 = vpop.permute.xlu0 %1231
      %1233 = vrot.lane.b32.xlu0 %v1162, 16
      %v1234 = vpop.permute.xlu0 %1233
      %1235 = vrot.lane.b32.xlu0 %v1163, 16
      %v1236 = vpop.permute.xlu0 %1235
      %1237 = vrot.lane.b32.xlu0 %v1164, 16
      %v1238 = vpop.permute.xlu0 %1237
      %1239 = vrot.lane.b32.xlu0 %v1165, 16
      %v1240 = vpop.permute.xlu0 %1239
      %1241 = vrot.lane.b32.xlu0 %v1166, 16
      %v1242 = vpop.permute.xlu0 %1241
      %1243 = vrot.lane.b32.xlu0 %v1167, 16
      %v1244 = vpop.permute.xlu0 %1243
      %1245 = vrot.lane.b32.xlu0 %v1168, 16
      %v1246 = vpop.permute.xlu0 %1245
      %1247 = vrot.lane.b32.xlu0 %v1169, 16
      %v1248 = vpop.permute.xlu0 %1247
      %1249 = vrot.lane.b32.xlu0 %v1170, 16
      %v1250 = vpop.permute.xlu0 %1249
      %1251 = vrot.lane.b32.xlu0 %v1171, 16
      %v1252 = vpop.permute.xlu0 %1251
      %1253 = vrot.lane.b32.xlu0 %v1172, 16
      %v1254 = vpop.permute.xlu0 %1253
      %1255 = vrot.lane.b32.xlu0 %v1173, 16
      %v1256 = vpop.permute.xlu0 %1255
      %1257 = vrot.lane.b32.xlu0 %v1174, 16
      %v1258 = vpop.permute.xlu0 %1257
      %1259 = vrot.lane.b32.xlu0 %v1175, 16
      %v1260 = vpop.permute.xlu0 %1259
      %1261 = vrot.lane.b32.xlu0 %v1176, 16
      %v1262 = vpop.permute.xlu0 %1261
      %1263 = vrot.lane.b32.xlu0 %v1177, 16
      %v1264 = vpop.permute.xlu0 %1263
      %1265 = vrot.lane.b32.xlu0 %v1178, 16
      %v1266 = vpop.permute.xlu0 %1265
      %1267 = vrot.lane.b32.xlu0 %v1179, 16
      %v1268 = vpop.permute.xlu0 %1267
      %1269 = vrot.lane.b32.xlu0 %v1180, 16
      %v1270 = vpop.permute.xlu0 %1269
      %1271 = vrot.lane.b32.xlu0 %v1181, 16
      %v1272 = vpop.permute.xlu0 %1271
      %1273 = vrot.lane.b32.xlu0 %v1182, 16
      %v1274 = vpop.permute.xlu0 %1273
      %1275 = vrot.lane.b32.xlu0 %v1183, 16
      %v1276 = vpop.permute.xlu0 %1275
      %1277 = vrot.lane.b32.xlu0 %v1184, 16
      %v1278 = vpop.permute.xlu0 %1277
      %1279 = vrot.lane.b32.xlu0 %v1185, 16
      %v1280 = vpop.permute.xlu0 %1279
      %1281 = vrot.lane.b32.xlu0 %v1186, 16
      %v1282 = vpop.permute.xlu0 %1281
      %vm1315 = vcmask 195712
      %1316 = vst.msk [vmem:[#allocation3] sm:$0xff] %vm1315, %v1220
      %1317 = vst.msk [vmem:[#allocation3 + $0x8] sm:$0xff] %vm1315, %v1222
      %1318 = vst.msk [vmem:[#allocation3 + $0x10] sm:$0xff] %vm1315, %v1224
      %1319 = vst.msk [vmem:[#allocation3 + $0x18] sm:$0xff] %vm1315, %v1226
      %1320 = vst.msk [vmem:[#allocation3 + $0x20] sm:$0xff] %vm1315, %v1228
      %1321 = vst.msk [vmem:[#allocation3 + $0x28] sm:$0xff] %vm1315, %v1230
      %1322 = vst.msk [vmem:[#allocation3 + $0x30] sm:$0xff] %vm1315, %v1232
      %1323 = vst.msk [vmem:[#allocation3 + $0x38] sm:$0xff] %vm1315, %v1234
      %1324 = vst.msk [vmem:[#allocation3 + $0x40] sm:$0xff] %vm1315, %v1236
      %1325 = vst.msk [vmem:[#allocation3 + $0x48] sm:$0xff] %vm1315, %v1238
      %1326 = vst.msk [vmem:[#allocation3 + $0x50] sm:$0xff] %vm1315, %v1240
      %1327 = vst.msk [vmem:[#allocation3 + $0x58] sm:$0xff] %vm1315, %v1242
      %1328 = vst.msk [vmem:[#allocation3 + $0x60] sm:$0xff] %vm1315, %v1244
      %1329 = vst.msk [vmem:[#allocation3 + $0x68] sm:$0xff] %vm1315, %v1246
      %1330 = vst.msk [vmem:[#allocation3 + $0x70] sm:$0xff] %vm1315, %v1248
      %1331 = vst.msk [vmem:[#allocation3 + $0x78] sm:$0xff] %vm1315, %v1250
      %1332 = vst.msk [vmem:[#allocation3 + $0x80] sm:$0xff] %vm1315, %v1252
      %1333 = vst.msk [vmem:[#allocation3 + $0x88] sm:$0xff] %vm1315, %v1254
      %1334 = vst.msk [vmem:[#allocation3 + $0x90] sm:$0xff] %vm1315, %v1256
      %1335 = vst.msk [vmem:[#allocation3 + $0x98] sm:$0xff] %vm1315, %v1258
      %1336 = vst.msk [vmem:[#allocation3 + $0xa0] sm:$0xff] %vm1315, %v1260
      %1337 = vst.msk [vmem:[#allocation3 + $0xa8] sm:$0xff] %vm1315, %v1262
      %1338 = vst.msk [vmem:[#allocation3 + $0xb0] sm:$0xff] %vm1315, %v1264
      %1339 = vst.msk [vmem:[#allocation3 + $0xb8] sm:$0xff] %vm1315, %v1266
      %1340 = vst.msk [vmem:[#allocation3 + $0xc0] sm:$0xff] %vm1315, %v1268
      %1341 = vst.msk [vmem:[#allocation3 + $0xc8] sm:$0xff] %vm1315, %v1270
      %1342 = vst.msk [vmem:[#allocation3 + $0xd0] sm:$0xff] %vm1315, %v1272
      %1343 = vst.msk [vmem:[#allocation3 + $0xd8] sm:$0xff] %vm1315, %v1274
      %1344 = vst.msk [vmem:[#allocation3 + $0xe0] sm:$0xff] %vm1315, %v1276
      %1345 = vst.msk [vmem:[#allocation3 + $0xe8] sm:$0xff] %vm1315, %v1278
      %1346 = vst.msk [vmem:[#allocation3 + $0xf0] sm:$0xff] %vm1315, %v1280
      %1347 = vst.msk [vmem:[#allocation3 + $0xf8] sm:$0xff] %vm1315, %v1282
      %v1348 = vld [vmem:[%s865] sm:$0xff]
      %v1349 = vld [vmem:[%s865 + $0x8] sm:$0xff]
      %v1350 = vld [vmem:[%s865 + $0x18] sm:$0xff]
      %v1351 = vld [vmem:[%s865 + $0x20] sm:$0xff]
      %v1352 = vld [vmem:[%s865 + $0x30] sm:$0xff]
      %v1353 = vld [vmem:[%s865 + $0x38] sm:$0xff]
      %v1354 = vld [vmem:[%s865 + $0x48] sm:$0xff]
      %v1355 = vld [vmem:[%s865 + $0x50] sm:$0xff]
      %v1356 = vld [vmem:[%s865 + $0x60] sm:$0xff]
      %v1357 = vld [vmem:[%s865 + $0x68] sm:$0xff]
      %v1358 = vld [vmem:[%s865 + $0x78] sm:$0xff]
      %v1359 = vld [vmem:[%s865 + $0x80] sm:$0xff]
      %v1360 = vld [vmem:[%s865 + $0x90] sm:$0xff]
      %v1361 = vld [vmem:[%s865 + $0x98] sm:$0xff]
      %v1362 = vld [vmem:[%s865 + $0xa8] sm:$0xff]
      %v1363 = vld [vmem:[%s865 + $0xb0] sm:$0xff]
      %v1364 = vld [vmem:[%s865 + $0xc0] sm:$0xff]
      %v1365 = vld [vmem:[%s865 + $0xc8] sm:$0xff]
      %v1366 = vld [vmem:[%s865 + $0xd8] sm:$0xff]
      %v1367 = vld [vmem:[%s865 + $0xe0] sm:$0xff]
      %v1368 = vld [vmem:[%s865 + $0xf0] sm:$0xff]
      %v1369 = vld [vmem:[%s865 + $0xf8] sm:$0xff]
      %v1370 = vld [vmem:[%s865 + $0x108] sm:$0xff]
      %v1371 = vld [vmem:[%s865 + $0x110] sm:$0xff]
      %v1372 = vld [vmem:[%s865 + $0x120] sm:$0xff]
      %v1373 = vld [vmem:[%s865 + $0x128] sm:$0xff]
      %v1374 = vld [vmem:[%s865 + $0x138] sm:$0xff]
      %v1375 = vld [vmem:[%s865 + $0x140] sm:$0xff]
      %v1376 = vld [vmem:[%s865 + $0x150] sm:$0xff]
      %v1377 = vld [vmem:[%s865 + $0x158] sm:$0xff]
      %v1378 = vld [vmem:[%s865 + $0x168] sm:$0xff]
      %v1379 = vld [vmem:[%s865 + $0x170] sm:$0xff]
      %1412 = vrot.lane.b32.xlu0 %v1348, 24
      %v1413 = vpop.permute.xlu0 %1412
      %1414 = vrot.lane.b32.xlu0 %v1349, 24
      %v1415 = vpop.permute.xlu0 %1414
      %1416 = vrot.lane.b32.xlu0 %v1350, 24
      %v1417 = vpop.permute.xlu0 %1416
      %1418 = vrot.lane.b32.xlu0 %v1351, 24
      %v1419 = vpop.permute.xlu0 %1418
      %1420 = vrot.lane.b32.xlu0 %v1352, 24
      %v1421 = vpop.permute.xlu0 %1420
      %1422 = vrot.lane.b32.xlu0 %v1353, 24
      %v1423 = vpop.permute.xlu0 %1422
      %1424 = vrot.lane.b32.xlu0 %v1354, 24
      %v1425 = vpop.permute.xlu0 %1424
      %1426 = vrot.lane.b32.xlu0 %v1355, 24
      %v1427 = vpop.permute.xlu0 %1426
      %1428 = vrot.lane.b32.xlu0 %v1356, 24
      %v1429 = vpop.permute.xlu0 %1428
      %1430 = vrot.lane.b32.xlu0 %v1357, 24
      %v1431 = vpop.permute.xlu0 %1430
      %1432 = vrot.lane.b32.xlu0 %v1358, 24
      %v1433 = vpop.permute.xlu0 %1432
      %1434 = vrot.lane.b32.xlu0 %v1359, 24
      %v1435 = vpop.permute.xlu0 %1434
      %1436 = vrot.lane.b32.xlu0 %v1360, 24
      %v1437 = vpop.permute.xlu0 %1436
      %1438 = vrot.lane.b32.xlu0 %v1361, 24
      %v1439 = vpop.permute.xlu0 %1438
      %1440 = vrot.lane.b32.xlu0 %v1362, 24
      %v1441 = vpop.permute.xlu0 %1440
      %1442 = vrot.lane.b32.xlu0 %v1363, 24
      %v1443 = vpop.permute.xlu0 %1442
      %1444 = vrot.lane.b32.xlu0 %v1364, 24
      %v1445 = vpop.permute.xlu0 %1444
      %1446 = vrot.lane.b32.xlu0 %v1365, 24
      %v1447 = vpop.permute.xlu0 %1446
      %1448 = vrot.lane.b32.xlu0 %v1366, 24
      %v1449 = vpop.permute.xlu0 %1448
      %1450 = vrot.lane.b32.xlu0 %v1367, 24
      %v1451 = vpop.permute.xlu0 %1450
      %1452 = vrot.lane.b32.xlu0 %v1368, 24
      %v1453 = vpop.permute.xlu0 %1452
      %1454 = vrot.lane.b32.xlu0 %v1369, 24
      %v1455 = vpop.permute.xlu0 %1454
      %1456 = vrot.lane.b32.xlu0 %v1370, 24
      %v1457 = vpop.permute.xlu0 %1456
      %1458 = vrot.lane.b32.xlu0 %v1371, 24
      %v1459 = vpop.permute.xlu0 %1458
      %1460 = vrot.lane.b32.xlu0 %v1372, 24
      %v1461 = vpop.permute.xlu0 %1460
      %1462 = vrot.lane.b32.xlu0 %v1373, 24
      %v1463 = vpop.permute.xlu0 %1462
      %1464 = vrot.lane.b32.xlu0 %v1374, 24
      %v1465 = vpop.permute.xlu0 %1464
      %1466 = vrot.lane.b32.xlu0 %v1375, 24
      %v1467 = vpop.permute.xlu0 %1466
      %1468 = vrot.lane.b32.xlu0 %v1376, 24
      %v1469 = vpop.permute.xlu0 %1468
      %1470 = vrot.lane.b32.xlu0 %v1377, 24
      %v1471 = vpop.permute.xlu0 %1470
      %1472 = vrot.lane.b32.xlu0 %v1378, 24
      %v1473 = vpop.permute.xlu0 %1472
      %1474 = vrot.lane.b32.xlu0 %v1379, 24
      %v1475 = vpop.permute.xlu0 %1474
      %vm1508 = vcmask 261312
      %1509 = vst.msk [vmem:[#allocation3] sm:$0xff] %vm1508, %v1413
      %1510 = vst.msk [vmem:[#allocation3 + $0x8] sm:$0xff] %vm1508, %v1415
      %1511 = vst.msk [vmem:[#allocation3 + $0x10] sm:$0xff] %vm1508, %v1417
      %1512 = vst.msk [vmem:[#allocation3 + $0x18] sm:$0xff] %vm1508, %v1419
      %1513 = vst.msk [vmem:[#allocation3 + $0x20] sm:$0xff] %vm1508, %v1421
      %1514 = vst.msk [vmem:[#allocation3 + $0x28] sm:$0xff] %vm1508, %v1423
      %1515 = vst.msk [vmem:[#allocation3 + $0x30] sm:$0xff] %vm1508, %v1425
      %1516 = vst.msk [vmem:[#allocation3 + $0x38] sm:$0xff] %vm1508, %v1427
      %1517 = vst.msk [vmem:[#allocation3 + $0x40] sm:$0xff] %vm1508, %v1429
      %1518 = vst.msk [vmem:[#allocation3 + $0x48] sm:$0xff] %vm1508, %v1431
      %1519 = vst.msk [vmem:[#allocation3 + $0x50] sm:$0xff] %vm1508, %v1433
      %1520 = vst.msk [vmem:[#allocation3 + $0x58] sm:$0xff] %vm1508, %v1435
      %1521 = vst.msk [vmem:[#allocation3 + $0x60] sm:$0xff] %vm1508, %v1437
      %1522 = vst.msk [vmem:[#allocation3 + $0x68] sm:$0xff] %vm1508, %v1439
      %1523 = vst.msk [vmem:[#allocation3 + $0x70] sm:$0xff] %vm1508, %v1441
      %1524 = vst.msk [vmem:[#allocation3 + $0x78] sm:$0xff] %vm1508, %v1443
      %1525 = vst.msk [vmem:[#allocation3 + $0x80] sm:$0xff] %vm1508, %v1445
      %1526 = vst.msk [vmem:[#allocation3 + $0x88] sm:$0xff] %vm1508, %v1447
      %1527 = vst.msk [vmem:[#allocation3 + $0x90] sm:$0xff] %vm1508, %v1449
      %1528 = vst.msk [vmem:[#allocation3 + $0x98] sm:$0xff] %vm1508, %v1451
      %1529 = vst.msk [vmem:[#allocation3 + $0xa0] sm:$0xff] %vm1508, %v1453
      %1530 = vst.msk [vmem:[#allocation3 + $0xa8] sm:$0xff] %vm1508, %v1455
      %1531 = vst.msk [vmem:[#allocation3 + $0xb0] sm:$0xff] %vm1508, %v1457
      %1532 = vst.msk [vmem:[#allocation3 + $0xb8] sm:$0xff] %vm1508, %v1459
      %1533 = vst.msk [vmem:[#allocation3 + $0xc0] sm:$0xff] %vm1508, %v1461
      %1534 = vst.msk [vmem:[#allocation3 + $0xc8] sm:$0xff] %vm1508, %v1463
      %1535 = vst.msk [vmem:[#allocation3 + $0xd0] sm:$0xff] %vm1508, %v1465
      %1536 = vst.msk [vmem:[#allocation3 + $0xd8] sm:$0xff] %vm1508, %v1467
      %1537 = vst.msk [vmem:[#allocation3 + $0xe0] sm:$0xff] %vm1508, %v1469
      %1538 = vst.msk [vmem:[#allocation3 + $0xe8] sm:$0xff] %vm1508, %v1471
      %1539 = vst.msk [vmem:[#allocation3 + $0xf0] sm:$0xff] %vm1508, %v1473
      %1540 = vst.msk [vmem:[#allocation3 + $0xf8] sm:$0xff] %vm1508, %v1475
      %v1541 = vld [vmem:[%s865 + $0x1] sm:$0xff]
      %v1542 = vld [vmem:[%s865 + $0x9] sm:$0xff]
      %v1543 = vld [vmem:[%s865 + $0x19] sm:$0xff]
      %v1544 = vld [vmem:[%s865 + $0x21] sm:$0xff]
      %v1545 = vld [vmem:[%s865 + $0x31] sm:$0xff]
      %v1546 = vld [vmem:[%s865 + $0x39] sm:$0xff]
      %v1547 = vld [vmem:[%s865 + $0x49] sm:$0xff]
      %v1548 = vld [vmem:[%s865 + $0x51] sm:$0xff]
      %v1549 = vld [vmem:[%s865 + $0x61] sm:$0xff]
      %v1550 = vld [vmem:[%s865 + $0x69] sm:$0xff]
      %v1551 = vld [vmem:[%s865 + $0x79] sm:$0xff]
      %v1552 = vld [vmem:[%s865 + $0x81] sm:$0xff]
      %v1553 = vld [vmem:[%s865 + $0x91] sm:$0xff]
      %v1554 = vld [vmem:[%s865 + $0x99] sm:$0xff]
      %v1555 = vld [vmem:[%s865 + $0xa9] sm:$0xff]
      %v1556 = vld [vmem:[%s865 + $0xb1] sm:$0xff]
      %v1557 = vld [vmem:[%s865 + $0xc1] sm:$0xff]
      %v1558 = vld [vmem:[%s865 + $0xc9] sm:$0xff]
      %v1559 = vld [vmem:[%s865 + $0xd9] sm:$0xff]
      %v1560 = vld [vmem:[%s865 + $0xe1] sm:$0xff]
      %v1561 = vld [vmem:[%s865 + $0xf1] sm:$0xff]
      %v1562 = vld [vmem:[%s865 + $0xf9] sm:$0xff]
      %v1563 = vld [vmem:[%s865 + $0x109] sm:$0xff]
      %v1564 = vld [vmem:[%s865 + $0x111] sm:$0xff]
      %v1565 = vld [vmem:[%s865 + $0x121] sm:$0xff]
      %v1566 = vld [vmem:[%s865 + $0x129] sm:$0xff]
      %v1567 = vld [vmem:[%s865 + $0x139] sm:$0xff]
      %v1568 = vld [vmem:[%s865 + $0x141] sm:$0xff]
      %v1569 = vld [vmem:[%s865 + $0x151] sm:$0xff]
      %v1570 = vld [vmem:[%s865 + $0x159] sm:$0xff]
      %v1571 = vld [vmem:[%s865 + $0x169] sm:$0xff]
      %v1572 = vld [vmem:[%s865 + $0x171] sm:$0xff]
      %1605 = vrot.lane.b32.xlu0 %v1541, 32
      %v1606 = vpop.permute.xlu0 %1605
      %1607 = vrot.lane.b32.xlu0 %v1542, 32
      %v1608 = vpop.permute.xlu0 %1607
      %1609 = vrot.lane.b32.xlu0 %v1543, 32
      %v1610 = vpop.permute.xlu0 %1609
      %1611 = vrot.lane.b32.xlu0 %v1544, 32
      %v1612 = vpop.permute.xlu0 %1611
      %1613 = vrot.lane.b32.xlu0 %v1545, 32
      %v1614 = vpop.permute.xlu0 %1613
      %1615 = vrot.lane.b32.xlu0 %v1546, 32
      %v1616 = vpop.permute.xlu0 %1615
      %1617 = vrot.lane.b32.xlu0 %v1547, 32
      %v1618 = vpop.permute.xlu0 %1617
      %1619 = vrot.lane.b32.xlu0 %v1548, 32
      %v1620 = vpop.permute.xlu0 %1619
      %1621 = vrot.lane.b32.xlu0 %v1549, 32
      %v1622 = vpop.permute.xlu0 %1621
      %1623 = vrot.lane.b32.xlu0 %v1550, 32
      %v1624 = vpop.permute.xlu0 %1623
      %1625 = vrot.lane.b32.xlu0 %v1551, 32
      %v1626 = vpop.permute.xlu0 %1625
      %1627 = vrot.lane.b32.xlu0 %v1552, 32
      %v1628 = vpop.permute.xlu0 %1627
      %1629 = vrot.lane.b32.xlu0 %v1553, 32
      %v1630 = vpop.permute.xlu0 %1629
      %1631 = vrot.lane.b32.xlu0 %v1554, 32
      %v1632 = vpop.permute.xlu0 %1631
      %1633 = vrot.lane.b32.xlu0 %v1555, 32
      %v1634 = vpop.permute.xlu0 %1633
      %1635 = vrot.lane.b32.xlu0 %v1556, 32
      %v1636 = vpop.permute.xlu0 %1635
      %1637 = vrot.lane.b32.xlu0 %v1557, 32
      %v1638 = vpop.permute.xlu0 %1637
      %1639 = vrot.lane.b32.xlu0 %v1558, 32
      %v1640 = vpop.permute.xlu0 %1639
      %1641 = vrot.lane.b32.xlu0 %v1559, 32
      %v1642 = vpop.permute.xlu0 %1641
      %1643 = vrot.lane.b32.xlu0 %v1560, 32
      %v1644 = vpop.permute.xlu0 %1643
      %1645 = vrot.lane.b32.xlu0 %v1561, 32
      %v1646 = vpop.permute.xlu0 %1645
      %1647 = vrot.lane.b32.xlu0 %v1562, 32
      %v1648 = vpop.permute.xlu0 %1647
      %1649 = vrot.lane.b32.xlu0 %v1563, 32
      %v1650 = vpop.permute.xlu0 %1649
      %1651 = vrot.lane.b32.xlu0 %v1564, 32
      %v1652 = vpop.permute.xlu0 %1651
      %1653 = vrot.lane.b32.xlu0 %v1565, 32
      %v1654 = vpop.permute.xlu0 %1653
      %1655 = vrot.lane.b32.xlu0 %v1566, 32
      %v1656 = vpop.permute.xlu0 %1655
      %1657 = vrot.lane.b32.xlu0 %v1567, 32
      %v1658 = vpop.permute.xlu0 %1657
      %1659 = vrot.lane.b32.xlu0 %v1568, 32
      %v1660 = vpop.permute.xlu0 %1659
      %1661 = vrot.lane.b32.xlu0 %v1569, 32
      %v1662 = vpop.permute.xlu0 %1661
      %1663 = vrot.lane.b32.xlu0 %v1570, 32
      %v1664 = vpop.permute.xlu0 %1663
      %1665 = vrot.lane.b32.xlu0 %v1571, 32
      %v1666 = vpop.permute.xlu0 %1665
      %1667 = vrot.lane.b32.xlu0 %v1572, 32
      %v1668 = vpop.permute.xlu0 %1667
      %vm1701 = vcmask 326912
      %1702 = vst.msk [vmem:[#allocation3] sm:$0xff] %vm1701, %v1606
      %1703 = vst.msk [vmem:[#allocation3 + $0x8] sm:$0xff] %vm1701, %v1608
      %1704 = vst.msk [vmem:[#allocation3 + $0x10] sm:$0xff] %vm1701, %v1610
      %1705 = vst.msk [vmem:[#allocation3 + $0x18] sm:$0xff] %vm1701, %v1612
      %1706 = vst.msk [vmem:[#allocation3 + $0x20] sm:$0xff] %vm1701, %v1614
      %1707 = vst.msk [vmem:[#allocation3 + $0x28] sm:$0xff] %vm1701, %v1616
      %1708 = vst.msk [vmem:[#allocation3 + $0x30] sm:$0xff] %vm1701, %v1618
      %1709 = vst.msk [vmem:[#allocation3 + $0x38] sm:$0xff] %vm1701, %v1620
      %1710 = vst.msk [vmem:[#allocation3 + $0x40] sm:$0xff] %vm1701, %v1622
      %1711 = vst.msk [vmem:[#allocation3 + $0x48] sm:$0xff] %vm1701, %v1624
      %1712 = vst.msk [vmem:[#allocation3 + $0x50] sm:$0xff] %vm1701, %v1626
      %1713 = vst.msk [vmem:[#allocation3 + $0x58] sm:$0xff] %vm1701, %v1628
      %1714 = vst.msk [vmem:[#allocation3 + $0x60] sm:$0xff] %vm1701, %v1630
      %1715 = vst.msk [vmem:[#allocation3 + $0x68] sm:$0xff] %vm1701, %v1632
      %1716 = vst.msk [vmem:[#allocation3 + $0x70] sm:$0xff] %vm1701, %v1634
      %1717 = vst.msk [vmem:[#allocation3 + $0x78] sm:$0xff] %vm1701, %v1636
      %1718 = vst.msk [vmem:[#allocation3 + $0x80] sm:$0xff] %vm1701, %v1638
      %1719 = vst.msk [vmem:[#allocation3 + $0x88] sm:$0xff] %vm1701, %v1640
      %1720 = vst.msk [vmem:[#allocation3 + $0x90] sm:$0xff] %vm1701, %v1642
      %1721 = vst.msk [vmem:[#allocation3 + $0x98] sm:$0xff] %vm1701, %v1644
      %1722 = vst.msk [vmem:[#allocation3 + $0xa0] sm:$0xff] %vm1701, %v1646
      %1723 = vst.msk [vmem:[#allocation3 + $0xa8] sm:$0xff] %vm1701, %v1648
      %1724 = vst.msk [vmem:[#allocation3 + $0xb0] sm:$0xff] %vm1701, %v1650
      %1725 = vst.msk [vmem:[#allocation3 + $0xb8] sm:$0xff] %vm1701, %v1652
      %1726 = vst.msk [vmem:[#allocation3 + $0xc0] sm:$0xff] %vm1701, %v1654
      %1727 = vst.msk [vmem:[#allocation3 + $0xc8] sm:$0xff] %vm1701, %v1656
      %1728 = vst.msk [vmem:[#allocation3 + $0xd0] sm:$0xff] %vm1701, %v1658
      %1729 = vst.msk [vmem:[#allocation3 + $0xd8] sm:$0xff] %vm1701, %v1660
      %1730 = vst.msk [vmem:[#allocation3 + $0xe0] sm:$0xff] %vm1701, %v1662
      %1731 = vst.msk [vmem:[#allocation3 + $0xe8] sm:$0xff] %vm1701, %v1664
      %1732 = vst.msk [vmem:[#allocation3 + $0xf0] sm:$0xff] %vm1701, %v1666
      %1733 = vst.msk [vmem:[#allocation3 + $0xf8] sm:$0xff] %vm1701, %v1668
      %v1734 = vld [vmem:[%s865 + $0x2] sm:$0xff]
      %v1735 = vld [vmem:[%s865 + $0xa] sm:$0xff]
      %v1736 = vld [vmem:[%s865 + $0x1a] sm:$0xff]
      %v1737 = vld [vmem:[%s865 + $0x22] sm:$0xff]
      %v1738 = vld [vmem:[%s865 + $0x32] sm:$0xff]
      %v1739 = vld [vmem:[%s865 + $0x3a] sm:$0xff]
      %v1740 = vld [vmem:[%s865 + $0x4a] sm:$0xff]
      %v1741 = vld [vmem:[%s865 + $0x52] sm:$0xff]
      %v1742 = vld [vmem:[%s865 + $0x62] sm:$0xff]
      %v1743 = vld [vmem:[%s865 + $0x6a] sm:$0xff]
      %v1744 = vld [vmem:[%s865 + $0x7a] sm:$0xff]
      %v1745 = vld [vmem:[%s865 + $0x82] sm:$0xff]
      %v1746 = vld [vmem:[%s865 + $0x92] sm:$0xff]
      %v1747 = vld [vmem:[%s865 + $0x9a] sm:$0xff]
      %v1748 = vld [vmem:[%s865 + $0xaa] sm:$0xff]
      %v1749 = vld [vmem:[%s865 + $0xb2] sm:$0xff]
      %v1750 = vld [vmem:[%s865 + $0xc2] sm:$0xff]
      %v1751 = vld [vmem:[%s865 + $0xca] sm:$0xff]
      %v1752 = vld [vmem:[%s865 + $0xda] sm:$0xff]
      %v1753 = vld [vmem:[%s865 + $0xe2] sm:$0xff]
      %v1754 = vld [vmem:[%s865 + $0xf2] sm:$0xff]
      %v1755 = vld [vmem:[%s865 + $0xfa] sm:$0xff]
      %v1756 = vld [vmem:[%s865 + $0x10a] sm:$0xff]
      %v1757 = vld [vmem:[%s865 + $0x112] sm:$0xff]
      %v1758 = vld [vmem:[%s865 + $0x122] sm:$0xff]
      %v1759 = vld [vmem:[%s865 + $0x12a] sm:$0xff]
      %v1760 = vld [vmem:[%s865 + $0x13a] sm:$0xff]
      %v1761 = vld [vmem:[%s865 + $0x142] sm:$0xff]
      %v1762 = vld [vmem:[%s865 + $0x152] sm:$0xff]
      %v1763 = vld [vmem:[%s865 + $0x15a] sm:$0xff]
      %v1764 = vld [vmem:[%s865 + $0x16a] sm:$0xff]
      %v1765 = vld [vmem:[%s865 + $0x172] sm:$0xff]
      %1798 = vrot.lane.b32.xlu0 %v1734, 40
      %v1799 = vpop.permute.xlu0 %1798
      %1800 = vrot.lane.b32.xlu0 %v1735, 40
      %v1801 = vpop.permute.xlu0 %1800
      %1802 = vrot.lane.b32.xlu0 %v1736, 40
      %v1803 = vpop.permute.xlu0 %1802
      %1804 = vrot.lane.b32.xlu0 %v1737, 40
      %v1805 = vpop.permute.xlu0 %1804
      %1806 = vrot.lane.b32.xlu0 %v1738, 40
      %v1807 = vpop.permute.xlu0 %1806
      %1808 = vrot.lane.b32.xlu0 %v1739, 40
      %v1809 = vpop.permute.xlu0 %1808
      %1810 = vrot.lane.b32.xlu0 %v1740, 40
      %v1811 = vpop.permute.xlu0 %1810
      %1812 = vrot.lane.b32.xlu0 %v1741, 40
      %v1813 = vpop.permute.xlu0 %1812
      %1814 = vrot.lane.b32.xlu0 %v1742, 40
      %v1815 = vpop.permute.xlu0 %1814
      %1816 = vrot.lane.b32.xlu0 %v1743, 40
      %v1817 = vpop.permute.xlu0 %1816
      %1818 = vrot.lane.b32.xlu0 %v1744, 40
      %v1819 = vpop.permute.xlu0 %1818
      %1820 = vrot.lane.b32.xlu0 %v1745, 40
      %v1821 = vpop.permute.xlu0 %1820
      %1822 = vrot.lane.b32.xlu0 %v1746, 40
      %v1823 = vpop.permute.xlu0 %1822
      %1824 = vrot.lane.b32.xlu0 %v1747, 40
      %v1825 = vpop.permute.xlu0 %1824
      %1826 = vrot.lane.b32.xlu0 %v1748, 40
      %v1827 = vpop.permute.xlu0 %1826
      %1828 = vrot.lane.b32.xlu0 %v1749, 40
      %v1829 = vpop.permute.xlu0 %1828
      %1830 = vrot.lane.b32.xlu0 %v1750, 40
      %v1831 = vpop.permute.xlu0 %1830
      %1832 = vrot.lane.b32.xlu0 %v1751, 40
      %v1833 = vpop.permute.xlu0 %1832
      %1834 = vrot.lane.b32.xlu0 %v1752, 40
      %v1835 = vpop.permute.xlu0 %1834
      %1836 = vrot.lane.b32.xlu0 %v1753, 40
      %v1837 = vpop.permute.xlu0 %1836
      %1838 = vrot.lane.b32.xlu0 %v1754, 40
      %v1839 = vpop.permute.xlu0 %1838
      %1840 = vrot.lane.b32.xlu0 %v1755, 40
      %v1841 = vpop.permute.xlu0 %1840
      %1842 = vrot.lane.b32.xlu0 %v1756, 40
      %v1843 = vpop.permute.xlu0 %1842
      %1844 = vrot.lane.b32.xlu0 %v1757, 40
      %v1845 = vpop.permute.xlu0 %1844
      %1846 = vrot.lane.b32.xlu0 %v1758, 40
      %v1847 = vpop.permute.xlu0 %1846
      %1848 = vrot.lane.b32.xlu0 %v1759, 40
      %v1849 = vpop.permute.xlu0 %1848
      %1850 = vrot.lane.b32.xlu0 %v1760, 40
      %v1851 = vpop.permute.xlu0 %1850
      %1852 = vrot.lane.b32.xlu0 %v1761, 40
      %v1853 = vpop.permute.xlu0 %1852
      %1854 = vrot.lane.b32.xlu0 %v1762, 40
      %v1855 = vpop.permute.xlu0 %1854
      %1856 = vrot.lane.b32.xlu0 %v1763, 40
      %v1857 = vpop.permute.xlu0 %1856
      %1858 = vrot.lane.b32.xlu0 %v1764, 40
      %v1859 = vpop.permute.xlu0 %1858
      %1860 = vrot.lane.b32.xlu0 %v1765, 40
      %v1861 = vpop.permute.xlu0 %1860
      %vm1894 = vcmask 392512
      %1895 = vst.msk [vmem:[#allocation3] sm:$0xff] %vm1894, %v1799
      %1896 = vst.msk [vmem:[#allocation3 + $0x8] sm:$0xff] %vm1894, %v1801
      %1897 = vst.msk [vmem:[#allocation3 + $0x10] sm:$0xff] %vm1894, %v1803
      %1898 = vst.msk [vmem:[#allocation3 + $0x18] sm:$0xff] %vm1894, %v1805
      %1899 = vst.msk [vmem:[#allocation3 + $0x20] sm:$0xff] %vm1894, %v1807
      %1900 = vst.msk [vmem:[#allocation3 + $0x28] sm:$0xff] %vm1894, %v1809
      %1901 = vst.msk [vmem:[#allocation3 + $0x30] sm:$0xff] %vm1894, %v1811
      %1902 = vst.msk [vmem:[#allocation3 + $0x38] sm:$0xff] %vm1894, %v1813
      %1903 = vst.msk [vmem:[#allocation3 + $0x40] sm:$0xff] %vm1894, %v1815
      %1904 = vst.msk [vmem:[#allocation3 + $0x48] sm:$0xff] %vm1894, %v1817
      %1905 = vst.msk [vmem:[#allocation3 + $0x50] sm:$0xff] %vm1894, %v1819
      %1906 = vst.msk [vmem:[#allocation3 + $0x58] sm:$0xff] %vm1894, %v1821
      %1907 = vst.msk [vmem:[#allocation3 + $0x60] sm:$0xff] %vm1894, %v1823
      %1908 = vst.msk [vmem:[#allocation3 + $0x68] sm:$0xff] %vm1894, %v1825
      %1909 = vst.msk [vmem:[#allocation3 + $0x70] sm:$0xff] %vm1894, %v1827
      %1910 = vst.msk [vmem:[#allocation3 + $0x78] sm:$0xff] %vm1894, %v1829
      %1911 = vst.msk [vmem:[#allocation3 + $0x80] sm:$0xff] %vm1894, %v1831
      %1912 = vst.msk [vmem:[#allocation3 + $0x88] sm:$0xff] %vm1894, %v1833
      %1913 = vst.msk [vmem:[#allocation3 + $0x90] sm:$0xff] %vm1894, %v1835
      %1914 = vst.msk [vmem:[#allocation3 + $0x98] sm:$0xff] %vm1894, %v1837
      %1915 = vst.msk [vmem:[#allocation3 + $0xa0] sm:$0xff] %vm1894, %v1839
      %1916 = vst.msk [vmem:[#allocation3 + $0xa8] sm:$0xff] %vm1894, %v1841
      %1917 = vst.msk [vmem:[#allocation3 + $0xb0] sm:$0xff] %vm1894, %v1843
      %1918 = vst.msk [vmem:[#allocation3 + $0xb8] sm:$0xff] %vm1894, %v1845
      %1919 = vst.msk [vmem:[#allocation3 + $0xc0] sm:$0xff] %vm1894, %v1847
      %1920 = vst.msk [vmem:[#allocation3 + $0xc8] sm:$0xff] %vm1894, %v1849
      %1921 = vst.msk [vmem:[#allocation3 + $0xd0] sm:$0xff] %vm1894, %v1851
      %1922 = vst.msk [vmem:[#allocation3 + $0xd8] sm:$0xff] %vm1894, %v1853
      %1923 = vst.msk [vmem:[#allocation3 + $0xe0] sm:$0xff] %vm1894, %v1855
      %1924 = vst.msk [vmem:[#allocation3 + $0xe8] sm:$0xff] %vm1894, %v1857
      %1925 = vst.msk [vmem:[#allocation3 + $0xf0] sm:$0xff] %vm1894, %v1859
      %1926 = vst.msk [vmem:[#allocation3 + $0xf8] sm:$0xff] %vm1894, %v1861
      %s1927 = scalar_lea.vmem [#allocation2], 48
      %v1928 = vld [vmem:[%s1927] sm:$0xff]
      %v1929 = vld [vmem:[%s1927 + $0x8] sm:$0xff]
      %v1930 = vld [vmem:[%s1927 + $0x18] sm:$0xff]
      %v1931 = vld [vmem:[%s1927 + $0x20] sm:$0xff]
      %v1932 = vld [vmem:[%s1927 + $0x30] sm:$0xff]
      %v1933 = vld [vmem:[%s1927 + $0x38] sm:$0xff]
      %v1934 = vld [vmem:[%s1927 + $0x48] sm:$0xff]
      %v1935 = vld [vmem:[%s1927 + $0x50] sm:$0xff]
      %v1936 = vld [vmem:[%s1927 + $0x60] sm:$0xff]
      %v1937 = vld [vmem:[%s1927 + $0x68] sm:$0xff]
      %v1938 = vld [vmem:[%s1927 + $0x78] sm:$0xff]
      %v1939 = vld [vmem:[%s1927 + $0x80] sm:$0xff]
      %v1940 = vld [vmem:[%s1927 + $0x90] sm:$0xff]
      %v1941 = vld [vmem:[%s1927 + $0x98] sm:$0xff]
      %v1942 = vld [vmem:[%s1927 + $0xa8] sm:$0xff]
      %v1943 = vld [vmem:[%s1927 + $0xb0] sm:$0xff]
      %v1944 = vld [vmem:[%s1927 + $0xc0] sm:$0xff]
      %v1945 = vld [vmem:[%s1927 + $0xc8] sm:$0xff]
      %v1946 = vld [vmem:[%s1927 + $0xd8] sm:$0xff]
      %v1947 = vld [vmem:[%s1927 + $0xe0] sm:$0xff]
      %v1948 = vld [vmem:[%s1927 + $0xf0] sm:$0xff]
      %v1949 = vld [vmem:[%s1927 + $0xf8] sm:$0xff]
      %v1950 = vld [vmem:[%s1927 + $0x108] sm:$0xff]
      %v1951 = vld [vmem:[%s1927 + $0x110] sm:$0xff]
      %v1952 = vld [vmem:[%s1927 + $0x120] sm:$0xff]
      %v1953 = vld [vmem:[%s1927 + $0x128] sm:$0xff]
      %v1954 = vld [vmem:[%s1927 + $0x138] sm:$0xff]
      %v1955 = vld [vmem:[%s1927 + $0x140] sm:$0xff]
      %v1956 = vld [vmem:[%s1927 + $0x150] sm:$0xff]
      %v1957 = vld [vmem:[%s1927 + $0x158] sm:$0xff]
      %v1958 = vld [vmem:[%s1927 + $0x168] sm:$0xff]
      %v1959 = vld [vmem:[%s1927 + $0x170] sm:$0xff]
      %1992 = vrot.lane.b32.xlu0 %v1928, 48
      %v1993 = vpop.permute.xlu0 %1992
      %1994 = vrot.lane.b32.xlu0 %v1929, 48
      %v1995 = vpop.permute.xlu0 %1994
      %1996 = vrot.lane.b32.xlu0 %v1930, 48
      %v1997 = vpop.permute.xlu0 %1996
      %1998 = vrot.lane.b32.xlu0 %v1931, 48
      %v1999 = vpop.permute.xlu0 %1998
      %2000 = vrot.lane.b32.xlu0 %v1932, 48
      %v2001 = vpop.permute.xlu0 %2000
      %2002 = vrot.lane.b32.xlu0 %v1933, 48
      %v2003 = vpop.permute.xlu0 %2002
      %2004 = vrot.lane.b32.xlu0 %v1934, 48
      %v2005 = vpop.permute.xlu0 %2004
      %2006 = vrot.lane.b32.xlu0 %v1935, 48
      %v2007 = vpop.permute.xlu0 %2006
      %2008 = vrot.lane.b32.xlu0 %v1936, 48
      %v2009 = vpop.permute.xlu0 %2008
      %2010 = vrot.lane.b32.xlu0 %v1937, 48
      %v2011 = vpop.permute.xlu0 %2010
      %2012 = vrot.lane.b32.xlu0 %v1938, 48
      %v2013 = vpop.permute.xlu0 %2012
      %2014 = vrot.lane.b32.xlu0 %v1939, 48
      %v2015 = vpop.permute.xlu0 %2014
      %2016 = vrot.lane.b32.xlu0 %v1940, 48
      %v2017 = vpop.permute.xlu0 %2016
      %2018 = vrot.lane.b32.xlu0 %v1941, 48
      %v2019 = vpop.permute.xlu0 %2018
      %2020 = vrot.lane.b32.xlu0 %v1942, 48
      %v2021 = vpop.permute.xlu0 %2020
      %2022 = vrot.lane.b32.xlu0 %v1943, 48
      %v2023 = vpop.permute.xlu0 %2022
      %2024 = vrot.lane.b32.xlu0 %v1944, 48
      %v2025 = vpop.permute.xlu0 %2024
      %2026 = vrot.lane.b32.xlu0 %v1945, 48
      %v2027 = vpop.permute.xlu0 %2026
      %2028 = vrot.lane.b32.xlu0 %v1946, 48
      %v2029 = vpop.permute.xlu0 %2028
      %2030 = vrot.lane.b32.xlu0 %v1947, 48
      %v2031 = vpop.permute.xlu0 %2030
      %2032 = vrot.lane.b32.xlu0 %v1948, 48
      %v2033 = vpop.permute.xlu0 %2032
      %2034 = vrot.lane.b32.xlu0 %v1949, 48
      %v2035 = vpop.permute.xlu0 %2034
      %2036 = vrot.lane.b32.xlu0 %v1950, 48
      %v2037 = vpop.permute.xlu0 %2036
      %2038 = vrot.lane.b32.xlu0 %v1951, 48
      %v2039 = vpop.permute.xlu0 %2038
      %2040 = vrot.lane.b32.xlu0 %v1952, 48
      %v2041 = vpop.permute.xlu0 %2040
      %2042 = vrot.lane.b32.xlu0 %v1953, 48
      %v2043 = vpop.permute.xlu0 %2042
      %2044 = vrot.lane.b32.xlu0 %v1954, 48
      %v2045 = vpop.permute.xlu0 %2044
      %2046 = vrot.lane.b32.xlu0 %v1955, 48
      %v2047 = vpop.permute.xlu0 %2046
      %2048 = vrot.lane.b32.xlu0 %v1956, 48
      %v2049 = vpop.permute.xlu0 %2048
      %2050 = vrot.lane.b32.xlu0 %v1957, 48
      %v2051 = vpop.permute.xlu0 %2050
      %2052 = vrot.lane.b32.xlu0 %v1958, 48
      %v2053 = vpop.permute.xlu0 %2052
      %2054 = vrot.lane.b32.xlu0 %v1959, 48
      %v2055 = vpop.permute.xlu0 %2054
      %vm2088 = vcmask 458112
      %2089 = vst.msk [vmem:[#allocation3] sm:$0xff] %vm2088, %v1993
      %2090 = vst.msk [vmem:[#allocation3 + $0x8] sm:$0xff] %vm2088, %v1995
      %2091 = vst.msk [vmem:[#allocation3 + $0x10] sm:$0xff] %vm2088, %v1997
      %2092 = vst.msk [vmem:[#allocation3 + $0x18] sm:$0xff] %vm2088, %v1999
      %2093 = vst.msk [vmem:[#allocation3 + $0x20] sm:$0xff] %vm2088, %v2001
      %2094 = vst.msk [vmem:[#allocation3 + $0x28] sm:$0xff] %vm2088, %v2003
      %2095 = vst.msk [vmem:[#allocation3 + $0x30] sm:$0xff] %vm2088, %v2005
      %2096 = vst.msk [vmem:[#allocation3 + $0x38] sm:$0xff] %vm2088, %v2007
      %2097 = vst.msk [vmem:[#allocation3 + $0x40] sm:$0xff] %vm2088, %v2009
      %2098 = vst.msk [vmem:[#allocation3 + $0x48] sm:$0xff] %vm2088, %v2011
      %2099 = vst.msk [vmem:[#allocation3 + $0x50] sm:$0xff] %vm2088, %v2013
      %2100 = vst.msk [vmem:[#allocation3 + $0x58] sm:$0xff] %vm2088, %v2015
      %2101 = vst.msk [vmem:[#allocation3 + $0x60] sm:$0xff] %vm2088, %v2017
      %2102 = vst.msk [vmem:[#allocation3 + $0x68] sm:$0xff] %vm2088, %v2019
      %2103 = vst.msk [vmem:[#allocation3 + $0x70] sm:$0xff] %vm2088, %v2021
      %2104 = vst.msk [vmem:[#allocation3 + $0x78] sm:$0xff] %vm2088, %v2023
      %2105 = vst.msk [vmem:[#allocation3 + $0x80] sm:$0xff] %vm2088, %v2025
      %2106 = vst.msk [vmem:[#allocation3 + $0x88] sm:$0xff] %vm2088, %v2027
      %2107 = vst.msk [vmem:[#allocation3 + $0x90] sm:$0xff] %vm2088, %v2029
      %2108 = vst.msk [vmem:[#allocation3 + $0x98] sm:$0xff] %vm2088, %v2031
      %2109 = vst.msk [vmem:[#allocation3 + $0xa0] sm:$0xff] %vm2088, %v2033
      %2110 = vst.msk [vmem:[#allocation3 + $0xa8] sm:$0xff] %vm2088, %v2035
      %2111 = vst.msk [vmem:[#allocation3 + $0xb0] sm:$0xff] %vm2088, %v2037
      %2112 = vst.msk [vmem:[#allocation3 + $0xb8] sm:$0xff] %vm2088, %v2039
      %2113 = vst.msk [vmem:[#allocation3 + $0xc0] sm:$0xff] %vm2088, %v2041
      %2114 = vst.msk [vmem:[#allocation3 + $0xc8] sm:$0xff] %vm2088, %v2043
      %2115 = vst.msk [vmem:[#allocation3 + $0xd0] sm:$0xff] %vm2088, %v2045
      %2116 = vst.msk [vmem:[#allocation3 + $0xd8] sm:$0xff] %vm2088, %v2047
      %2117 = vst.msk [vmem:[#allocation3 + $0xe0] sm:$0xff] %vm2088, %v2049
      %2118 = vst.msk [vmem:[#allocation3 + $0xe8] sm:$0xff] %vm2088, %v2051
      %2119 = vst.msk [vmem:[#allocation3 + $0xf0] sm:$0xff] %vm2088, %v2053
      %2120 = vst.msk [vmem:[#allocation3 + $0xf8] sm:$0xff] %vm2088, %v2055
      %v2121 = vld [vmem:[%s1927 + $0x1] sm:$0xff]
      %v2122 = vld [vmem:[%s1927 + $0x9] sm:$0xff]
      %v2123 = vld [vmem:[%s1927 + $0x19] sm:$0xff]
      %v2124 = vld [vmem:[%s1927 + $0x21] sm:$0xff]
      %v2125 = vld [vmem:[%s1927 + $0x31] sm:$0xff]
      %v2126 = vld [vmem:[%s1927 + $0x39] sm:$0xff]
      %v2127 = vld [vmem:[%s1927 + $0x49] sm:$0xff]
      %v2128 = vld [vmem:[%s1927 + $0x51] sm:$0xff]
      %v2129 = vld [vmem:[%s1927 + $0x61] sm:$0xff]
      %v2130 = vld [vmem:[%s1927 + $0x69] sm:$0xff]
      %v2131 = vld [vmem:[%s1927 + $0x79] sm:$0xff]
      %v2132 = vld [vmem:[%s1927 + $0x81] sm:$0xff]
      %v2133 = vld [vmem:[%s1927 + $0x91] sm:$0xff]
      %v2134 = vld [vmem:[%s1927 + $0x99] sm:$0xff]
      %v2135 = vld [vmem:[%s1927 + $0xa9] sm:$0xff]
      %v2136 = vld [vmem:[%s1927 + $0xb1] sm:$0xff]
      %v2137 = vld [vmem:[%s1927 + $0xc1] sm:$0xff]
      %v2138 = vld [vmem:[%s1927 + $0xc9] sm:$0xff]
      %v2139 = vld [vmem:[%s1927 + $0xd9] sm:$0xff]
      %v2140 = vld [vmem:[%s1927 + $0xe1] sm:$0xff]
      %v2141 = vld [vmem:[%s1927 + $0xf1] sm:$0xff]
      %v2142 = vld [vmem:[%s1927 + $0xf9] sm:$0xff]
      %v2143 = vld [vmem:[%s1927 + $0x109] sm:$0xff]
      %v2144 = vld [vmem:[%s1927 + $0x111] sm:$0xff]
      %v2145 = vld [vmem:[%s1927 + $0x121] sm:$0xff]
      %v2146 = vld [vmem:[%s1927 + $0x129] sm:$0xff]
      %v2147 = vld [vmem:[%s1927 + $0x139] sm:$0xff]
      %v2148 = vld [vmem:[%s1927 + $0x141] sm:$0xff]
      %v2149 = vld [vmem:[%s1927 + $0x151] sm:$0xff]
      %v2150 = vld [vmem:[%s1927 + $0x159] sm:$0xff]
      %v2151 = vld [vmem:[%s1927 + $0x169] sm:$0xff]
      %v2152 = vld [vmem:[%s1927 + $0x171] sm:$0xff]
      %2185 = vrot.lane.b32.xlu0 %v2121, 56
      %v2186 = vpop.permute.xlu0 %2185
      %2187 = vrot.lane.b32.xlu0 %v2122, 56
      %v2188 = vpop.permute.xlu0 %2187
      %2189 = vrot.lane.b32.xlu0 %v2123, 56
      %v2190 = vpop.permute.xlu0 %2189
      %2191 = vrot.lane.b32.xlu0 %v2124, 56
      %v2192 = vpop.permute.xlu0 %2191
      %2193 = vrot.lane.b32.xlu0 %v2125, 56
      %v2194 = vpop.permute.xlu0 %2193
      %2195 = vrot.lane.b32.xlu0 %v2126, 56
      %v2196 = vpop.permute.xlu0 %2195
      %2197 = vrot.lane.b32.xlu0 %v2127, 56
      %v2198 = vpop.permute.xlu0 %2197
      %2199 = vrot.lane.b32.xlu0 %v2128, 56
      %v2200 = vpop.permute.xlu0 %2199
      %2201 = vrot.lane.b32.xlu0 %v2129, 56
      %v2202 = vpop.permute.xlu0 %2201
      %2203 = vrot.lane.b32.xlu0 %v2130, 56
      %v2204 = vpop.permute.xlu0 %2203
      %2205 = vrot.lane.b32.xlu0 %v2131, 56
      %v2206 = vpop.permute.xlu0 %2205
      %2207 = vrot.lane.b32.xlu0 %v2132, 56
      %v2208 = vpop.permute.xlu0 %2207
      %2209 = vrot.lane.b32.xlu0 %v2133, 56
      %v2210 = vpop.permute.xlu0 %2209
      %2211 = vrot.lane.b32.xlu0 %v2134, 56
      %v2212 = vpop.permute.xlu0 %2211
      %2213 = vrot.lane.b32.xlu0 %v2135, 56
      %v2214 = vpop.permute.xlu0 %2213
      %2215 = vrot.lane.b32.xlu0 %v2136, 56
      %v2216 = vpop.permute.xlu0 %2215
      %2217 = vrot.lane.b32.xlu0 %v2137, 56
      %v2218 = vpop.permute.xlu0 %2217
      %2219 = vrot.lane.b32.xlu0 %v2138, 56
      %v2220 = vpop.permute.xlu0 %2219
      %2221 = vrot.lane.b32.xlu0 %v2139, 56
      %v2222 = vpop.permute.xlu0 %2221
      %2223 = vrot.lane.b32.xlu0 %v2140, 56
      %v2224 = vpop.permute.xlu0 %2223
      %2225 = vrot.lane.b32.xlu0 %v2141, 56
      %v2226 = vpop.permute.xlu0 %2225
      %2227 = vrot.lane.b32.xlu0 %v2142, 56
      %v2228 = vpop.permute.xlu0 %2227
      %2229 = vrot.lane.b32.xlu0 %v2143, 56
      %v2230 = vpop.permute.xlu0 %2229
      %2231 = vrot.lane.b32.xlu0 %v2144, 56
      %v2232 = vpop.permute.xlu0 %2231
      %2233 = vrot.lane.b32.xlu0 %v2145, 56
      %v2234 = vpop.permute.xlu0 %2233
      %2235 = vrot.lane.b32.xlu0 %v2146, 56
      %v2236 = vpop.permute.xlu0 %2235
      %2237 = vrot.lane.b32.xlu0 %v2147, 56
      %v2238 = vpop.permute.xlu0 %2237
      %2239 = vrot.lane.b32.xlu0 %v2148, 56
      %v2240 = vpop.permute.xlu0 %2239
      %2241 = vrot.lane.b32.xlu0 %v2149, 56
      %v2242 = vpop.permute.xlu0 %2241
      %2243 = vrot.lane.b32.xlu0 %v2150, 56
      %v2244 = vpop.permute.xlu0 %2243
      %2245 = vrot.lane.b32.xlu0 %v2151, 56
      %v2246 = vpop.permute.xlu0 %2245
      %2247 = vrot.lane.b32.xlu0 %v2152, 56
      %v2248 = vpop.permute.xlu0 %2247
      %vm2281 = vcmask 523712
      %2282 = vst.msk [vmem:[#allocation3] sm:$0xff] %vm2281, %v2186
      %2283 = vst.msk [vmem:[#allocation3 + $0x8] sm:$0xff] %vm2281, %v2188
      %2284 = vst.msk [vmem:[#allocation3 + $0x10] sm:$0xff] %vm2281, %v2190
      %2285 = vst.msk [vmem:[#allocation3 + $0x18] sm:$0xff] %vm2281, %v2192
      %2286 = vst.msk [vmem:[#allocation3 + $0x20] sm:$0xff] %vm2281, %v2194
      %2287 = vst.msk [vmem:[#allocation3 + $0x28] sm:$0xff] %vm2281, %v2196
      %2288 = vst.msk [vmem:[#allocation3 + $0x30] sm:$0xff] %vm2281, %v2198
      %2289 = vst.msk [vmem:[#allocation3 + $0x38] sm:$0xff] %vm2281, %v2200
      %2290 = vst.msk [vmem:[#allocation3 + $0x40] sm:$0xff] %vm2281, %v2202
      %2291 = vst.msk [vmem:[#allocation3 + $0x48] sm:$0xff] %vm2281, %v2204
      %2292 = vst.msk [vmem:[#allocation3 + $0x50] sm:$0xff] %vm2281, %v2206
      %2293 = vst.msk [vmem:[#allocation3 + $0x58] sm:$0xff] %vm2281, %v2208
      %2294 = vst.msk [vmem:[#allocation3 + $0x60] sm:$0xff] %vm2281, %v2210
      %2295 = vst.msk [vmem:[#allocation3 + $0x68] sm:$0xff] %vm2281, %v2212
      %2296 = vst.msk [vmem:[#allocation3 + $0x70] sm:$0xff] %vm2281, %v2214
      %2297 = vst.msk [vmem:[#allocation3 + $0x78] sm:$0xff] %vm2281, %v2216
      %2298 = vst.msk [vmem:[#allocation3 + $0x80] sm:$0xff] %vm2281, %v2218
      %2299 = vst.msk [vmem:[#allocation3 + $0x88] sm:$0xff] %vm2281, %v2220
      %2300 = vst.msk [vmem:[#allocation3 + $0x90] sm:$0xff] %vm2281, %v2222
      %2301 = vst.msk [vmem:[#allocation3 + $0x98] sm:$0xff] %vm2281, %v2224
      %2302 = vst.msk [vmem:[#allocation3 + $0xa0] sm:$0xff] %vm2281, %v2226
      %2303 = vst.msk [vmem:[#allocation3 + $0xa8] sm:$0xff] %vm2281, %v2228
      %2304 = vst.msk [vmem:[#allocation3 + $0xb0] sm:$0xff] %vm2281, %v2230
      %2305 = vst.msk [vmem:[#allocation3 + $0xb8] sm:$0xff] %vm2281, %v2232
      %2306 = vst.msk [vmem:[#allocation3 + $0xc0] sm:$0xff] %vm2281, %v2234
      %2307 = vst.msk [vmem:[#allocation3 + $0xc8] sm:$0xff] %vm2281, %v2236
      %2308 = vst.msk [vmem:[#allocation3 + $0xd0] sm:$0xff] %vm2281, %v2238
      %2309 = vst.msk [vmem:[#allocation3 + $0xd8] sm:$0xff] %vm2281, %v2240
      %2310 = vst.msk [vmem:[#allocation3 + $0xe0] sm:$0xff] %vm2281, %v2242
      %2311 = vst.msk [vmem:[#allocation3 + $0xe8] sm:$0xff] %vm2281, %v2244
      %2312 = vst.msk [vmem:[#allocation3 + $0xf0] sm:$0xff] %vm2281, %v2246
      %2313 = vst.msk [vmem:[#allocation3 + $0xf8] sm:$0xff] %vm2281, %v2248
      %v2314 = vld [vmem:[%s1927 + $0x2] sm:$0xff]
      %v2315 = vld [vmem:[%s1927 + $0xa] sm:$0xff]
      %v2316 = vld [vmem:[%s1927 + $0x1a] sm:$0xff]
      %v2317 = vld [vmem:[%s1927 + $0x22] sm:$0xff]
      %v2318 = vld [vmem:[%s1927 + $0x32] sm:$0xff]
      %v2319 = vld [vmem:[%s1927 + $0x3a] sm:$0xff]
      %v2320 = vld [vmem:[%s1927 + $0x4a] sm:$0xff]
      %v2321 = vld [vmem:[%s1927 + $0x52] sm:$0xff]
      %v2322 = vld [vmem:[%s1927 + $0x62] sm:$0xff]
      %v2323 = vld [vmem:[%s1927 + $0x6a] sm:$0xff]
      %v2324 = vld [vmem:[%s1927 + $0x7a] sm:$0xff]
      %v2325 = vld [vmem:[%s1927 + $0x82] sm:$0xff]
      %v2326 = vld [vmem:[%s1927 + $0x92] sm:$0xff]
      %v2327 = vld [vmem:[%s1927 + $0x9a] sm:$0xff]
      %v2328 = vld [vmem:[%s1927 + $0xaa] sm:$0xff]
      %v2329 = vld [vmem:[%s1927 + $0xb2] sm:$0xff]
      %v2330 = vld [vmem:[%s1927 + $0xc2] sm:$0xff]
      %v2331 = vld [vmem:[%s1927 + $0xca] sm:$0xff]
      %v2332 = vld [vmem:[%s1927 + $0xda] sm:$0xff]
      %v2333 = vld [vmem:[%s1927 + $0xe2] sm:$0xff]
      %v2334 = vld [vmem:[%s1927 + $0xf2] sm:$0xff]
      %v2335 = vld [vmem:[%s1927 + $0xfa] sm:$0xff]
      %v2336 = vld [vmem:[%s1927 + $0x10a] sm:$0xff]
      %v2337 = vld [vmem:[%s1927 + $0x112] sm:$0xff]
      %v2338 = vld [vmem:[%s1927 + $0x122] sm:$0xff]
      %v2339 = vld [vmem:[%s1927 + $0x12a] sm:$0xff]
      %v2340 = vld [vmem:[%s1927 + $0x13a] sm:$0xff]
      %v2341 = vld [vmem:[%s1927 + $0x142] sm:$0xff]
      %v2342 = vld [vmem:[%s1927 + $0x152] sm:$0xff]
      %v2343 = vld [vmem:[%s1927 + $0x15a] sm:$0xff]
      %v2344 = vld [vmem:[%s1927 + $0x16a] sm:$0xff]
      %v2345 = vld [vmem:[%s1927 + $0x172] sm:$0xff]
      %2378 = vrot.lane.b32.xlu0 %v2314, 64
      %v2379 = vpop.permute.xlu0 %2378
      %2380 = vrot.lane.b32.xlu0 %v2315, 64
      %v2381 = vpop.permute.xlu0 %2380
      %2382 = vrot.lane.b32.xlu0 %v2316, 64
      %v2383 = vpop.permute.xlu0 %2382
      %2384 = vrot.lane.b32.xlu0 %v2317, 64
      %v2385 = vpop.permute.xlu0 %2384
      %2386 = vrot.lane.b32.xlu0 %v2318, 64
      %v2387 = vpop.permute.xlu0 %2386
      %2388 = vrot.lane.b32.xlu0 %v2319, 64
      %v2389 = vpop.permute.xlu0 %2388
      %2390 = vrot.lane.b32.xlu0 %v2320, 64
      %v2391 = vpop.permute.xlu0 %2390
      %2392 = vrot.lane.b32.xlu0 %v2321, 64
      %v2393 = vpop.permute.xlu0 %2392
      %2394 = vrot.lane.b32.xlu0 %v2322, 64
      %v2395 = vpop.permute.xlu0 %2394
      %2396 = vrot.lane.b32.xlu0 %v2323, 64
      %v2397 = vpop.permute.xlu0 %2396
      %2398 = vrot.lane.b32.xlu0 %v2324, 64
      %v2399 = vpop.permute.xlu0 %2398
      %2400 = vrot.lane.b32.xlu0 %v2325, 64
      %v2401 = vpop.permute.xlu0 %2400
      %2402 = vrot.lane.b32.xlu0 %v2326, 64
      %v2403 = vpop.permute.xlu0 %2402
      %2404 = vrot.lane.b32.xlu0 %v2327, 64
      %v2405 = vpop.permute.xlu0 %2404
      %2406 = vrot.lane.b32.xlu0 %v2328, 64
      %v2407 = vpop.permute.xlu0 %2406
      %2408 = vrot.lane.b32.xlu0 %v2329, 64
      %v2409 = vpop.permute.xlu0 %2408
      %2410 = vrot.lane.b32.xlu0 %v2330, 64
      %v2411 = vpop.permute.xlu0 %2410
      %2412 = vrot.lane.b32.xlu0 %v2331, 64
      %v2413 = vpop.permute.xlu0 %2412
      %2414 = vrot.lane.b32.xlu0 %v2332, 64
      %v2415 = vpop.permute.xlu0 %2414
      %2416 = vrot.lane.b32.xlu0 %v2333, 64
      %v2417 = vpop.permute.xlu0 %2416
      %2418 = vrot.lane.b32.xlu0 %v2334, 64
      %v2419 = vpop.permute.xlu0 %2418
      %2420 = vrot.lane.b32.xlu0 %v2335, 64
      %v2421 = vpop.permute.xlu0 %2420
      %2422 = vrot.lane.b32.xlu0 %v2336, 64
      %v2423 = vpop.permute.xlu0 %2422
      %2424 = vrot.lane.b32.xlu0 %v2337, 64
      %v2425 = vpop.permute.xlu0 %2424
      %2426 = vrot.lane.b32.xlu0 %v2338, 64
      %v2427 = vpop.permute.xlu0 %2426
      %2428 = vrot.lane.b32.xlu0 %v2339, 64
      %v2429 = vpop.permute.xlu0 %2428
      %2430 = vrot.lane.b32.xlu0 %v2340, 64
      %v2431 = vpop.permute.xlu0 %2430
      %2432 = vrot.lane.b32.xlu0 %v2341, 64
      %v2433 = vpop.permute.xlu0 %2432
      %2434 = vrot.lane.b32.xlu0 %v2342, 64
      %v2435 = vpop.permute.xlu0 %2434
      %2436 = vrot.lane.b32.xlu0 %v2343, 64
      %v2437 = vpop.permute.xlu0 %2436
      %2438 = vrot.lane.b32.xlu0 %v2344, 64
      %v2439 = vpop.permute.xlu0 %2438
      %2440 = vrot.lane.b32.xlu0 %v2345, 64
      %v2441 = vpop.permute.xlu0 %2440
      %vm2474 = vcmask 589312
      %2475 = vst.msk [vmem:[#allocation3] sm:$0xff] %vm2474, %v2379
      %2476 = vst.msk [vmem:[#allocation3 + $0x8] sm:$0xff] %vm2474, %v2381
      %2477 = vst.msk [vmem:[#allocation3 + $0x10] sm:$0xff] %vm2474, %v2383
      %2478 = vst.msk [vmem:[#allocation3 + $0x18] sm:$0xff] %vm2474, %v2385
      %2479 = vst.msk [vmem:[#allocation3 + $0x20] sm:$0xff] %vm2474, %v2387
      %2480 = vst.msk [vmem:[#allocation3 + $0x28] sm:$0xff] %vm2474, %v2389
      %2481 = vst.msk [vmem:[#allocation3 + $0x30] sm:$0xff] %vm2474, %v2391
      %2482 = vst.msk [vmem:[#allocation3 + $0x38] sm:$0xff] %vm2474, %v2393
      %2483 = vst.msk [vmem:[#allocation3 + $0x40] sm:$0xff] %vm2474, %v2395
      %2484 = vst.msk [vmem:[#allocation3 + $0x48] sm:$0xff] %vm2474, %v2397
      %2485 = vst.msk [vmem:[#allocation3 + $0x50] sm:$0xff] %vm2474, %v2399
      %2486 = vst.msk [vmem:[#allocation3 + $0x58] sm:$0xff] %vm2474, %v2401
      %2487 = vst.msk [vmem:[#allocation3 + $0x60] sm:$0xff] %vm2474, %v2403
      %2488 = vst.msk [vmem:[#allocation3 + $0x68] sm:$0xff] %vm2474, %v2405
      %2489 = vst.msk [vmem:[#allocation3 + $0x70] sm:$0xff] %vm2474, %v2407
      %2490 = vst.msk [vmem:[#allocation3 + $0x78] sm:$0xff] %vm2474, %v2409
      %2491 = vst.msk [vmem:[#allocation3 + $0x80] sm:$0xff] %vm2474, %v2411
      %2492 = vst.msk [vmem:[#allocation3 + $0x88] sm:$0xff] %vm2474, %v2413
      %2493 = vst.msk [vmem:[#allocation3 + $0x90] sm:$0xff] %vm2474, %v2415
      %2494 = vst.msk [vmem:[#allocation3 + $0x98] sm:$0xff] %vm2474, %v2417
      %2495 = vst.msk [vmem:[#allocation3 + $0xa0] sm:$0xff] %vm2474, %v2419
      %2496 = vst.msk [vmem:[#allocation3 + $0xa8] sm:$0xff] %vm2474, %v2421
      %2497 = vst.msk [vmem:[#allocation3 + $0xb0] sm:$0xff] %vm2474, %v2423
      %2498 = vst.msk [vmem:[#allocation3 + $0xb8] sm:$0xff] %vm2474, %v2425
      %2499 = vst.msk [vmem:[#allocation3 + $0xc0] sm:$0xff] %vm2474, %v2427
      %2500 = vst.msk [vmem:[#allocation3 + $0xc8] sm:$0xff] %vm2474, %v2429
      %2501 = vst.msk [vmem:[#allocation3 + $0xd0] sm:$0xff] %vm2474, %v2431
      %2502 = vst.msk [vmem:[#allocation3 + $0xd8] sm:$0xff] %vm2474, %v2433
      %2503 = vst.msk [vmem:[#allocation3 + $0xe0] sm:$0xff] %vm2474, %v2435
      %2504 = vst.msk [vmem:[#allocation3 + $0xe8] sm:$0xff] %vm2474, %v2437
      %2505 = vst.msk [vmem:[#allocation3 + $0xf0] sm:$0xff] %vm2474, %v2439
      %2506 = vst.msk [vmem:[#allocation3 + $0xf8] sm:$0xff] %vm2474, %v2441
      %v2507 = vld [vmem:[#allocation3] sm:$0xff]
      %v2508 = vld [vmem:[#allocation3 + $0x8] sm:$0xff]
      %v2509 = vld [vmem:[#allocation3 + $0x10] sm:$0xff]
      %v2510 = vld [vmem:[#allocation3 + $0x18] sm:$0xff]
      %v2511 = vld [vmem:[#allocation3 + $0x20] sm:$0xff]
      %v2512 = vld [vmem:[#allocation3 + $0x28] sm:$0xff]
      %v2513 = vld [vmem:[#allocation3 + $0x30] sm:$0xff]
      %v2514 = vld [vmem:[#allocation3 + $0x38] sm:$0xff]
      %v2515 = vld [vmem:[#allocation3 + $0x40] sm:$0xff]
      %v2516 = vld [vmem:[#allocation3 + $0x48] sm:$0xff]
      %v2517 = vld [vmem:[#allocation3 + $0x50] sm:$0xff]
      %v2518 = vld [vmem:[#allocation3 + $0x58] sm:$0xff]
      %v2519 = vld [vmem:[#allocation3 + $0x60] sm:$0xff]
      %v2520 = vld [vmem:[#allocation3 + $0x68] sm:$0xff]
      %v2521 = vld [vmem:[#allocation3 + $0x70] sm:$0xff]
      %v2522 = vld [vmem:[#allocation3 + $0x78] sm:$0xff]
      %v2523 = vld [vmem:[#allocation3 + $0x80] sm:$0xff]
      %v2524 = vld [vmem:[#allocation3 + $0x88] sm:$0xff]
      %v2525 = vld [vmem:[#allocation3 + $0x90] sm:$0xff]
      %v2526 = vld [vmem:[#allocation3 + $0x98] sm:$0xff]
      %v2527 = vld [vmem:[#allocation3 + $0xa0] sm:$0xff]
      %v2528 = vld [vmem:[#allocation3 + $0xa8] sm:$0xff]
      %v2529 = vld [vmem:[#allocation3 + $0xb0] sm:$0xff]
      %v2530 = vld [vmem:[#allocation3 + $0xb8] sm:$0xff]
      %v2531 = vld [vmem:[#allocation3 + $0xc0] sm:$0xff]
      %v2532 = vld [vmem:[#allocation3 + $0xc8] sm:$0xff]
      %v2533 = vld [vmem:[#allocation3 + $0xd0] sm:$0xff]
      %v2534 = vld [vmem:[#allocation3 + $0xd8] sm:$0xff]
      %v2535 = vld [vmem:[#allocation3 + $0xe0] sm:$0xff]
      %v2536 = vld [vmem:[#allocation3 + $0xe8] sm:$0xff]
      %v2537 = vld [vmem:[#allocation3 + $0xf0] sm:$0xff]
      %v2538 = vld [vmem:[#allocation3 + $0xf8] sm:$0xff]
      %v2539 = vld [vmem:[%s4] sm:$0xff]
      %v2540 = vld [vmem:[%s4 + $0x8] sm:$0xff]
      %v2541 = vld [vmem:[%s4 + $0x10] sm:$0xff]
      %v2542 = vld [vmem:[%s4 + $0x18] sm:$0xff]
      %v2543 = vld [vmem:[%s4 + $0x20] sm:$0xff]
      %v2544 = vld [vmem:[%s4 + $0x28] sm:$0xff]
      %v2545 = vld [vmem:[%s4 + $0x30] sm:$0xff]
      %v2546 = vld [vmem:[%s4 + $0x38] sm:$0xff]
      %v2547 = vld [vmem:[%s4 + $0x40] sm:$0xff]
      %vm2548 = vcmask 588800
      %v2550 = vsel %vm2548, %v2507, 0
      %v2553 = vsel %vm2548, %v2508, 0
      %v2556 = vsel %vm2548, %v2509, 0
      %v2559 = vsel %vm2548, %v2510, 0
      %v2562 = vsel %vm2548, %v2511, 0
      %v2565 = vsel %vm2548, %v2512, 0
      %v2568 = vsel %vm2548, %v2513, 0
      %v2571 = vsel %vm2548, %v2514, 0
      %v2574 = vsel %vm2548, %v2515, 0
      %v2577 = vsel %vm2548, %v2516, 0
      %v2580 = vsel %vm2548, %v2517, 0
      %v2583 = vsel %vm2548, %v2518, 0
      %v2586 = vsel %vm2548, %v2519, 0
      %v2589 = vsel %vm2548, %v2520, 0
      %v2592 = vsel %vm2548, %v2521, 0
      %v2595 = vsel %vm2548, %v2522, 0
      %v2598 = vsel %vm2548, %v2523, 0
      %v2601 = vsel %vm2548, %v2524, 0
      %v2604 = vsel %vm2548, %v2525, 0
      %v2607 = vsel %vm2548, %v2526, 0
      %v2610 = vsel %vm2548, %v2527, 0
      %v2613 = vsel %vm2548, %v2528, 0
      %v2616 = vsel %vm2548, %v2529, 0
      %v2619 = vsel %vm2548, %v2530, 0
      %v2622 = vsel %vm2548, %v2531, 0
      %v2625 = vsel %vm2548, %v2532, 0
      %v2628 = vsel %vm2548, %v2533, 0
      %v2631 = vsel %vm2548, %v2534, 0
      %v2634 = vsel %vm2548, %v2535, 0
      %v2637 = vsel %vm2548, %v2536, 0
      %v2640 = vsel %vm2548, %v2537, 0
      %v2643 = vsel %vm2548, %v2538, 0
      %2645 = vmatprep.subr.mxu0 0.0
      %2646 = vmatpush1.msra.mxu0 %v2539
      %2647 = vmatprep.subr.mxu0 0.0
      %2648 = vmatpush1.msra.mxu0 %v2540
      %2649 = vmatprep.subr.mxu0 0.0
      %2650 = vmatpush1.msra.mxu0 %v2541
      %2651 = vmatprep.subr.mxu0 0.0
      %2652 = vmatpush1.msra.mxu0 %v2542
      %2653 = vmatprep.subr.mxu0 0.0
      %2654 = vmatpush1.msra.mxu0 %v2543
      %2655 = vmatprep.subr.mxu0 0.0
      %2656 = vmatpush1.msra.mxu0 %v2544
      %2657 = vmatprep.subr.mxu0 0.0
      %2658 = vmatpush1.msra.mxu0 %v2545
      %2659 = vmatprep.subr.mxu0 0.0
      %2660 = vmatpush1.msra.mxu0 %v2546
      %2661 = vmatprep.subr.mxu0 0.0
      %2662 = vmatpush1.msra.mxu0 %v2547
      %2663 = vmatprep.subr.mxu0 0.0
      %2664 = vmatpush1.msra.mxu0 0.0
      %2665 = vmatprep.subr.mxu0 0.0
      %2666 = vmatpush1.msra.mxu0 0.0
      %2667 = vmatprep.subr.mxu0 0.0
      %2668 = vmatpush1.msra.mxu0 0.0
      %2669 = vmatprep.subr.mxu0 0.0
      %2670 = vmatpush1.msra.mxu0 0.0
      %2671 = vmatprep.subr.mxu0 0.0
      %2672 = vmatpush1.msra.mxu0 0.0
      %2673 = vmatprep.subr.mxu0 0.0
      %2674 = vmatpush1.msra.mxu0 0.0
      %2675 = vmatprep.subr.mxu0 0.0
      %2676 = vmatpush1.msra.mxu0 0.0
      %2677 = vmatprep.subr.mxu0 0.0
      %2678 = vmatpush1.msra.mxu0 0.0
      %2679 = vmatprep.subr.mxu0 0.0
      %2680 = vmatpush1.msra.mxu0 0.0
      %2681 = vmatprep.subr.mxu0 0.0
      %2682 = vmatpush1.msra.mxu0 0.0
      %2683 = vmatprep.subr.mxu0 0.0
      %2684 = vmatpush1.msra.mxu0 0.0
      %2685 = vmatprep.subr.mxu0 0.0
      %2686 = vmatpush1.msra.mxu0 0.0
      %2687 = vmatprep.subr.mxu0 0.0
      %2688 = vmatpush1.msra.mxu0 0.0
      %2689 = vmatprep.subr.mxu0 0.0
      %2690 = vmatpush1.msra.mxu0 0.0
      %2691 = vmatprep.subr.mxu0 0.0
      %2692 = vmatpush1.msra.mxu0 0.0
      %2693 = vmatprep.subr.mxu0 0.0
      %2694 = vmatpush1.msra.mxu0 0.0
      %2695 = vmatprep.subr.mxu0 0.0
      %2696 = vmatpush1.msra.mxu0 0.0
      %2697 = vmatprep.subr.mxu0 0.0
      %2698 = vmatpush1.msra.mxu0 0.0
      %2699 = vmatprep.subr.mxu0 0.0
      %2700 = vmatpush1.msra.mxu0 0.0
      %2701 = vmatprep.subr.mxu0 0.0
      %2702 = vmatpush1.msra.mxu0 0.0
      %2703 = vmatprep.subr.mxu0 0.0
      %2704 = vmatpush1.msra.mxu0 0.0
      %2705 = vmatprep.subr.mxu0 0.0
      %2706 = vmatpush1.msra.mxu0 0.0
      %2707 = vmatprep.subr.mxu0 0.0
      %2708 = vmatpush1.msra.mxu0 0.0
      %2709 = vmatprep.mubr.f32.mxu0 0.0
      %2710 = vmatmul.mubr.f32.gmra.mrb[0].mxu0 %v2550
      %v2711 = vpop.f32.mrb[0].mxu0
      %v2712 = vadd.f32 0.0, %v2711
      %v2713 = vpop.f32.mrb[0].mxu0
      %2714 = vmatprep.mubr.f32.mxu0 0.0
      %2715 = vmatmul.mubr.f32.gmra.mrb[0].mxu0 %v2553
      %v2716 = vpop.f32.mrb[0].mxu0
      %v2717 = vadd.f32 0.0, %v2716
      %v2718 = vpop.f32.mrb[0].mxu0
      %2719 = vmatprep.mubr.f32.mxu0 0.0
      %2720 = vmatmul.mubr.f32.gmra.mrb[0].mxu0 %v2556
      %v2721 = vpop.f32.mrb[0].mxu0
      %v2722 = vadd.f32 0.0, %v2721
      %v2723 = vpop.f32.mrb[0].mxu0
      %2724 = vmatprep.mubr.f32.mxu0 0.0
      %2725 = vmatmul.mubr.f32.gmra.mrb[0].mxu0 %v2559
      %v2726 = vpop.f32.mrb[0].mxu0
      %v2727 = vadd.f32 0.0, %v2726
      %v2728 = vpop.f32.mrb[0].mxu0
      %2729 = vmatprep.mubr.f32.mxu0 0.0
      %2730 = vmatmul.mubr.f32.gmra.mrb[0].mxu0 %v2562
      %v2731 = vpop.f32.mrb[0].mxu0
      %v2732 = vadd.f32 0.0, %v2731
      %v2733 = vpop.f32.mrb[0].mxu0
      %2734 = vmatprep.mubr.f32.mxu0 0.0
      %2735 = vmatmul.mubr.f32.gmra.mrb[0].mxu0 %v2565
      %v2736 = vpop.f32.mrb[0].mxu0
      %v2737 = vadd.f32 0.0, %v2736
      %v2738 = vpop.f32.mrb[0].mxu0
      %2739 = vmatprep.mubr.f32.mxu0 0.0
      %2740 = vmatmul.mubr.f32.gmra.mrb[0].mxu0 %v2568
      %v2741 = vpop.f32.mrb[0].mxu0
      %v2742 = vadd.f32 0.0, %v2741
      %v2743 = vpop.f32.mrb[0].mxu0
      %2744 = vmatprep.mubr.f32.mxu0 0.0
      %2745 = vmatmul.mubr.f32.gmra.mrb[0].mxu0 %v2571
      %v2746 = vpop.f32.mrb[0].mxu0
      %v2747 = vadd.f32 0.0, %v2746
      %v2748 = vpop.f32.mrb[0].mxu0
      %2749 = vmatprep.mubr.f32.mxu0 0.0
      %2750 = vmatmul.mubr.f32.gmra.mrb[0].mxu0 %v2574
      %v2751 = vpop.f32.mrb[0].mxu0
      %v2752 = vadd.f32 0.0, %v2751
      %v2753 = vpop.f32.mrb[0].mxu0
      %2754 = vmatprep.mubr.f32.mxu0 0.0
      %2755 = vmatmul.mubr.f32.gmra.mrb[0].mxu0 %v2577
      %v2756 = vpop.f32.mrb[0].mxu0
      %v2757 = vadd.f32 0.0, %v2756
      %v2758 = vpop.f32.mrb[0].mxu0
      %2759 = vmatprep.mubr.f32.mxu0 0.0
      %2760 = vmatmul.mubr.f32.gmra.mrb[0].mxu0 %v2580
      %v2761 = vpop.f32.mrb[0].mxu0
      %v2762 = vadd.f32 0.0, %v2761
      %v2763 = vpop.f32.mrb[0].mxu0
      %2764 = vmatprep.mubr.f32.mxu0 0.0
      %2765 = vmatmul.mubr.f32.gmra.mrb[0].mxu0 %v2583
      %v2766 = vpop.f32.mrb[0].mxu0
      %v2767 = vadd.f32 0.0, %v2766
      %v2768 = vpop.f32.mrb[0].mxu0
      %2769 = vmatprep.mubr.f32.mxu0 0.0
      %2770 = vmatmul.mubr.f32.gmra.mrb[0].mxu0 %v2586
      %v2771 = vpop.f32.mrb[0].mxu0
      %v2772 = vadd.f32 0.0, %v2771
      %v2773 = vpop.f32.mrb[0].mxu0
      %2774 = vmatprep.mubr.f32.mxu0 0.0
      %2775 = vmatmul.mubr.f32.gmra.mrb[0].mxu0 %v2589
      %v2776 = vpop.f32.mrb[0].mxu0
      %v2777 = vadd.f32 0.0, %v2776
      %v2778 = vpop.f32.mrb[0].mxu0
      %2779 = vmatprep.mubr.f32.mxu0 0.0
      %2780 = vmatmul.mubr.f32.gmra.mrb[0].mxu0 %v2592
      %v2781 = vpop.f32.mrb[0].mxu0
      %v2782 = vadd.f32 0.0, %v2781
      %v2783 = vpop.f32.mrb[0].mxu0
      %2784 = vmatprep.mubr.f32.mxu0 0.0
      %2785 = vmatmul.mubr.f32.gmra.mrb[0].mxu0 %v2595
      %v2786 = vpop.f32.mrb[0].mxu0
      %v2787 = vadd.f32 0.0, %v2786
      %v2788 = vpop.f32.mrb[0].mxu0
      %2789 = vmatprep.mubr.f32.mxu0 0.0
      %2790 = vmatmul.mubr.f32.gmra.mrb[0].mxu0 %v2598
      %v2791 = vpop.f32.mrb[0].mxu0
      %v2792 = vadd.f32 0.0, %v2791
      %v2793 = vpop.f32.mrb[0].mxu0
      %2794 = vmatprep.mubr.f32.mxu0 0.0
      %2795 = vmatmul.mubr.f32.gmra.mrb[0].mxu0 %v2601
      %v2796 = vpop.f32.mrb[0].mxu0
      %v2797 = vadd.f32 0.0, %v2796
      %v2798 = vpop.f32.mrb[0].mxu0
      %2799 = vmatprep.mubr.f32.mxu0 0.0
      %2800 = vmatmul.mubr.f32.gmra.mrb[0].mxu0 %v2604
      %v2801 = vpop.f32.mrb[0].mxu0
      %v2802 = vadd.f32 0.0, %v2801
      %v2803 = vpop.f32.mrb[0].mxu0
      %2804 = vmatprep.mubr.f32.mxu0 0.0
      %2805 = vmatmul.mubr.f32.gmra.mrb[0].mxu0 %v2607
      %v2806 = vpop.f32.mrb[0].mxu0
      %v2807 = vadd.f32 0.0, %v2806
      %v2808 = vpop.f32.mrb[0].mxu0
      %2809 = vmatprep.mubr.f32.mxu0 0.0
      %2810 = vmatmul.mubr.f32.gmra.mrb[0].mxu0 %v2610
      %v2811 = vpop.f32.mrb[0].mxu0
      %v2812 = vadd.f32 0.0, %v2811
      %v2813 = vpop.f32.mrb[0].mxu0
      %2814 = vmatprep.mubr.f32.mxu0 0.0
      %2815 = vmatmul.mubr.f32.gmra.mrb[0].mxu0 %v2613
      %v2816 = vpop.f32.mrb[0].mxu0
      %v2817 = vadd.f32 0.0, %v2816
      %v2818 = vpop.f32.mrb[0].mxu0
      %2819 = vmatprep.mubr.f32.mxu0 0.0
      %2820 = vmatmul.mubr.f32.gmra.mrb[0].mxu0 %v2616
      %v2821 = vpop.f32.mrb[0].mxu0
      %v2822 = vadd.f32 0.0, %v2821
      %v2823 = vpop.f32.mrb[0].mxu0
      %2824 = vmatprep.mubr.f32.mxu0 0.0
      %2825 = vmatmul.mubr.f32.gmra.mrb[0].mxu0 %v2619
      %v2826 = vpop.f32.mrb[0].mxu0
      %v2827 = vadd.f32 0.0, %v2826
      %v2828 = vpop.f32.mrb[0].mxu0
      %2829 = vmatprep.mubr.f32.mxu0 0.0
      %2830 = vmatmul.mubr.f32.gmra.mrb[0].mxu0 %v2622
      %v2831 = vpop.f32.mrb[0].mxu0
      %v2832 = vadd.f32 0.0, %v2831
      %v2833 = vpop.f32.mrb[0].mxu0
      %2834 = vmatprep.mubr.f32.mxu0 0.0
      %2835 = vmatmul.mubr.f32.gmra.mrb[0].mxu0 %v2625
      %v2836 = vpop.f32.mrb[0].mxu0
      %v2837 = vadd.f32 0.0, %v2836
      %v2838 = vpop.f32.mrb[0].mxu0
      %2839 = vmatprep.mubr.f32.mxu0 0.0
      %2840 = vmatmul.mubr.f32.gmra.mrb[0].mxu0 %v2628
      %v2841 = vpop.f32.mrb[0].mxu0
      %v2842 = vadd.f32 0.0, %v2841
      %v2843 = vpop.f32.mrb[0].mxu0
      %2844 = vmatprep.mubr.f32.mxu0 0.0
      %2845 = vmatmul.mubr.f32.gmra.mrb[0].mxu0 %v2631
      %v2846 = vpop.f32.mrb[0].mxu0
      %v2847 = vadd.f32 0.0, %v2846
      %v2848 = vpop.f32.mrb[0].mxu0
      %2849 = vmatprep.mubr.f32.mxu0 0.0
      %2850 = vmatmul.mubr.f32.gmra.mrb[0].mxu0 %v2634
      %v2851 = vpop.f32.mrb[0].mxu0
      %v2852 = vadd.f32 0.0, %v2851
      %v2853 = vpop.f32.mrb[0].mxu0
      %2854 = vmatprep.mubr.f32.mxu0 0.0
      %2855 = vmatmul.mubr.f32.gmra.mrb[0].mxu0 %v2637
      %v2856 = vpop.f32.mrb[0].mxu0
      %v2857 = vadd.f32 0.0, %v2856
      %v2858 = vpop.f32.mrb[0].mxu0
      %2859 = vmatprep.mubr.f32.mxu0 0.0
      %2860 = vmatmul.mubr.f32.gmra.mrb[0].mxu0 %v2640
      %v2861 = vpop.f32.mrb[0].mxu0
      %v2862 = vadd.f32 0.0, %v2861
      %v2863 = vpop.f32.mrb[0].mxu0
      %2864 = vmatprep.mubr.f32.mxu0 0.0
      %2865 = vmatmul.mubr.f32.gmra.mrb[0].mxu0 %v2643
      %v2866 = vpop.f32.mrb[0].mxu0
      %v2867 = vadd.f32 0.0, %v2866
      %v2868 = vpop.f32.mrb[0].mxu0
      %2869 = vdwg.mxu0
      %v2870 = vld [vmem:[%s5] sm:$0x1]
      %v2872 = vlaneseq
      %v2873 = vshrl.u32 %v2872, 7
      %v2874 = vsub.s32 0, %v2873
      %v2875 = vrot.slane %v2870, %v2874
      %v2877 = vmul.f32 %v2712, %v2875
      %v2878 = vmul.f32 %v2717, %v2875
      %v2879 = vmul.f32 %v2722, %v2875
      %v2880 = vmul.f32 %v2727, %v2875
      %v2881 = vmul.f32 %v2732, %v2875
      %v2882 = vmul.f32 %v2737, %v2875
      %v2883 = vmul.f32 %v2742, %v2875
      %v2884 = vmul.f32 %v2747, %v2875
      %v2885 = vmul.f32 %v2752, %v2875
      %v2886 = vmul.f32 %v2757, %v2875
      %v2887 = vmul.f32 %v2762, %v2875
      %v2888 = vmul.f32 %v2767, %v2875
      %v2889 = vmul.f32 %v2772, %v2875
      %v2890 = vmul.f32 %v2777, %v2875
      %v2891 = vmul.f32 %v2782, %v2875
      %v2892 = vmul.f32 %v2787, %v2875
      %v2893 = vmul.f32 %v2792, %v2875
      %v2894 = vmul.f32 %v2797, %v2875
      %v2895 = vmul.f32 %v2802, %v2875
      %v2896 = vmul.f32 %v2807, %v2875
      %v2897 = vmul.f32 %v2812, %v2875
      %v2898 = vmul.f32 %v2817, %v2875
      %v2899 = vmul.f32 %v2822, %v2875
      %v2900 = vmul.f32 %v2827, %v2875
      %v2901 = vmul.f32 %v2832, %v2875
      %v2902 = vmul.f32 %v2837, %v2875
      %v2903 = vmul.f32 %v2842, %v2875
      %v2904 = vmul.f32 %v2847, %v2875
      %v2905 = vmul.f32 %v2852, %v2875
      %v2906 = vmul.f32 %v2857, %v2875
      %v2907 = vmul.f32 %v2862, %v2875
      %v2908 = vmul.f32 %v2867, %v2875
      %v2909 = vld [vmem:[%s6] sm:$0x1]
      %v2911 = vlaneseq
      %v2912 = vshrl.u32 %v2911, 7
      %v2913 = vsub.s32 0, %v2912
      %v2914 = vrot.slane %v2909, %v2913
      %v2916 = vadd.f32 %v2877, %v2914
      %v2917 = vadd.f32 %v2878, %v2914
      %v2918 = vadd.f32 %v2879, %v2914
      %v2919 = vadd.f32 %v2880, %v2914
      %v2920 = vadd.f32 %v2881, %v2914
      %v2921 = vadd.f32 %v2882, %v2914
      %v2922 = vadd.f32 %v2883, %v2914
      %v2923 = vadd.f32 %v2884, %v2914
      %v2924 = vadd.f32 %v2885, %v2914
      %v2925 = vadd.f32 %v2886, %v2914
      %v2926 = vadd.f32 %v2887, %v2914
      %v2927 = vadd.f32 %v2888, %v2914
      %v2928 = vadd.f32 %v2889, %v2914
      %v2929 = vadd.f32 %v2890, %v2914
      %v2930 = vadd.f32 %v2891, %v2914
      %v2931 = vadd.f32 %v2892, %v2914
      %v2932 = vadd.f32 %v2893, %v2914
      %v2933 = vadd.f32 %v2894, %v2914
      %v2934 = vadd.f32 %v2895, %v2914
      %v2935 = vadd.f32 %v2896, %v2914
      %v2936 = vadd.f32 %v2897, %v2914
      %v2937 = vadd.f32 %v2898, %v2914
      %v2938 = vadd.f32 %v2899, %v2914
      %v2939 = vadd.f32 %v2900, %v2914
      %v2940 = vadd.f32 %v2901, %v2914
      %v2941 = vadd.f32 %v2902, %v2914
      %v2942 = vadd.f32 %v2903, %v2914
      %v2943 = vadd.f32 %v2904, %v2914
      %v2944 = vadd.f32 %v2905, %v2914
      %v2945 = vadd.f32 %v2906, %v2914
      %v2946 = vadd.f32 %v2907, %v2914
      %v2947 = vadd.f32 %v2908, %v2914
      %vm2948 = vcmp.gt.f32.partialorder %v2916, 0.0
      %vm2949 = vcmp.gt.f32.partialorder %v2917, 0.0
      %vm2950 = vcmp.gt.f32.partialorder %v2918, 0.0
      %vm2951 = vcmp.gt.f32.partialorder %v2919, 0.0
      %vm2952 = vcmp.gt.f32.partialorder %v2920, 0.0
      %vm2953 = vcmp.gt.f32.partialorder %v2921, 0.0
      %vm2954 = vcmp.gt.f32.partialorder %v2922, 0.0
      %vm2955 = vcmp.gt.f32.partialorder %v2923, 0.0
      %vm2956 = vcmp.gt.f32.partialorder %v2924, 0.0
      %vm2957 = vcmp.gt.f32.partialorder %v2925, 0.0
      %vm2958 = vcmp.gt.f32.partialorder %v2926, 0.0
      %vm2959 = vcmp.gt.f32.partialorder %v2927, 0.0
      %vm2960 = vcmp.gt.f32.partialorder %v2928, 0.0
      %vm2961 = vcmp.gt.f32.partialorder %v2929, 0.0
      %vm2962 = vcmp.gt.f32.partialorder %v2930, 0.0
      %vm2963 = vcmp.gt.f32.partialorder %v2931, 0.0
      %vm2964 = vcmp.gt.f32.partialorder %v2932, 0.0
      %vm2965 = vcmp.gt.f32.partialorder %v2933, 0.0
      %vm2966 = vcmp.gt.f32.partialorder %v2934, 0.0
      %vm2967 = vcmp.gt.f32.partialorder %v2935, 0.0
      %vm2968 = vcmp.gt.f32.partialorder %v2936, 0.0
      %vm2969 = vcmp.gt.f32.partialorder %v2937, 0.0
      %vm2970 = vcmp.gt.f32.partialorder %v2938, 0.0
      %vm2971 = vcmp.gt.f32.partialorder %v2939, 0.0
      %vm2972 = vcmp.gt.f32.partialorder %v2940, 0.0
      %vm2973 = vcmp.gt.f32.partialorder %v2941, 0.0
      %vm2974 = vcmp.gt.f32.partialorder %v2942, 0.0
      %vm2975 = vcmp.gt.f32.partialorder %v2943, 0.0
      %vm2976 = vcmp.gt.f32.partialorder %v2944, 0.0
      %vm2977 = vcmp.gt.f32.partialorder %v2945, 0.0
      %vm2978 = vcmp.gt.f32.partialorder %v2946, 0.0
      %vm2979 = vcmp.gt.f32.partialorder %v2947, 0.0
      %v2980 = vmul.f32 %v2916, 0.1
      %v2981 = vmul.f32 %v2917, 0.1
      %v2982 = vmul.f32 %v2918, 0.1
      %v2983 = vmul.f32 %v2919, 0.1
      %v2984 = vmul.f32 %v2920, 0.1
      %v2985 = vmul.f32 %v2921, 0.1
      %v2986 = vmul.f32 %v2922, 0.1
      %v2987 = vmul.f32 %v2923, 0.1
      %v2988 = vmul.f32 %v2924, 0.1
      %v2989 = vmul.f32 %v2925, 0.1
      %v2990 = vmul.f32 %v2926, 0.1
      %v2991 = vmul.f32 %v2927, 0.1
      %v2992 = vmul.f32 %v2928, 0.1
      %v2993 = vmul.f32 %v2929, 0.1
      %v2994 = vmul.f32 %v2930, 0.1
      %v2995 = vmul.f32 %v2931, 0.1
      %v2996 = vmul.f32 %v2932, 0.1
      %v2997 = vmul.f32 %v2933, 0.1
      %v2998 = vmul.f32 %v2934, 0.1
      %v2999 = vmul.f32 %v2935, 0.1
      %v3000 = vmul.f32 %v2936, 0.1
      %v3001 = vmul.f32 %v2937, 0.1
      %v3002 = vmul.f32 %v2938, 0.1
      %v3003 = vmul.f32 %v2939, 0.1
      %v3004 = vmul.f32 %v2940, 0.1
      %v3005 = vmul.f32 %v2941, 0.1
      %v3006 = vmul.f32 %v2942, 0.1
      %v3007 = vmul.f32 %v2943, 0.1
      %v3008 = vmul.f32 %v2944, 0.1
      %v3009 = vmul.f32 %v2945, 0.1
      %v3010 = vmul.f32 %v2946, 0.1
      %v3011 = vmul.f32 %v2947, 0.1
      %v3012 = vsel %vm2948, %v2916, %v2980
      %v3013 = vsel %vm2949, %v2917, %v2981
      %v3014 = vsel %vm2950, %v2918, %v2982
      %v3015 = vsel %vm2951, %v2919, %v2983
      %v3016 = vsel %vm2952, %v2920, %v2984
      %v3017 = vsel %vm2953, %v2921, %v2985
      %v3018 = vsel %vm2954, %v2922, %v2986
      %v3019 = vsel %vm2955, %v2923, %v2987
      %v3020 = vsel %vm2956, %v2924, %v2988
      %v3021 = vsel %vm2957, %v2925, %v2989
      %v3022 = vsel %vm2958, %v2926, %v2990
      %v3023 = vsel %vm2959, %v2927, %v2991
      %v3024 = vsel %vm2960, %v2928, %v2992
      %v3025 = vsel %vm2961, %v2929, %v2993
      %v3026 = vsel %vm2962, %v2930, %v2994
      %v3027 = vsel %vm2963, %v2931, %v2995
      %v3028 = vsel %vm2964, %v2932, %v2996
      %v3029 = vsel %vm2965, %v2933, %v2997
      %v3030 = vsel %vm2966, %v2934, %v2998
      %v3031 = vsel %vm2967, %v2935, %v2999
      %v3032 = vsel %vm2968, %v2936, %v3000
      %v3033 = vsel %vm2969, %v2937, %v3001
      %v3034 = vsel %vm2970, %v2938, %v3002
      %v3035 = vsel %vm2971, %v2939, %v3003
      %v3036 = vsel %vm2972, %v2940, %v3004
      %v3037 = vsel %vm2973, %v2941, %v3005
      %v3038 = vsel %vm2974, %v2942, %v3006
      %v3039 = vsel %vm2975, %v2943, %v3007
      %v3040 = vsel %vm2976, %v2944, %v3008
      %v3041 = vsel %vm2977, %v2945, %v3009
      %v3042 = vsel %vm2978, %v2946, %v3010
      %v3043 = vsel %vm2979, %v2947, %v3011
      %v3044 = vadd.f32 %v3012, %v335
      %v3045 = vadd.f32 %v3013, %v336
      %v3046 = vadd.f32 %v3014, %v337
      %v3047 = vadd.f32 %v3015, %v338
      %v3048 = vadd.f32 %v3016, %v339
      %v3049 = vadd.f32 %v3017, %v340
      %v3050 = vadd.f32 %v3018, %v341
      %v3051 = vadd.f32 %v3019, %v342
      %v3052 = vadd.f32 %v3020, %v343
      %v3053 = vadd.f32 %v3021, %v344
      %v3054 = vadd.f32 %v3022, %v345
      %v3055 = vadd.f32 %v3023, %v346
      %v3056 = vadd.f32 %v3024, %v347
      %v3057 = vadd.f32 %v3025, %v348
      %v3058 = vadd.f32 %v3026, %v349
      %v3059 = vadd.f32 %v3027, %v350
      %v3060 = vadd.f32 %v3028, %v351
      %v3061 = vadd.f32 %v3029, %v352
      %v3062 = vadd.f32 %v3030, %v353
      %v3063 = vadd.f32 %v3031, %v354
      %v3064 = vadd.f32 %v3032, %v355
      %v3065 = vadd.f32 %v3033, %v356
      %v3066 = vadd.f32 %v3034, %v357
      %v3067 = vadd.f32 %v3035, %v358
      %v3068 = vadd.f32 %v3036, %v359
      %v3069 = vadd.f32 %v3037, %v360
      %v3070 = vadd.f32 %v3038, %v361
      %v3071 = vadd.f32 %v3039, %v362
      %v3072 = vadd.f32 %v3040, %v363
      %v3073 = vadd.f32 %v3041, %v364
      %v3074 = vadd.f32 %v3042, %v365
      %v3075 = vadd.f32 %v3043, %v366
      %3076 = vst.msk [vmem:[%s278] sm:$0xff] %vm369, %v3044
      %3077 = vst.msk [vmem:[%s278 + $0x8] sm:$0xff] %vm369, %v3045
      %3078 = vst.msk [vmem:[%s278 + $0x10] sm:$0xff] %vm369, %v3046
      %3079 = vst.msk [vmem:[%s278 + $0x18] sm:$0xff] %vm369, %v3047
      %3080 = vst.msk [vmem:[%s278 + $0x20] sm:$0xff] %vm369, %v3048
      %3081 = vst.msk [vmem:[%s278 + $0x28] sm:$0xff] %vm369, %v3049
      %3082 = vst.msk [vmem:[%s278 + $0x30] sm:$0xff] %vm369, %v3050
      %3083 = vst.msk [vmem:[%s278 + $0x38] sm:$0xff] %vm369, %v3051
      %3084 = vst.msk [vmem:[%s278 + $0x40] sm:$0xff] %vm369, %v3052
      %3085 = vst.msk [vmem:[%s278 + $0x48] sm:$0xff] %vm369, %v3053
      %3086 = vst.msk [vmem:[%s278 + $0x50] sm:$0xff] %vm369, %v3054
      %3087 = vst.msk [vmem:[%s278 + $0x58] sm:$0xff] %vm369, %v3055
      %3088 = vst.msk [vmem:[%s278 + $0x60] sm:$0xff] %vm369, %v3056
      %3089 = vst.msk [vmem:[%s278 + $0x68] sm:$0xff] %vm369, %v3057
      %3090 = vst.msk [vmem:[%s278 + $0x70] sm:$0xff] %vm369, %v3058
      %3091 = vst.msk [vmem:[%s278 + $0x78] sm:$0xff] %vm369, %v3059
      %3092 = vst.msk [vmem:[%s278 + $0x80] sm:$0xff] %vm369, %v3060
      %3093 = vst.msk [vmem:[%s278 + $0x88] sm:$0xff] %vm369, %v3061
      %3094 = vst.msk [vmem:[%s278 + $0x90] sm:$0xff] %vm369, %v3062
      %3095 = vst.msk [vmem:[%s278 + $0x98] sm:$0xff] %vm369, %v3063
      %3096 = vst.msk [vmem:[%s278 + $0xa0] sm:$0xff] %vm369, %v3064
      %3097 = vst.msk [vmem:[%s278 + $0xa8] sm:$0xff] %vm369, %v3065
      %3098 = vst.msk [vmem:[%s278 + $0xb0] sm:$0xff] %vm369, %v3066
      %3099 = vst.msk [vmem:[%s278 + $0xb8] sm:$0xff] %vm369, %v3067
      %3100 = vst.msk [vmem:[%s278 + $0xc0] sm:$0xff] %vm369, %v3068
      %3101 = vst.msk [vmem:[%s278 + $0xc8] sm:$0xff] %vm369, %v3069
      %3102 = vst.msk [vmem:[%s278 + $0xd0] sm:$0xff] %vm369, %v3070
      %3103 = vst.msk [vmem:[%s278 + $0xd8] sm:$0xff] %vm369, %v3071
      %3104 = vst.msk [vmem:[%s278 + $0xe0] sm:$0xff] %vm369, %v3072
      %3105 = vst.msk [vmem:[%s278 + $0xe8] sm:$0xff] %vm369, %v3073
      %3106 = vst.msk [vmem:[%s278 + $0xf0] sm:$0xff] %vm369, %v3074
      %3107 = vst.msk [vmem:[%s278 + $0xf8] sm:$0xff] %vm369, %v3075
      %p3108 = scmp.lt.s32.totalorder %s18, 1
      %s3109 = scalar_select %p3108, %s18, 1
      %s3110 = smul.addr %s3109, 32
      %s3111 = smul.addr %s3110, 8
      %s3112 = scalar_lea.vmem %s7, %s3111
      // Predicated region
      $region49: #{residual_block_forward.2} parent=47 // pred_check
        %p3113 = pneg %p188
      $region50: #{residual_block_forward.2} parent=47 // pred_check_branch
        %3115 = sbr.rel (%p3113) target = $region52
      $region51: #{residual_block_forward.2} parent=47 // pred_region
        _
      $region52: #{residual_block_forward.2} parent=47 // pred_fallthru
        _
    $region48: #{residual_block_forward.2} parent=5 // pred_fallthru
      _
    %p3116 = scmp.le.s32.totalorder 2, %s13
    // Predicated region
    $region53: #{residual_block_forward.2} parent=5 // pred_check
      %p3117 = pneg %p3116
    $region54: #{residual_block_forward.2} parent=5 // pred_check_branch
      %3119 = sbr.rel (%p3117) target = $region56
    $region55: #{residual_block_forward.2} parent=5 // pred_region
      %s3120 = ssub.s32 %s13, 2
      // Predicated region
      $region57: #{residual_block_forward.2} parent=55 // pred_check
        %p3121 = pneg %p194
      $region58: #{residual_block_forward.2} parent=55 // pred_check_branch
        %3123 = sbr.rel (%p3121) target = $region60
      $region59: #{residual_block_forward.2} parent=55 // pred_region
        %p3124 = scmp.lt.s32.totalorder %s19, 1
        %s3125 = scalar_select %p3124, %s19, 1
        %s3126 = smul.addr %s3125, 32
        %s3127 = smul.addr %s3126, 8
        %s3128 = scalar_lea.vmem %s7, %s3127
      $region60: #{residual_block_forward.2} parent=55 // pred_fallthru
        _
    $region56: #{residual_block_forward.2} parent=5 // pred_fallthru
      _
  $region6: #{residual_block_forward.2} parent=0 // loop_footer
    %s17 = sadd.s32 1, %s13
  $region7: #{residual_block_forward.2} parent=0 // loop_footer_branch
    %12 = sbr.rel target = $region3
  $region8: #{residual_block_forward.2} parent=0 // loop_exit
    _

</llo_original>
